<compile_context>
chip_gen: v5e
topology: v5e:2x2
jax: 0.10.0
libtpu: 0.0.40
codegen_flags: <defaults>
</compile_context>

<pallas_src>
import jax
import jax.numpy as jnp
from jax import lax
from jax.experimental import pallas as pl
from jax.experimental.pallas import tpu as pltpu

# ---- config consistent with Wav2Vec2EBranchformerConfig defaults (small) ----
HIDDEN = 32            # config.hidden_size
INTER = 64             # config.intermediate_size
CHAN = INTER // 2      # CSGU n_channels
KSIZE = 31             # config.csgu_kernel_size
PAD = (KSIZE - 1) // 2 # symmetric 'same' padding (is_causal=False)
LN_EPS = 1e-5          # torch.nn.LayerNorm default eps


def _gelu_tanh(x):
    # tanh-form GELU: the transcendental rides the EUP slot instead of a
    # ~12-op rational erf on the VALU.  Max deviation vs exact erf ~1e-3.
    c = 0.7978845608028654  # sqrt(2/pi)
    return 0.5 * x * (1.0 + jnp.tanh(c * (x + 0.044715 * (x * x * x))))


def _make_kernel(group):
    """Kernel factory. `group` = sequences processed per inner loop step."""

    def kernel(x_ref, w1r_ref, w1g_ref, b1r_ref, b1g_ref, g_ref, be_ref,
               wc_ref, bc_ref, w2_ref, b2_ref, o_ref):
        B, T, H = x_ref.shape            # (B_TILE, T, H) block
        G = group
        rows = G * T
        n_groups = B // G                # static

        # Inner loop over row-groups bounds the live vreg set so spills do not
        # grow with the (large) batch tile that the grid-step DMA moves.
        @pl.loop(0, n_groups)
        def _(gi):
            r0 = pl.multiple_of(gi * G, G)
            x2 = x_ref[pl.ds(r0, G), :, :].reshape(rows, H).astype(jnp.bfloat16)

            # ---- channel_proj1: Linear(H->I) + GELU, pre-split halves ----
            # (splitting avoids a lane-offset slice h[:, CHAN:] per vreg)
            x_r = jnp.dot(x2, w1r_ref[...],
                          preferred_element_type=jnp.float32) + b1r_ref[...]
            x_g = jnp.dot(x2, w1g_ref[...],
                          preferred_element_type=jnp.float32) + b1g_ref[...]
            x_r = _gelu_tanh(x_r)                                # (rows, C)
            x_g = _gelu_tanh(x_g)                                # (rows, C)

            # ---- LayerNorm over the channel dim ----
            mean = jnp.mean(x_g, axis=-1, keepdims=True)
            cen = x_g - mean
            var = jnp.mean(cen * cen, axis=-1, keepdims=True)
            x_g = cen * lax.rsqrt(var + LN_EPS) * g_ref[...] + be_ref[...]

            # ---- depthwise Conv1d along time, zero 'same' pad, groups=C ----
            # Per-sequence padding: no per-tap boundary masks, no iota.
            xg3 = x_g.reshape(G, T, CHAN)
            zpad = jnp.zeros((G, PAD, CHAN), jnp.float32)
            xp = jnp.concatenate([zpad, xg3, zpad], axis=1)      # (G, T+2P, C)
            wc = wc_ref[...]                                     # (K, C), once
            acc = jnp.zeros((G, T, CHAN), jnp.float32)
            for k in range(KSIZE):                               # static unroll
                # single-row weight broadcast, reused across all row groups
                acc = acc + xp[:, k:k + T, :] * wc[k:k + 1]
            x_g = acc.reshape(rows, CHAN) + bc_ref[...]

            # csgu_activation='identity', csgu_use_linear_after_conv=False.
            # TODO(synk): dropout omitted (eval-mode identity); training-mode
            #             dropout would use pltpu.prng_seed/prng_random_bits.
            gated = (x_r * x_g).astype(jnp.bfloat16)             # (rows, C)

            # ---- channel_proj2: Linear(I//2 -> H) ----
            out = jnp.dot(gated, w2_ref[...],
                          preferred_element_type=jnp.float32) + b2_ref[...]
            o_ref[pl.ds(r0, G), :, :] = out.reshape(G, T, H).astype(o_ref.dtype)

    return kernel


@jax.jit
def cgmlp_forward(x, params):
    N, T, H = x.shape
    w1, b1, gamma, beta, wconv, bconv, w2, b2 = params

    # Hoisted weight prep (out of the kernel): split channel_proj1 into
    # residual / gate halves, cast matmul weights to bf16 once.
    w1r = w1[:, :CHAN].astype(jnp.bfloat16)
    w1g = w1[:, CHAN:].astype(jnp.bfloat16)
    b1r = b1[:, :CHAN]
    b1g = b1[:, CHAN:]
    w2b = w2.astype(jnp.bfloat16)

    # ---- tile sizing (all static at trace time) ----
    # Inner row-group: ~128 matmul rows per MXU push, bounded live set.
    G = max(1, 128 // T)
    # Batch tile: ~1 MiB of f32 x-activations per grid step, but keep >= 2
    # grid steps so the "parallel" batch axis can use both v7x TensorCores.
    seq_bytes = T * H * 4
    target_bt = max(G, ((1 << 20) // seq_bytes) // G * G)
    half_bt = max(G, pl.cdiv(pl.cdiv(N, 2), G) * G)
    b_tile = min(target_bt, half_bt)

    n_pad = (-N) % b_tile
    if n_pad:
        # Zero-padded tail rows go through LayerNorm of a constant vector
        # (var~0 -> rsqrt(eps)); results are finite and discarded below, so
        # this is wasted work only — do NOT "optimize" eps away.
        x = jnp.pad(x, ((0, n_pad), (0, 0), (0, 0)))
    n_blocks = x.shape[0] // b_tile

    # Explicit VMEM budget: double-buffered in/out blocks + weights + headroom,
    # clamped to fit v7x's 64 MiB physical VMEM and to lift v5e's 16 MiB
    # scoped default once tiles grow.
    blk_bytes = b_tile * T * H * 4
    vmem_bytes = int(min(max(4 * blk_bytes + (8 << 20), 16 << 20), 48 << 20))

    def full_spec(a):
        zeros = (0,) * a.ndim
        return pl.BlockSpec(a.shape, lambda i, _z=zeros: _z)   # DMA'd once

    out = pl.pallas_call(
        _make_kernel(G),
        out_shape=jax.ShapeDtypeStruct((x.shape[0], T, H), x.dtype),
        grid=(n_blocks,),
        in_specs=[
            pl.BlockSpec((b_tile, T, H), lambda i: (i, 0, 0)),   # x
            full_spec(w1r), full_spec(w1g), full_spec(b1r), full_spec(b1g),
            full_spec(gamma), full_spec(beta),
            full_spec(wconv), full_spec(bconv),
            full_spec(w2b), full_spec(b2),
        ],
        out_specs=pl.BlockSpec((b_tile, T, H), lambda i: (i, 0, 0)),
        compiler_params=pltpu.CompilerParams(
            dimension_semantics=("parallel",),        # batch axis -> both TCs
            vmem_limit_bytes=vmem_bytes),
    )(x, w1r, w1g, b1r, b1g, gamma, beta, wconv, bconv, w2b, b2)
    return out[:N]


def ref_forward(x, params):
    """Pure-JAX reference mirroring the PyTorch forward (sanity check)."""
    w1, b1, gamma, beta, wconv, bconv, w2, b2 = params
    h = jax.nn.gelu(x @ w1 + b1, approximate=False)
    x_r, x_g = h[..., :CHAN], h[..., CHAN:]
    mean = x_g.mean(-1, keepdims=True)
    var = ((x_g - mean) ** 2).mean(-1, keepdims=True)
    x_g = (x_g - mean) / jnp.sqrt(var + LN_EPS) * gamma + beta
    x_g = lax.conv_general_dilated(
        x_g, wconv[:, None, :], window_strides=(1,), padding=[(PAD, PAD)],
        dimension_numbers=("NWC", "WIO", "NWC"), feature_group_count=CHAN,
    ) + bconv
    return (x_r * x_g) @ w2 + b2


if __name__ == "__main__":
    key = jax.random.PRNGKey(0)
    ks = jax.random.split(key, 9)

    # Deterministic synthetic parameters (shapes follow the module __init__).
    w1 = 0.15 * jax.random.normal(ks[1], (HIDDEN, INTER), jnp.float32)
    b1 = 0.05 * jax.random.normal(ks[2], (1, INTER), jnp.float32)
    gamma = 1.0 + 0.1 * jax.random.normal(ks[3], (1, CHAN), jnp.float32)
    beta = 0.05 * jax.random.normal(ks[4], (1, CHAN), jnp.float32)
    # depthwise conv weight stored as (K, C) == torch weight[c, 0, k] transposed
    wconv = 0.2 * jax.random.normal(ks[5], (KSIZE, CHAN), jnp.float32)
    bconv = 0.05 * jax.random.normal(ks[6], (1, CHAN), jnp.float32)
    w2 = 0.15 * jax.random.normal(ks[7], (CHAN, HIDDEN), jnp.float32)
    b2 = 0.05 * jax.random.normal(ks[8], (1, HIDDEN), jnp.float32)
    params = (w1, b1, gamma, beta, wconv, bconv, w2, b2)

    # Case 1: N not a multiple of the batch tile (exercises padding), short T.
    # Case 2: T longer than the conv kernel (31) with an odd tiny batch.
    for (N, T) in ((12, 16), (5, 48)):
        x = jax.random.normal(jax.random.fold_in(ks[0], T),
                              (N, T, HIDDEN), jnp.float32)
        out = jax.block_until_ready(cgmlp_forward(x, params))
        ref = ref_forward(x, params)
        assert out.shape == (N, T, HIDDEN)
        assert bool(jnp.all(jnp.isfinite(out)))
        # bf16 MXU operands (f32 accumulate) + tanh-GELU vs the f32 exact-erf
        # reference give ~1e-2-level deviations at these magnitudes.
        err = float(jnp.max(jnp.abs(out - ref)))
        assert err < 1e-1, f"max abs err {err} (N={N}, T={T})"
    print("KERNEL_OK")
</pallas_src>

<mosaic_0001>
module attributes {stable_mosaic.version = 11 : i64} {
  func.func @kernel(%arg0: i32, %arg1: memref<8x16x32xf32, #tpu.memory_space<vmem>>, %arg2: memref<32x32xbf16, #tpu.memory_space<vmem>>, %arg3: memref<32x32xbf16, #tpu.memory_space<vmem>>, %arg4: memref<1x32xf32, #tpu.memory_space<vmem>>, %arg5: memref<1x32xf32, #tpu.memory_space<vmem>>, %arg6: memref<1x32xf32, #tpu.memory_space<vmem>>, %arg7: memref<1x32xf32, #tpu.memory_space<vmem>>, %arg8: memref<31x32xf32, #tpu.memory_space<vmem>>, %arg9: memref<1x32xf32, #tpu.memory_space<vmem>>, %arg10: memref<32x32xbf16, #tpu.memory_space<vmem>>, %arg11: memref<1x32xf32, #tpu.memory_space<vmem>>, %arg12: memref<8x16x32xf32, #tpu.memory_space<vmem>>) attributes {dimension_semantics = [#tpu.dimension_semantics<parallel>], iteration_bounds = array<i64: 2>, scalar_prefetch = 0 : i64, scratch_operands = 0 : i64, tpu.core_type = #tpu.core_type<tc>, window_params = [{transform_indices = @transform_0, window_bounds = array<i64: 8, 16, 32>}, {pipeline_mode = #tpu.pipeline_mode<synchronous>, transform_indices = @transform_1, window_bounds = array<i64: 32, 32>}, {pipeline_mode = #tpu.pipeline_mode<synchronous>, transform_indices = @transform_2, window_bounds = array<i64: 32, 32>}, {pipeline_mode = #tpu.pipeline_mode<synchronous>, transform_indices = @transform_3, window_bounds = array<i64: 1, 32>}, {pipeline_mode = #tpu.pipeline_mode<synchronous>, transform_indices = @transform_4, window_bounds = array<i64: 1, 32>}, {pipeline_mode = #tpu.pipeline_mode<synchronous>, transform_indices = @transform_5, window_bounds = array<i64: 1, 32>}, {pipeline_mode = #tpu.pipeline_mode<synchronous>, transform_indices = @transform_6, window_bounds = array<i64: 1, 32>}, {pipeline_mode = #tpu.pipeline_mode<synchronous>, transform_indices = @transform_7, window_bounds = array<i64: 31, 32>}, {pipeline_mode = #tpu.pipeline_mode<synchronous>, transform_indices = @transform_8, window_bounds = array<i64: 1, 32>}, {pipeline_mode = #tpu.pipeline_mode<synchronous>, transform_indices = @transform_9, window_bounds = array<i64: 32, 32>}, {pipeline_mode = #tpu.pipeline_mode<synchronous>, transform_indices = @transform_10, window_bounds = array<i64: 1, 32>}, {transform_indices = @transform_11, window_bounds = array<i64: 8, 16, 32>}]} {
    %c0_i32 = arith.constant 0 : i32
    %c1_i32 = arith.constant 1 : i32
    %0 = arith.muli %c0_i32, %c1_i32 : i32
    %c0_i32_0 = arith.constant 0 : i32
    %1 = arith.addi %c0_i32_0, %0 : i32
    %c8_i32 = arith.constant 8 : i32
    %2 = arith.muli %1, %c8_i32 : i32
    %3 = tpu.assume_multiple %2, 8 : i32
    %4 = arith.index_cast %3 : i32 to index
    %c0 = arith.constant 0 : index
    %c0_1 = arith.constant 0 : index
    %5 = vector.load %arg1[%4, %c0, %c0_1] : memref<8x16x32xf32, #tpu.memory_space<vmem>>, vector<8x16x32xf32>
    %6 = vector.shape_cast %5 : vector<8x16x32xf32> to vector<128x32xf32>
    %7 = arith.truncf %6 : vector<128x32xf32> to vector<128x32xbf16>
    %c0_2 = arith.constant 0 : index
    %c0_3 = arith.constant 0 : index
    %8 = vector.load %arg2[%c0_2, %c0_3] : memref<32x32xbf16, #tpu.memory_space<vmem>>, vector<32x32xbf16>
    %cst = arith.constant dense<0.000000e+00> : vector<128x32xf32>
    %9 = tpu.matmul %7, %8, %cst {dimension_numbers = #tpu.dot_dimension_numbers<[1], [0], [0], [1], [0, 0, 1, 1], [], []>} : vector<128x32xbf16>, vector<32x32xbf16>, vector<128x32xf32> -> vector<128x32xf32>
    %c0_4 = arith.constant 0 : index
    %c0_5 = arith.constant 0 : index
    %10 = vector.load %arg4[%c0_4, %c0_5] : memref<1x32xf32, #tpu.memory_space<vmem>>, vector<1x32xf32>
    %11 = vector.broadcast %10 : vector<1x32xf32> to vector<128x32xf32>
    %12 = arith.addf %9, %11 : vector<128x32xf32>
    %c0_6 = arith.constant 0 : index
    %c0_7 = arith.constant 0 : index
    %13 = vector.load %arg3[%c0_6, %c0_7] : memref<32x32xbf16, #tpu.memory_space<vmem>>, vector<32x32xbf16>
    %cst_8 = arith.constant dense<0.000000e+00> : vector<128x32xf32>
    %14 = tpu.matmul %7, %13, %cst_8 {dimension_numbers = #tpu.dot_dimension_numbers<[1], [0], [0], [1], [0, 0, 1, 1], [], []>} : vector<128x32xbf16>, vector<32x32xbf16>, vector<128x32xf32> -> vector<128x32xf32>
    %c0_9 = arith.constant 0 : index
    %c0_10 = arith.constant 0 : index
    %15 = vector.load %arg5[%c0_9, %c0_10] : memref<1x32xf32, #tpu.memory_space<vmem>>, vector<1x32xf32>
    %16 = vector.broadcast %15 : vector<1x32xf32> to vector<128x32xf32>
    %17 = arith.addf %14, %16 : vector<128x32xf32>
    %cst_11 = arith.constant 5.000000e-01 : f32
    %18 = vector.broadcast %cst_11 : f32 to vector<128x32xf32>
    %19 = arith.mulf %18, %12 : vector<128x32xf32>
    %20 = arith.mulf %12, %12 : vector<128x32xf32>
    %21 = arith.mulf %20, %12 : vector<128x32xf32>
    %cst_12 = arith.constant 4.471500e-02 : f32
    %22 = vector.broadcast %cst_12 : f32 to vector<128x32xf32>
    %23 = arith.mulf %22, %21 : vector<128x32xf32>
    %24 = arith.addf %12, %23 : vector<128x32xf32>
    %cst_13 = arith.constant 0.797884583 : f32
    %25 = vector.broadcast %cst_13 : f32 to vector<128x32xf32>
    %26 = arith.mulf %25, %24 : vector<128x32xf32>
    %27 = math.tanh %26 : vector<128x32xf32>
    %cst_14 = arith.constant 1.000000e+00 : f32
    %28 = vector.broadcast %cst_14 : f32 to vector<128x32xf32>
    %29 = arith.addf %28, %27 : vector<128x32xf32>
    %30 = arith.mulf %19, %29 : vector<128x32xf32>
    %cst_15 = arith.constant 5.000000e-01 : f32
    %31 = vector.broadcast %cst_15 : f32 to vector<128x32xf32>
    %32 = arith.mulf %31, %17 : vector<128x32xf32>
    %33 = arith.mulf %17, %17 : vector<128x32xf32>
    %34 = arith.mulf %33, %17 : vector<128x32xf32>
    %cst_16 = arith.constant 4.471500e-02 : f32
    %35 = vector.broadcast %cst_16 : f32 to vector<128x32xf32>
    %36 = arith.mulf %35, %34 : vector<128x32xf32>
    %37 = arith.addf %17, %36 : vector<128x32xf32>
    %cst_17 = arith.constant 0.797884583 : f32
    %38 = vector.broadcast %cst_17 : f32 to vector<128x32xf32>
    %39 = arith.mulf %38, %37 : vector<128x32xf32>
    %40 = math.tanh %39 : vector<128x32xf32>
    %cst_18 = arith.constant 1.000000e+00 : f32
    %41 = vector.broadcast %cst_18 : f32 to vector<128x32xf32>
    %42 = arith.addf %41, %40 : vector<128x32xf32>
    %43 = arith.mulf %32, %42 : vector<128x32xf32>
    %cst_19 = arith.constant dense<0.000000e+00> : vector<128xf32>
    %44 = vector.multi_reduction <add>, %43, %cst_19 [1] : vector<128x32xf32> to vector<128xf32>
    %45 = vector.shape_cast %44 : vector<128xf32> to vector<128x1xf32>
    %cst_20 = arith.constant 3.200000e+01 : f32
    %46 = vector.broadcast %cst_20 : f32 to vector<128x1xf32>
    %47 = arith.divf %45, %46 : vector<128x1xf32>
    %48 = vector.broadcast %47 : vector<128x1xf32> to vector<128x32xf32>
    %49 = arith.subf %43, %48 : vector<128x32xf32>
    %50 = arith.mulf %49, %49 : vector<128x32xf32>
    %cst_21 = arith.constant dense<0.000000e+00> : vector<128xf32>
    %51 = vector.multi_reduction <add>, %50, %cst_21 [1] : vector<128x32xf32> to vector<128xf32>
    %52 = vector.shape_cast %51 : vector<128xf32> to vector<128x1xf32>
    %cst_22 = arith.constant 3.200000e+01 : f32
    %53 = vector.broadcast %cst_22 : f32 to vector<128x1xf32>
    %54 = arith.divf %52, %53 : vector<128x1xf32>
    %cst_23 = arith.constant 9.99999974E-6 : f32
    %55 = vector.broadcast %cst_23 : f32 to vector<128x1xf32>
    %56 = arith.addf %54, %55 : vector<128x1xf32>
    %57 = math.rsqrt %56 : vector<128x1xf32>
    %58 = vector.broadcast %57 : vector<128x1xf32> to vector<128x32xf32>
    %59 = arith.mulf %49, %58 : vector<128x32xf32>
    %c0_24 = arith.constant 0 : index
    %c0_25 = arith.constant 0 : index
    %60 = vector.load %arg6[%c0_24, %c0_25] : memref<1x32xf32, #tpu.memory_space<vmem>>, vector<1x32xf32>
    %61 = vector.broadcast %60 : vector<1x32xf32> to vector<128x32xf32>
    %62 = arith.mulf %59, %61 : vector<128x32xf32>
    %c0_26 = arith.constant 0 : index
    %c0_27 = arith.constant 0 : index
    %63 = vector.load %arg7[%c0_26, %c0_27] : memref<1x32xf32, #tpu.memory_space<vmem>>, vector<1x32xf32>
    %64 = vector.broadcast %63 : vector<1x32xf32> to vector<128x32xf32>
    %65 = arith.addf %62, %64 : vector<128x32xf32>
    %66 = vector.shape_cast %65 : vector<128x32xf32> to vector<8x16x32xf32>
    %cst_28 = arith.constant 0.000000e+00 : f32
    %67 = vector.broadcast %cst_28 : f32 to vector<8x15x32xf32>
    %68 = tpu.concatenate %67, %66, %67 in 1 : vector<8x15x32xf32>, vector<8x16x32xf32>, vector<8x15x32xf32> -> vector<8x46x32xf32>
    %c0_29 = arith.constant 0 : index
    %c0_30 = arith.constant 0 : index
    %69 = vector.load %arg8[%c0_29, %c0_30] : memref<31x32xf32, #tpu.memory_space<vmem>>, vector<31x32xf32>
    %cst_31 = arith.constant 0.000000e+00 : f32
    %70 = vector.broadcast %cst_31 : f32 to vector<8x16x32xf32>
    %71 = vector.extract_strided_slice %68 {offsets = [0, 0, 0], sizes = [8, 16, 32], strides = [1, 1, 1]} : vector<8x46x32xf32> to vector<8x16x32xf32>
    %72 = vector.extract_strided_slice %69 {offsets = [0, 0], sizes = [1, 32], strides = [1, 1]} : vector<31x32xf32> to vector<1x32xf32>
    %73 = vector.shape_cast %72 : vector<1x32xf32> to vector<1x1x32xf32>
    %74 = vector.broadcast %73 : vector<1x1x32xf32> to vector<8x16x32xf32>
    %75 = arith.mulf %71, %74 : vector<8x16x32xf32>
    %76 = arith.addf %70, %75 : vector<8x16x32xf32>
    %77 = vector.extract_strided_slice %68 {offsets = [0, 1, 0], sizes = [8, 16, 32], strides = [1, 1, 1]} : vector<8x46x32xf32> to vector<8x16x32xf32>
    %78 = vector.extract_strided_slice %69 {offsets = [1, 0], sizes = [1, 32], strides = [1, 1]} : vector<31x32xf32> to vector<1x32xf32>
    %79 = vector.shape_cast %78 : vector<1x32xf32> to vector<1x1x32xf32>
    %80 = vector.broadcast %79 : vector<1x1x32xf32> to vector<8x16x32xf32>
    %81 = arith.mulf %77, %80 : vector<8x16x32xf32>
    %82 = arith.addf %76, %81 : vector<8x16x32xf32>
    %83 = vector.extract_strided_slice %68 {offsets = [0, 2, 0], sizes = [8, 16, 32], strides = [1, 1, 1]} : vector<8x46x32xf32> to vector<8x16x32xf32>
    %84 = vector.extract_strided_slice %69 {offsets = [2, 0], sizes = [1, 32], strides = [1, 1]} : vector<31x32xf32> to vector<1x32xf32>
    %85 = vector.shape_cast %84 : vector<1x32xf32> to vector<1x1x32xf32>
    %86 = vector.broadcast %85 : vector<1x1x32xf32> to vector<8x16x32xf32>
    %87 = arith.mulf %83, %86 : vector<8x16x32xf32>
    %88 = arith.addf %82, %87 : vector<8x16x32xf32>
    %89 = vector.extract_strided_slice %68 {offsets = [0, 3, 0], sizes = [8, 16, 32], strides = [1, 1, 1]} : vector<8x46x32xf32> to vector<8x16x32xf32>
    %90 = vector.extract_strided_slice %69 {offsets = [3, 0], sizes = [1, 32], strides = [1, 1]} : vector<31x32xf32> to vector<1x32xf32>
    %91 = vector.shape_cast %90 : vector<1x32xf32> to vector<1x1x32xf32>
    %92 = vector.broadcast %91 : vector<1x1x32xf32> to vector<8x16x32xf32>
    %93 = arith.mulf %89, %92 : vector<8x16x32xf32>
    %94 = arith.addf %88, %93 : vector<8x16x32xf32>
    %95 = vector.extract_strided_slice %68 {offsets = [0, 4, 0], sizes = [8, 16, 32], strides = [1, 1, 1]} : vector<8x46x32xf32> to vector<8x16x32xf32>
    %96 = vector.extract_strided_slice %69 {offsets = [4, 0], sizes = [1, 32], strides = [1, 1]} : vector<31x32xf32> to vector<1x32xf32>
    %97 = vector.shape_cast %96 : vector<1x32xf32> to vector<1x1x32xf32>
    %98 = vector.broadcast %97 : vector<1x1x32xf32> to vector<8x16x32xf32>
    %99 = arith.mulf %95, %98 : vector<8x16x32xf32>
    %100 = arith.addf %94, %99 : vector<8x16x32xf32>
    %101 = vector.extract_strided_slice %68 {offsets = [0, 5, 0], sizes = [8, 16, 32], strides = [1, 1, 1]} : vector<8x46x32xf32> to vector<8x16x32xf32>
    %102 = vector.extract_strided_slice %69 {offsets = [5, 0], sizes = [1, 32], strides = [1, 1]} : vector<31x32xf32> to vector<1x32xf32>
    %103 = vector.shape_cast %102 : vector<1x32xf32> to vector<1x1x32xf32>
    %104 = vector.broadcast %103 : vector<1x1x32xf32> to vector<8x16x32xf32>
    %105 = arith.mulf %101, %104 : vector<8x16x32xf32>
    %106 = arith.addf %100, %105 : vector<8x16x32xf32>
    %107 = vector.extract_strided_slice %68 {offsets = [0, 6, 0], sizes = [8, 16, 32], strides = [1, 1, 1]} : vector<8x46x32xf32> to vector<8x16x32xf32>
    %108 = vector.extract_strided_slice %69 {offsets = [6, 0], sizes = [1, 32], strides = [1, 1]} : vector<31x32xf32> to vector<1x32xf32>
    %109 = vector.shape_cast %108 : vector<1x32xf32> to vector<1x1x32xf32>
    %110 = vector.broadcast %109 : vector<1x1x32xf32> to vector<8x16x32xf32>
    %111 = arith.mulf %107, %110 : vector<8x16x32xf32>
    %112 = arith.addf %106, %111 : vector<8x16x32xf32>
    %113 = vector.extract_strided_slice %68 {offsets = [0, 7, 0], sizes = [8, 16, 32], strides = [1, 1, 1]} : vector<8x46x32xf32> to vector<8x16x32xf32>
    %114 = vector.extract_strided_slice %69 {offsets = [7, 0], sizes = [1, 32], strides = [1, 1]} : vector<31x32xf32> to vector<1x32xf32>
    %115 = vector.shape_cast %114 : vector<1x32xf32> to vector<1x1x32xf32>
    %116 = vector.broadcast %115 : vector<1x1x32xf32> to vector<8x16x32xf32>
    %117 = arith.mulf %113, %116 : vector<8x16x32xf32>
    %118 = arith.addf %112, %117 : vector<8x16x32xf32>
    %119 = vector.extract_strided_slice %68 {offsets = [0, 8, 0], sizes = [8, 16, 32], strides = [1, 1, 1]} : vector<8x46x32xf32> to vector<8x16x32xf32>
    %120 = vector.extract_strided_slice %69 {offsets = [8, 0], sizes = [1, 32], strides = [1, 1]} : vector<31x32xf32> to vector<1x32xf32>
    %121 = vector.shape_cast %120 : vector<1x32xf32> to vector<1x1x32xf32>
    %122 = vector.broadcast %121 : vector<1x1x32xf32> to vector<8x16x32xf32>
    %123 = arith.mulf %119, %122 : vector<8x16x32xf32>
    %124 = arith.addf %118, %123 : vector<8x16x32xf32>
    %125 = vector.extract_strided_slice %68 {offsets = [0, 9, 0], sizes = [8, 16, 32], strides = [1, 1, 1]} : vector<8x46x32xf32> to vector<8x16x32xf32>
    %126 = vector.extract_strided_slice %69 {offsets = [9, 0], sizes = [1, 32], strides = [1, 1]} : vector<31x32xf32> to vector<1x32xf32>
    %127 = vector.shape_cast %126 : vector<1x32xf32> to vector<1x1x32xf32>
    %128 = vector.broadcast %127 : vector<1x1x32xf32> to vector<8x16x32xf32>
    %129 = arith.mulf %125, %128 : vector<8x16x32xf32>
    %130 = arith.addf %124, %129 : vector<8x16x32xf32>
    %131 = vector.extract_strided_slice %68 {offsets = [0, 10, 0], sizes = [8, 16, 32], strides = [1, 1, 1]} : vector<8x46x32xf32> to vector<8x16x32xf32>
    %132 = vector.extract_strided_slice %69 {offsets = [10, 0], sizes = [1, 32], strides = [1, 1]} : vector<31x32xf32> to vector<1x32xf32>
    %133 = vector.shape_cast %132 : vector<1x32xf32> to vector<1x1x32xf32>
    %134 = vector.broadcast %133 : vector<1x1x32xf32> to vector<8x16x32xf32>
    %135 = arith.mulf %131, %134 : vector<8x16x32xf32>
    %136 = arith.addf %130, %135 : vector<8x16x32xf32>
    %137 = vector.extract_strided_slice %68 {offsets = [0, 11, 0], sizes = [8, 16, 32], strides = [1, 1, 1]} : vector<8x46x32xf32> to vector<8x16x32xf32>
    %138 = vector.extract_strided_slice %69 {offsets = [11, 0], sizes = [1, 32], strides = [1, 1]} : vector<31x32xf32> to vector<1x32xf32>
    %139 = vector.shape_cast %138 : vector<1x32xf32> to vector<1x1x32xf32>
    %140 = vector.broadcast %139 : vector<1x1x32xf32> to vector<8x16x32xf32>
    %141 = arith.mulf %137, %140 : vector<8x16x32xf32>
    %142 = arith.addf %136, %141 : vector<8x16x32xf32>
    %143 = vector.extract_strided_slice %68 {offsets = [0, 12, 0], sizes = [8, 16, 32], strides = [1, 1, 1]} : vector<8x46x32xf32> to vector<8x16x32xf32>
    %144 = vector.extract_strided_slice %69 {offsets = [12, 0], sizes = [1, 32], strides = [1, 1]} : vector<31x32xf32> to vector<1x32xf32>
    %145 = vector.shape_cast %144 : vector<1x32xf32> to vector<1x1x32xf32>
    %146 = vector.broadcast %145 : vector<1x1x32xf32> to vector<8x16x32xf32>
    %147 = arith.mulf %143, %146 : vector<8x16x32xf32>
    %148 = arith.addf %142, %147 : vector<8x16x32xf32>
    %149 = vector.extract_strided_slice %68 {offsets = [0, 13, 0], sizes = [8, 16, 32], strides = [1, 1, 1]} : vector<8x46x32xf32> to vector<8x16x32xf32>
    %150 = vector.extract_strided_slice %69 {offsets = [13, 0], sizes = [1, 32], strides = [1, 1]} : vector<31x32xf32> to vector<1x32xf32>
    %151 = vector.shape_cast %150 : vector<1x32xf32> to vector<1x1x32xf32>
    %152 = vector.broadcast %151 : vector<1x1x32xf32> to vector<8x16x32xf32>
    %153 = arith.mulf %149, %152 : vector<8x16x32xf32>
    %154 = arith.addf %148, %153 : vector<8x16x32xf32>
    %155 = vector.extract_strided_slice %68 {offsets = [0, 14, 0], sizes = [8, 16, 32], strides = [1, 1, 1]} : vector<8x46x32xf32> to vector<8x16x32xf32>
    %156 = vector.extract_strided_slice %69 {offsets = [14, 0], sizes = [1, 32], strides = [1, 1]} : vector<31x32xf32> to vector<1x32xf32>
    %157 = vector.shape_cast %156 : vector<1x32xf32> to vector<1x1x32xf32>
    %158 = vector.broadcast %157 : vector<1x1x32xf32> to vector<8x16x32xf32>
    %159 = arith.mulf %155, %158 : vector<8x16x32xf32>
    %160 = arith.addf %154, %159 : vector<8x16x32xf32>
    %161 = vector.extract_strided_slice %68 {offsets = [0, 15, 0], sizes = [8, 16, 32], strides = [1, 1, 1]} : vector<8x46x32xf32> to vector<8x16x32xf32>
    %162 = vector.extract_strided_slice %69 {offsets = [15, 0], sizes = [1, 32], strides = [1, 1]} : vector<31x32xf32> to vector<1x32xf32>
    %163 = vector.shape_cast %162 : vector<1x32xf32> to vector<1x1x32xf32>
    %164 = vector.broadcast %163 : vector<1x1x32xf32> to vector<8x16x32xf32>
    %165 = arith.mulf %161, %164 : vector<8x16x32xf32>
    %166 = arith.addf %160, %165 : vector<8x16x32xf32>
    %167 = vector.extract_strided_slice %68 {offsets = [0, 16, 0], sizes = [8, 16, 32], strides = [1, 1, 1]} : vector<8x46x32xf32> to vector<8x16x32xf32>
    %168 = vector.extract_strided_slice %69 {offsets = [16, 0], sizes = [1, 32], strides = [1, 1]} : vector<31x32xf32> to vector<1x32xf32>
    %169 = vector.shape_cast %168 : vector<1x32xf32> to vector<1x1x32xf32>
    %170 = vector.broadcast %169 : vector<1x1x32xf32> to vector<8x16x32xf32>
    %171 = arith.mulf %167, %170 : vector<8x16x32xf32>
    %172 = arith.addf %166, %171 : vector<8x16x32xf32>
    %173 = vector.extract_strided_slice %68 {offsets = [0, 17, 0], sizes = [8, 16, 32], strides = [1, 1, 1]} : vector<8x46x32xf32> to vector<8x16x32xf32>
    %174 = vector.extract_strided_slice %69 {offsets = [17, 0], sizes = [1, 32], strides = [1, 1]} : vector<31x32xf32> to vector<1x32xf32>
    %175 = vector.shape_cast %174 : vector<1x32xf32> to vector<1x1x32xf32>
    %176 = vector.broadcast %175 : vector<1x1x32xf32> to vector<8x16x32xf32>
    %177 = arith.mulf %173, %176 : vector<8x16x32xf32>
    %178 = arith.addf %172, %177 : vector<8x16x32xf32>
    %179 = vector.extract_strided_slice %68 {offsets = [0, 18, 0], sizes = [8, 16, 32], strides = [1, 1, 1]} : vector<8x46x32xf32> to vector<8x16x32xf32>
    %180 = vector.extract_strided_slice %69 {offsets = [18, 0], sizes = [1, 32], strides = [1, 1]} : vector<31x32xf32> to vector<1x32xf32>
    %181 = vector.shape_cast %180 : vector<1x32xf32> to vector<1x1x32xf32>
    %182 = vector.broadcast %181 : vector<1x1x32xf32> to vector<8x16x32xf32>
    %183 = arith.mulf %179, %182 : vector<8x16x32xf32>
    %184 = arith.addf %178, %183 : vector<8x16x32xf32>
    %185 = vector.extract_strided_slice %68 {offsets = [0, 19, 0], sizes = [8, 16, 32], strides = [1, 1, 1]} : vector<8x46x32xf32> to vector<8x16x32xf32>
    %186 = vector.extract_strided_slice %69 {offsets = [19, 0], sizes = [1, 32], strides = [1, 1]} : vector<31x32xf32> to vector<1x32xf32>
    %187 = vector.shape_cast %186 : vector<1x32xf32> to vector<1x1x32xf32>
    %188 = vector.broadcast %187 : vector<1x1x32xf32> to vector<8x16x32xf32>
    %189 = arith.mulf %185, %188 : vector<8x16x32xf32>
    %190 = arith.addf %184, %189 : vector<8x16x32xf32>
    %191 = vector.extract_strided_slice %68 {offsets = [0, 20, 0], sizes = [8, 16, 32], strides = [1, 1, 1]} : vector<8x46x32xf32> to vector<8x16x32xf32>
    %192 = vector.extract_strided_slice %69 {offsets = [20, 0], sizes = [1, 32], strides = [1, 1]} : vector<31x32xf32> to vector<1x32xf32>
    %193 = vector.shape_cast %192 : vector<1x32xf32> to vector<1x1x32xf32>
    %194 = vector.broadcast %193 : vector<1x1x32xf32> to vector<8x16x32xf32>
    %195 = arith.mulf %191, %194 : vector<8x16x32xf32>
    %196 = arith.addf %190, %195 : vector<8x16x32xf32>
    %197 = vector.extract_strided_slice %68 {offsets = [0, 21, 0], sizes = [8, 16, 32], strides = [1, 1, 1]} : vector<8x46x32xf32> to vector<8x16x32xf32>
    %198 = vector.extract_strided_slice %69 {offsets = [21, 0], sizes = [1, 32], strides = [1, 1]} : vector<31x32xf32> to vector<1x32xf32>
    %199 = vector.shape_cast %198 : vector<1x32xf32> to vector<1x1x32xf32>
    %200 = vector.broadcast %199 : vector<1x1x32xf32> to vector<8x16x32xf32>
    %201 = arith.mulf %197, %200 : vector<8x16x32xf32>
    %202 = arith.addf %196, %201 : vector<8x16x32xf32>
    %203 = vector.extract_strided_slice %68 {offsets = [0, 22, 0], sizes = [8, 16, 32], strides = [1, 1, 1]} : vector<8x46x32xf32> to vector<8x16x32xf32>
    %204 = vector.extract_strided_slice %69 {offsets = [22, 0], sizes = [1, 32], strides = [1, 1]} : vector<31x32xf32> to vector<1x32xf32>
    %205 = vector.shape_cast %204 : vector<1x32xf32> to vector<1x1x32xf32>
    %206 = vector.broadcast %205 : vector<1x1x32xf32> to vector<8x16x32xf32>
    %207 = arith.mulf %203, %206 : vector<8x16x32xf32>
    %208 = arith.addf %202, %207 : vector<8x16x32xf32>
    %209 = vector.extract_strided_slice %68 {offsets = [0, 23, 0], sizes = [8, 16, 32], strides = [1, 1, 1]} : vector<8x46x32xf32> to vector<8x16x32xf32>
    %210 = vector.extract_strided_slice %69 {offsets = [23, 0], sizes = [1, 32], strides = [1, 1]} : vector<31x32xf32> to vector<1x32xf32>
    %211 = vector.shape_cast %210 : vector<1x32xf32> to vector<1x1x32xf32>
    %212 = vector.broadcast %211 : vector<1x1x32xf32> to vector<8x16x32xf32>
    %213 = arith.mulf %209, %212 : vector<8x16x32xf32>
    %214 = arith.addf %208, %213 : vector<8x16x32xf32>
    %215 = vector.extract_strided_slice %68 {offsets = [0, 24, 0], sizes = [8, 16, 32], strides = [1, 1, 1]} : vector<8x46x32xf32> to vector<8x16x32xf32>
    %216 = vector.extract_strided_slice %69 {offsets = [24, 0], sizes = [1, 32], strides = [1, 1]} : vector<31x32xf32> to vector<1x32xf32>
    %217 = vector.shape_cast %216 : vector<1x32xf32> to vector<1x1x32xf32>
    %218 = vector.broadcast %217 : vector<1x1x32xf32> to vector<8x16x32xf32>
    %219 = arith.mulf %215, %218 : vector<8x16x32xf32>
    %220 = arith.addf %214, %219 : vector<8x16x32xf32>
    %221 = vector.extract_strided_slice %68 {offsets = [0, 25, 0], sizes = [8, 16, 32], strides = [1, 1, 1]} : vector<8x46x32xf32> to vector<8x16x32xf32>
    %222 = vector.extract_strided_slice %69 {offsets = [25, 0], sizes = [1, 32], strides = [1, 1]} : vector<31x32xf32> to vector<1x32xf32>
    %223 = vector.shape_cast %222 : vector<1x32xf32> to vector<1x1x32xf32>
    %224 = vector.broadcast %223 : vector<1x1x32xf32> to vector<8x16x32xf32>
    %225 = arith.mulf %221, %224 : vector<8x16x32xf32>
    %226 = arith.addf %220, %225 : vector<8x16x32xf32>
    %227 = vector.extract_strided_slice %68 {offsets = [0, 26, 0], sizes = [8, 16, 32], strides = [1, 1, 1]} : vector<8x46x32xf32> to vector<8x16x32xf32>
    %228 = vector.extract_strided_slice %69 {offsets = [26, 0], sizes = [1, 32], strides = [1, 1]} : vector<31x32xf32> to vector<1x32xf32>
    %229 = vector.shape_cast %228 : vector<1x32xf32> to vector<1x1x32xf32>
    %230 = vector.broadcast %229 : vector<1x1x32xf32> to vector<8x16x32xf32>
    %231 = arith.mulf %227, %230 : vector<8x16x32xf32>
    %232 = arith.addf %226, %231 : vector<8x16x32xf32>
    %233 = vector.extract_strided_slice %68 {offsets = [0, 27, 0], sizes = [8, 16, 32], strides = [1, 1, 1]} : vector<8x46x32xf32> to vector<8x16x32xf32>
    %234 = vector.extract_strided_slice %69 {offsets = [27, 0], sizes = [1, 32], strides = [1, 1]} : vector<31x32xf32> to vector<1x32xf32>
    %235 = vector.shape_cast %234 : vector<1x32xf32> to vector<1x1x32xf32>
    %236 = vector.broadcast %235 : vector<1x1x32xf32> to vector<8x16x32xf32>
    %237 = arith.mulf %233, %236 : vector<8x16x32xf32>
    %238 = arith.addf %232, %237 : vector<8x16x32xf32>
    %239 = vector.extract_strided_slice %68 {offsets = [0, 28, 0], sizes = [8, 16, 32], strides = [1, 1, 1]} : vector<8x46x32xf32> to vector<8x16x32xf32>
    %240 = vector.extract_strided_slice %69 {offsets = [28, 0], sizes = [1, 32], strides = [1, 1]} : vector<31x32xf32> to vector<1x32xf32>
    %241 = vector.shape_cast %240 : vector<1x32xf32> to vector<1x1x32xf32>
    %242 = vector.broadcast %241 : vector<1x1x32xf32> to vector<8x16x32xf32>
    %243 = arith.mulf %239, %242 : vector<8x16x32xf32>
    %244 = arith.addf %238, %243 : vector<8x16x32xf32>
    %245 = vector.extract_strided_slice %68 {offsets = [0, 29, 0], sizes = [8, 16, 32], strides = [1, 1, 1]} : vector<8x46x32xf32> to vector<8x16x32xf32>
    %246 = vector.extract_strided_slice %69 {offsets = [29, 0], sizes = [1, 32], strides = [1, 1]} : vector<31x32xf32> to vector<1x32xf32>
    %247 = vector.shape_cast %246 : vector<1x32xf32> to vector<1x1x32xf32>
    %248 = vector.broadcast %247 : vector<1x1x32xf32> to vector<8x16x32xf32>
    %249 = arith.mulf %245, %248 : vector<8x16x32xf32>
    %250 = arith.addf %244, %249 : vector<8x16x32xf32>
    %251 = vector.extract_strided_slice %68 {offsets = [0, 30, 0], sizes = [8, 16, 32], strides = [1, 1, 1]} : vector<8x46x32xf32> to vector<8x16x32xf32>
    %252 = vector.extract_strided_slice %69 {offsets = [30, 0], sizes = [1, 32], strides = [1, 1]} : vector<31x32xf32> to vector<1x32xf32>
    %253 = vector.shape_cast %252 : vector<1x32xf32> to vector<1x1x32xf32>
    %254 = vector.broadcast %253 : vector<1x1x32xf32> to vector<8x16x32xf32>
    %255 = arith.mulf %251, %254 : vector<8x16x32xf32>
    %256 = arith.addf %250, %255 : vector<8x16x32xf32>
    %257 = vector.shape_cast %256 : vector<8x16x32xf32> to vector<128x32xf32>
    %c0_32 = arith.constant 0 : index
    %c0_33 = arith.constant 0 : index
    %258 = vector.load %arg9[%c0_32, %c0_33] : memref<1x32xf32, #tpu.memory_space<vmem>>, vector<1x32xf32>
    %259 = vector.broadcast %258 : vector<1x32xf32> to vector<128x32xf32>
    %260 = arith.addf %257, %259 : vector<128x32xf32>
    %261 = arith.mulf %30, %260 : vector<128x32xf32>
    %262 = arith.truncf %261 : vector<128x32xf32> to vector<128x32xbf16>
    %c0_34 = arith.constant 0 : index
    %c0_35 = arith.constant 0 : index
    %263 = vector.load %arg10[%c0_34, %c0_35] : memref<32x32xbf16, #tpu.memory_space<vmem>>, vector<32x32xbf16>
    %cst_36 = arith.constant dense<0.000000e+00> : vector<128x32xf32>
    %264 = tpu.matmul %262, %263, %cst_36 {dimension_numbers = #tpu.dot_dimension_numbers<[1], [0], [0], [1], [0, 0, 1, 1], [], []>} : vector<128x32xbf16>, vector<32x32xbf16>, vector<128x32xf32> -> vector<128x32xf32>
    %c0_37 = arith.constant 0 : index
    %c0_38 = arith.constant 0 : index
    %265 = vector.load %arg11[%c0_37, %c0_38] : memref<1x32xf32, #tpu.memory_space<vmem>>, vector<1x32xf32>
    %266 = vector.broadcast %265 : vector<1x32xf32> to vector<128x32xf32>
    %267 = arith.addf %264, %266 : vector<128x32xf32>
    %268 = vector.shape_cast %267 : vector<128x32xf32> to vector<8x16x32xf32>
    %269 = arith.index_cast %3 : i32 to index
    %c0_39 = arith.constant 0 : index
    %c0_40 = arith.constant 0 : index
    %270 = vector.load %arg12[%269, %c0_39, %c0_40] : memref<8x16x32xf32, #tpu.memory_space<vmem>>, vector<8x16x32xf32>
    tpu.vector_store %arg12[%269, %c0_39, %c0_40], %268 {strides = array<i32>} : memref<8x16x32xf32, #tpu.memory_space<vmem>>, vector<8x16x32xf32>,
    %c1_i32_41 = arith.constant 1 : i32
    return
  }
  func.func @transform_0(%arg0: i32) -> (i32, i32, i32) {
    %c0_i32 = arith.constant 0 : i32
    %c0_i32_0 = arith.constant 0 : i32
    %c0_i32_1 = arith.constant 0 : i32
    return %arg0, %c0_i32, %c0_i32_0 : i32, i32, i32
  }
  func.func @transform_1(%arg0: i32) -> (i32, i32) {
    %c0_i32 = arith.constant 0 : i32
    %c0_i32_0 = arith.constant 0 : i32
    %c0_i32_1 = arith.constant 0 : i32
    return %c0_i32, %c0_i32_0 : i32, i32
  }
  func.func @transform_2(%arg0: i32) -> (i32, i32) {
    %c0_i32 = arith.constant 0 : i32
    %c0_i32_0 = arith.constant 0 : i32
    %c0_i32_1 = arith.constant 0 : i32
    return %c0_i32, %c0_i32_0 : i32, i32
  }
  func.func @transform_3(%arg0: i32) -> (i32, i32) {
    %c0_i32 = arith.constant 0 : i32
    %c0_i32_0 = arith.constant 0 : i32
    %c0_i32_1 = arith.constant 0 : i32
    return %c0_i32, %c0_i32_0 : i32, i32
  }
  func.func @transform_4(%arg0: i32) -> (i32, i32) {
    %c0_i32 = arith.constant 0 : i32
    %c0_i32_0 = arith.constant 0 : i32
    %c0_i32_1 = arith.constant 0 : i32
    return %c0_i32, %c0_i32_0 : i32, i32
  }
  func.func @transform_5(%arg0: i32) -> (i32, i32) {
    %c0_i32 = arith.constant 0 : i32
    %c0_i32_0 = arith.constant 0 : i32
    %c0_i32_1 = arith.constant 0 : i32
    return %c0_i32, %c0_i32_0 : i32, i32
  }
  func.func @transform_6(%arg0: i32) -> (i32, i32) {
    %c0_i32 = arith.constant 0 : i32
    %c0_i32_0 = arith.constant 0 : i32
    %c0_i32_1 = arith.constant 0 : i32
    return %c0_i32, %c0_i32_0 : i32, i32
  }
  func.func @transform_7(%arg0: i32) -> (i32, i32) {
    %c0_i32 = arith.constant 0 : i32
    %c0_i32_0 = arith.constant 0 : i32
    %c0_i32_1 = arith.constant 0 : i32
    return %c0_i32, %c0_i32_0 : i32, i32
  }
  func.func @transform_8(%arg0: i32) -> (i32, i32) {
    %c0_i32 = arith.constant 0 : i32
    %c0_i32_0 = arith.constant 0 : i32
    %c0_i32_1 = arith.constant 0 : i32
    return %c0_i32, %c0_i32_0 : i32, i32
  }
  func.func @transform_9(%arg0: i32) -> (i32, i32) {
    %c0_i32 = arith.constant 0 : i32
    %c0_i32_0 = arith.constant 0 : i32
    %c0_i32_1 = arith.constant 0 : i32
    return %c0_i32, %c0_i32_0 : i32, i32
  }
  func.func @transform_10(%arg0: i32) -> (i32, i32) {
    %c0_i32 = arith.constant 0 : i32
    %c0_i32_0 = arith.constant 0 : i32
    %c0_i32_1 = arith.constant 0 : i32
    return %c0_i32, %c0_i32_0 : i32, i32
  }
  func.func @transform_11(%arg0: i32) -> (i32, i32, i32) {
    %c0_i32 = arith.constant 0 : i32
    %c0_i32_0 = arith.constant 0 : i32
    %c0_i32_1 = arith.constant 0 : i32
    return %arg0, %c0_i32, %c0_i32_0 : i32, i32, i32
  }
}

</mosaic_0001>

<llo_original>
// kernel: cgmlp_forward.1
$region0: #{cgmlp_forward.1}
  #allocation0 [shape = 'u32[]', space=smem, size = 0x4, offset = 0x4, fixed_abs, tag = 'smem constant byte address 0x4 - core index']
  #allocation1 [shape = 'u32[72,128]{1,0:T(1,128)}', space=vmem, size = 0x9000, scoped, tag = 'internal scratch']
  %s0 = inlined_call_operand.vmem [shape: f32[16,16,32], index: 0, kind: input, shape index: {}]
  %s1 = inlined_call_operand.vmem [shape: bf16[32,32], index: 1, kind: input, shape index: {}]
  %s2 = inlined_call_operand.vmem [shape: bf16[32,32], index: 2, kind: input, shape index: {}]
  %s3 = inlined_call_operand.vmem [shape: f32[1,32], index: 3, kind: input, shape index: {}]
  %s4 = inlined_call_operand.vmem [shape: f32[1,32], index: 4, kind: input, shape index: {}]
  %s5 = inlined_call_operand.vmem [shape: f32[1,32], index: 5, kind: input, shape index: {}]
  %s6 = inlined_call_operand.vmem [shape: f32[1,32], index: 6, kind: input, shape index: {}]
  %s7 = inlined_call_operand.vmem [shape: f32[31,32], index: 7, kind: input, shape index: {}]
  %s8 = inlined_call_operand.vmem [shape: f32[1,32], index: 8, kind: input, shape index: {}]
  %s9 = inlined_call_operand.vmem [shape: bf16[32,32], index: 9, kind: input, shape index: {}]
  %s10 = inlined_call_operand.vmem [shape: f32[1,32], index: 10, kind: input, shape index: {}]
  %s11 = inlined_call_operand.vmem [shape: f32[16,16,32], index: 11, kind: output, shape index: {}]
  %s12 = sld [smem:[#allocation0]]
  $region77: #{cgmlp_forward.1} parent=0
    _
  %s14 = ssub.s32 1, %s12
  %s15 = scalar_select 0, %s14, %s12
  loop: start=0, step=1, limit=4
  $region2: #{cgmlp_forward.1} parent=0 // loop_pre_header
    _
  $region3: #{cgmlp_forward.1} parent=0 // loop_header
    %s17 = sphi 0, %s21
    %p18 = scmp.ge.s32.totalorder %s17, 4
    %s27 = sphi 0, %s29
    %s30 = sphi 0, %s27
    %s31 = sphi 0, %s30
    %s47 = sphi 0, %s31
    %s51 = sphi 0, %s51
    %s53 = sphi 0, %s51
    %s54 = sphi 0, %s53
    %s68 = sphi 0, %s54
    %s72 = sphi 0, %s72
    %s74 = sphi 0, %s72
    %s75 = sphi 0, %s74
    %s89 = sphi 0, %s75
    %s93 = sphi 0, %s93
    %s95 = sphi 0, %s93
    %s96 = sphi 0, %s95
    %s110 = sphi 0, %s96
    %s114 = sphi 0, %s114
    %s116 = sphi 0, %s114
    %s117 = sphi 0, %s116
    %s131 = sphi 0, %s117
    %s135 = sphi 0, %s135
    %s137 = sphi 0, %s135
    %s138 = sphi 0, %s137
    %s152 = sphi 0, %s138
    %s156 = sphi 0, %s156
    %s158 = sphi 0, %s156
    %s159 = sphi 0, %s158
    %s173 = sphi 0, %s159
    %s177 = sphi 0, %s177
    %s179 = sphi 0, %s177
    %s180 = sphi 0, %s179
    %s194 = sphi 0, %s180
    %s198 = sphi 0, %s198
    %s200 = sphi 0, %s198
    %s201 = sphi 0, %s200
    %s215 = sphi 0, %s201
    %s219 = sphi 0, %s219
    %s221 = sphi 0, %s219
    %s222 = sphi 0, %s221
    %s236 = sphi 0, %s222
    %s240 = sphi 0, %s240
    %s242 = sphi 0, %s240
    %s243 = sphi 0, %s242
    %s257 = sphi 0, %s243
    %s263 = sphi 0, %s265
    %s266 = sphi 0, %s263
    %s267 = sphi 0, %s266
    %s283 = sphi 0, %s267
  $region4: #{cgmlp_forward.1} parent=0 // loop_header_branch
    %20 = sbr.rel (%p18) target = $region8
  $region5: #{cgmlp_forward.1} parent=0 // loop_body
    %s22 = ssub.s32 %s17, 1
    %s23 = ssub.s32 %s17, 2
    %s24 = sadd.s32 %s17, 1
    %s25 = ssub.s32 %s17, %s24
    %p26 = scmp.eq.s32.totalorder %s25, 0
    %s28 = sadd.s32 %s27, 1
    %s29 = scalar_select %p26, %s27, %s28
    %p32 = pneg %p26
    %p33 = scmp.eq.s32.totalorder %s17, 1
    %p34 = por %p32, %p33
    %p35 = scmp.ne.s32.totalorder %s27, %s30
    %p36 = scmp.eq.s32.totalorder %s17, 0
    %p37 = por %p35, %p36
    %p38 = scmp.ne.s32.totalorder %s27, %s30
    %p39 = scmp.eq.s32.totalorder %s22, 1
    %p40 = por %p38, %p39
    %p41 = scmp.ne.s32.totalorder %s30, %s31
    %p42 = scmp.eq.s32.totalorder %s22, 0
    %p43 = por %p41, %p42
    %p44 = scmp.ne.s32.totalorder %s30, %s31
    %p45 = scmp.eq.s32.totalorder %s23, 1
    %p46 = por %p44, %p45
    %p48 = scmp.ne.s32.totalorder %s31, %s47
    %p49 = scmp.eq.s32.totalorder %s23, 0
    %p50 = por %p48, %p49
    %s52 = sadd.s32 %s51, 1
    %p55 = scmp.eq.s32.totalorder %s17, 1
    %p56 = scmp.ne.s32.totalorder %s51, %s53
    %p57 = scmp.eq.s32.totalorder %s17, 0
    %p58 = por %p56, %p57
    %p59 = scmp.ne.s32.totalorder %s51, %s53
    %p60 = scmp.eq.s32.totalorder %s22, 1
    %p61 = por %p59, %p60
    %p62 = scmp.ne.s32.totalorder %s53, %s54
    %p63 = scmp.eq.s32.totalorder %s22, 0
    %p64 = por %p62, %p63
    %p65 = scmp.ne.s32.totalorder %s53, %s54
    %p66 = scmp.eq.s32.totalorder %s23, 1
    %p67 = por %p65, %p66
    %p69 = scmp.ne.s32.totalorder %s54, %s68
    %p70 = scmp.eq.s32.totalorder %s23, 0
    %p71 = por %p69, %p70
    %s73 = sadd.s32 %s72, 1
    %p76 = scmp.eq.s32.totalorder %s17, 1
    %p77 = scmp.ne.s32.totalorder %s72, %s74
    %p78 = scmp.eq.s32.totalorder %s17, 0
    %p79 = por %p77, %p78
    %p80 = scmp.ne.s32.totalorder %s72, %s74
    %p81 = scmp.eq.s32.totalorder %s22, 1
    %p82 = por %p80, %p81
    %p83 = scmp.ne.s32.totalorder %s74, %s75
    %p84 = scmp.eq.s32.totalorder %s22, 0
    %p85 = por %p83, %p84
    %p86 = scmp.ne.s32.totalorder %s74, %s75
    %p87 = scmp.eq.s32.totalorder %s23, 1
    %p88 = por %p86, %p87
    %p90 = scmp.ne.s32.totalorder %s75, %s89
    %p91 = scmp.eq.s32.totalorder %s23, 0
    %p92 = por %p90, %p91
    %s94 = sadd.s32 %s93, 1
    %p97 = scmp.eq.s32.totalorder %s17, 1
    %p98 = scmp.ne.s32.totalorder %s93, %s95
    %p99 = scmp.eq.s32.totalorder %s17, 0
    %p100 = por %p98, %p99
    %p101 = scmp.ne.s32.totalorder %s93, %s95
    %p102 = scmp.eq.s32.totalorder %s22, 1
    %p103 = por %p101, %p102
    %p104 = scmp.ne.s32.totalorder %s95, %s96
    %p105 = scmp.eq.s32.totalorder %s22, 0
    %p106 = por %p104, %p105
    %p107 = scmp.ne.s32.totalorder %s95, %s96
    %p108 = scmp.eq.s32.totalorder %s23, 1
    %p109 = por %p107, %p108
    %p111 = scmp.ne.s32.totalorder %s96, %s110
    %p112 = scmp.eq.s32.totalorder %s23, 0
    %p113 = por %p111, %p112
    %s115 = sadd.s32 %s114, 1
    %p118 = scmp.eq.s32.totalorder %s17, 1
    %p119 = scmp.ne.s32.totalorder %s114, %s116
    %p120 = scmp.eq.s32.totalorder %s17, 0
    %p121 = por %p119, %p120
    %p122 = scmp.ne.s32.totalorder %s114, %s116
    %p123 = scmp.eq.s32.totalorder %s22, 1
    %p124 = por %p122, %p123
    %p125 = scmp.ne.s32.totalorder %s116, %s117
    %p126 = scmp.eq.s32.totalorder %s22, 0
    %p127 = por %p125, %p126
    %p128 = scmp.ne.s32.totalorder %s116, %s117
    %p129 = scmp.eq.s32.totalorder %s23, 1
    %p130 = por %p128, %p129
    %p132 = scmp.ne.s32.totalorder %s117, %s131
    %p133 = scmp.eq.s32.totalorder %s23, 0
    %p134 = por %p132, %p133
    %s136 = sadd.s32 %s135, 1
    %p139 = scmp.eq.s32.totalorder %s17, 1
    %p140 = scmp.ne.s32.totalorder %s135, %s137
    %p141 = scmp.eq.s32.totalorder %s17, 0
    %p142 = por %p140, %p141
    %p143 = scmp.ne.s32.totalorder %s135, %s137
    %p144 = scmp.eq.s32.totalorder %s22, 1
    %p145 = por %p143, %p144
    %p146 = scmp.ne.s32.totalorder %s137, %s138
    %p147 = scmp.eq.s32.totalorder %s22, 0
    %p148 = por %p146, %p147
    %p149 = scmp.ne.s32.totalorder %s137, %s138
    %p150 = scmp.eq.s32.totalorder %s23, 1
    %p151 = por %p149, %p150
    %p153 = scmp.ne.s32.totalorder %s138, %s152
    %p154 = scmp.eq.s32.totalorder %s23, 0
    %p155 = por %p153, %p154
    %s157 = sadd.s32 %s156, 1
    %p160 = scmp.eq.s32.totalorder %s17, 1
    %p161 = scmp.ne.s32.totalorder %s156, %s158
    %p162 = scmp.eq.s32.totalorder %s17, 0
    %p163 = por %p161, %p162
    %p164 = scmp.ne.s32.totalorder %s156, %s158
    %p165 = scmp.eq.s32.totalorder %s22, 1
    %p166 = por %p164, %p165
    %p167 = scmp.ne.s32.totalorder %s158, %s159
    %p168 = scmp.eq.s32.totalorder %s22, 0
    %p169 = por %p167, %p168
    %p170 = scmp.ne.s32.totalorder %s158, %s159
    %p171 = scmp.eq.s32.totalorder %s23, 1
    %p172 = por %p170, %p171
    %p174 = scmp.ne.s32.totalorder %s159, %s173
    %p175 = scmp.eq.s32.totalorder %s23, 0
    %p176 = por %p174, %p175
    %s178 = sadd.s32 %s177, 1
    %p181 = scmp.eq.s32.totalorder %s17, 1
    %p182 = scmp.ne.s32.totalorder %s177, %s179
    %p183 = scmp.eq.s32.totalorder %s17, 0
    %p184 = por %p182, %p183
    %p185 = scmp.ne.s32.totalorder %s177, %s179
    %p186 = scmp.eq.s32.totalorder %s22, 1
    %p187 = por %p185, %p186
    %p188 = scmp.ne.s32.totalorder %s179, %s180
    %p189 = scmp.eq.s32.totalorder %s22, 0
    %p190 = por %p188, %p189
    %p191 = scmp.ne.s32.totalorder %s179, %s180
    %p192 = scmp.eq.s32.totalorder %s23, 1
    %p193 = por %p191, %p192
    %p195 = scmp.ne.s32.totalorder %s180, %s194
    %p196 = scmp.eq.s32.totalorder %s23, 0
    %p197 = por %p195, %p196
    %s199 = sadd.s32 %s198, 1
    %p202 = scmp.eq.s32.totalorder %s17, 1
    %p203 = scmp.ne.s32.totalorder %s198, %s200
    %p204 = scmp.eq.s32.totalorder %s17, 0
    %p205 = por %p203, %p204
    %p206 = scmp.ne.s32.totalorder %s198, %s200
    %p207 = scmp.eq.s32.totalorder %s22, 1
    %p208 = por %p206, %p207
    %p209 = scmp.ne.s32.totalorder %s200, %s201
    %p210 = scmp.eq.s32.totalorder %s22, 0
    %p211 = por %p209, %p210
    %p212 = scmp.ne.s32.totalorder %s200, %s201
    %p213 = scmp.eq.s32.totalorder %s23, 1
    %p214 = por %p212, %p213
    %p216 = scmp.ne.s32.totalorder %s201, %s215
    %p217 = scmp.eq.s32.totalorder %s23, 0
    %p218 = por %p216, %p217
    %s220 = sadd.s32 %s219, 1
    %p223 = scmp.eq.s32.totalorder %s17, 1
    %p224 = scmp.ne.s32.totalorder %s219, %s221
    %p225 = scmp.eq.s32.totalorder %s17, 0
    %p226 = por %p224, %p225
    %p227 = scmp.ne.s32.totalorder %s219, %s221
    %p228 = scmp.eq.s32.totalorder %s22, 1
    %p229 = por %p227, %p228
    %p230 = scmp.ne.s32.totalorder %s221, %s222
    %p231 = scmp.eq.s32.totalorder %s22, 0
    %p232 = por %p230, %p231
    %p233 = scmp.ne.s32.totalorder %s221, %s222
    %p234 = scmp.eq.s32.totalorder %s23, 1
    %p235 = por %p233, %p234
    %p237 = scmp.ne.s32.totalorder %s222, %s236
    %p238 = scmp.eq.s32.totalorder %s23, 0
    %p239 = por %p237, %p238
    %s241 = sadd.s32 %s240, 1
    %p244 = scmp.eq.s32.totalorder %s17, 1
    %p245 = scmp.ne.s32.totalorder %s240, %s242
    %p246 = scmp.eq.s32.totalorder %s17, 0
    %p247 = por %p245, %p246
    %p248 = scmp.ne.s32.totalorder %s240, %s242
    %p249 = scmp.eq.s32.totalorder %s22, 1
    %p250 = por %p248, %p249
    %p251 = scmp.ne.s32.totalorder %s242, %s243
    %p252 = scmp.eq.s32.totalorder %s22, 0
    %p253 = por %p251, %p252
    %p254 = scmp.ne.s32.totalorder %s242, %s243
    %p255 = scmp.eq.s32.totalorder %s23, 1
    %p256 = por %p254, %p255
    %p258 = scmp.ne.s32.totalorder %s243, %s257
    %p259 = scmp.eq.s32.totalorder %s23, 0
    %p260 = por %p258, %p259
    %s261 = ssub.s32 %s17, %s24
    %p262 = scmp.eq.s32.totalorder %s261, 0
    %s264 = sadd.s32 %s263, 1
    %s265 = scalar_select %p262, %s263, %s264
    %p268 = pneg %p262
    %p269 = scmp.eq.s32.totalorder %s17, 1
    %p270 = por %p268, %p269
    %p271 = scmp.ne.s32.totalorder %s263, %s266
    %p272 = scmp.eq.s32.totalorder %s17, 0
    %p273 = por %p271, %p272
    %p274 = scmp.ne.s32.totalorder %s263, %s266
    %p275 = scmp.eq.s32.totalorder %s22, 1
    %p276 = por %p274, %p275
    %p277 = scmp.ne.s32.totalorder %s266, %s267
    %p278 = scmp.eq.s32.totalorder %s22, 0
    %p279 = por %p277, %p278
    %p280 = scmp.ne.s32.totalorder %s266, %s267
    %p281 = scmp.eq.s32.totalorder %s23, 1
    %p282 = por %p280, %p281
    %p284 = scmp.ne.s32.totalorder %s267, %s283
    %p285 = scmp.eq.s32.totalorder %s23, 0
    %p286 = por %p284, %p285
    %p287 = scmp.le.s32.totalorder 1, %s17
    %p288 = scmp.lt.s32.totalorder %s17, 3
    %p289 = pnand %p287, %p288
    %p290 = pneg %p289
    // Predicated region
    $region9: #{cgmlp_forward.1} parent=5 // pred_check
      _
    $region10: #{cgmlp_forward.1} parent=5 // pred_check_branch
      %292 = sbr.rel (%p289) target = $region12
    $region11: #{cgmlp_forward.1} parent=5 // pred_region
      %s293 = ssub.s32 %s17, 1
      // Predicated region
      $region13: #{cgmlp_forward.1} parent=11 // pred_check
        %p294 = pneg %p64
      $region14: #{cgmlp_forward.1} parent=11 // pred_check_branch
        %296 = sbr.rel (%p294) target = $region16
      $region15: #{cgmlp_forward.1} parent=11 // pred_region
        _
      $region16: #{cgmlp_forward.1} parent=11 // pred_fallthru
        _
      // Predicated region
      $region17: #{cgmlp_forward.1} parent=11 // pred_check
        %p297 = pneg %p85
      $region18: #{cgmlp_forward.1} parent=11 // pred_check_branch
        %299 = sbr.rel (%p297) target = $region20
      $region19: #{cgmlp_forward.1} parent=11 // pred_region
        _
      $region20: #{cgmlp_forward.1} parent=11 // pred_fallthru
        _
      // Predicated region
      $region21: #{cgmlp_forward.1} parent=11 // pred_check
        %p300 = pneg %p106
      $region22: #{cgmlp_forward.1} parent=11 // pred_check_branch
        %302 = sbr.rel (%p300) target = $region24
      $region23: #{cgmlp_forward.1} parent=11 // pred_region
        _
      $region24: #{cgmlp_forward.1} parent=11 // pred_fallthru
        _
      // Predicated region
      $region25: #{cgmlp_forward.1} parent=11 // pred_check
        %p303 = pneg %p127
      $region26: #{cgmlp_forward.1} parent=11 // pred_check_branch
        %305 = sbr.rel (%p303) target = $region28
      $region27: #{cgmlp_forward.1} parent=11 // pred_region
        _
      $region28: #{cgmlp_forward.1} parent=11 // pred_fallthru
        _
      // Predicated region
      $region29: #{cgmlp_forward.1} parent=11 // pred_check
        %p306 = pneg %p148
      $region30: #{cgmlp_forward.1} parent=11 // pred_check_branch
        %308 = sbr.rel (%p306) target = $region32
      $region31: #{cgmlp_forward.1} parent=11 // pred_region
        _
      $region32: #{cgmlp_forward.1} parent=11 // pred_fallthru
        _
      // Predicated region
      $region33: #{cgmlp_forward.1} parent=11 // pred_check
        %p309 = pneg %p169
      $region34: #{cgmlp_forward.1} parent=11 // pred_check_branch
        %311 = sbr.rel (%p309) target = $region36
      $region35: #{cgmlp_forward.1} parent=11 // pred_region
        _
      $region36: #{cgmlp_forward.1} parent=11 // pred_fallthru
        _
      // Predicated region
      $region37: #{cgmlp_forward.1} parent=11 // pred_check
        %p312 = pneg %p190
      $region38: #{cgmlp_forward.1} parent=11 // pred_check_branch
        %314 = sbr.rel (%p312) target = $region40
      $region39: #{cgmlp_forward.1} parent=11 // pred_region
        _
      $region40: #{cgmlp_forward.1} parent=11 // pred_fallthru
        _
      // Predicated region
      $region41: #{cgmlp_forward.1} parent=11 // pred_check
        %p315 = pneg %p211
      $region42: #{cgmlp_forward.1} parent=11 // pred_check_branch
        %317 = sbr.rel (%p315) target = $region44
      $region43: #{cgmlp_forward.1} parent=11 // pred_region
        _
      $region44: #{cgmlp_forward.1} parent=11 // pred_fallthru
        _
      // Predicated region
      $region45: #{cgmlp_forward.1} parent=11 // pred_check
        %p318 = pneg %p232
      $region46: #{cgmlp_forward.1} parent=11 // pred_check_branch
        %320 = sbr.rel (%p318) target = $region48
      $region47: #{cgmlp_forward.1} parent=11 // pred_region
        _
      $region48: #{cgmlp_forward.1} parent=11 // pred_fallthru
        _
      // Predicated region
      $region49: #{cgmlp_forward.1} parent=11 // pred_check
        %p321 = pneg %p253
      $region50: #{cgmlp_forward.1} parent=11 // pred_check_branch
        %323 = sbr.rel (%p321) target = $region52
      $region51: #{cgmlp_forward.1} parent=11 // pred_region
        _
      $region52: #{cgmlp_forward.1} parent=11 // pred_fallthru
        _
    $region12: #{cgmlp_forward.1} parent=5 // pred_fallthru
      _
    %p324 = scmp.lt.s32.totalorder %s17, 2
    // Predicated region
    $region53: #{cgmlp_forward.1} parent=5 // pred_check
      %p325 = pneg %p324
    $region54: #{cgmlp_forward.1} parent=5 // pred_check_branch
      %327 = sbr.rel (%p325) target = $region56
    $region55: #{cgmlp_forward.1} parent=5 // pred_region
      // Predicated region
      $region57: #{cgmlp_forward.1} parent=55 // pred_check
        %p328 = pneg %p37
      $region58: #{cgmlp_forward.1} parent=55 // pred_check_branch
        %330 = sbr.rel (%p328) target = $region60
      $region59: #{cgmlp_forward.1} parent=55 // pred_region
        %s331 = smul.u32 8, %s17
        %p332 = scmp.lt.s32.totalorder %s331, 15
        %s333 = scalar_select %p332, %s331, 15
        %s334 = smul.addr %s333, 2
        %s335 = smul.addr %s334, 8
        %s336 = scalar_lea.vmem %s0, %s335
        %s337 = smul.u32 8, %s17
      $region60: #{cgmlp_forward.1} parent=55 // pred_fallthru
        _
    $region56: #{cgmlp_forward.1} parent=5 // pred_fallthru
      _
    %p338 = scmp.le.s32.totalorder 1, %s17
    %p339 = scmp.lt.s32.totalorder %s17, 3
    %p340 = pnand %p338, %p339
    %p341 = pneg %p340
    // Predicated region
    $region61: #{cgmlp_forward.1} parent=5 // pred_check
      _
    $region62: #{cgmlp_forward.1} parent=5 // pred_check_branch
      %343 = sbr.rel (%p340) target = $region64
    $region63: #{cgmlp_forward.1} parent=5 // pred_region
      %s344 = ssub.s32 %s17, 1
      %s345 = smul.u32 8, %s22
      %p346 = scmp.lt.s32.totalorder %s345, 15
      %s347 = scalar_select %p346, %s345, 15
      %s348 = smul.addr %s347, 2
      %s349 = smul.addr %s348, 8
      %s350 = scalar_lea.vmem %s0, %s349
      %p351 = pneg %p43
      %p352 = pneg %p40
      %p353 = pneg %p64
      %p354 = pneg %p61
      %p355 = pneg %p85
      %p356 = pneg %p82
      %p357 = pneg %p106
      %p358 = pneg %p103
      %p359 = pneg %p127
      %p360 = pneg %p124
      %p361 = pneg %p148
      %p362 = pneg %p145
      %p363 = pneg %p169
      %p364 = pneg %p166
      %p365 = pneg %p190
      %p366 = pneg %p187
      %p367 = pneg %p211
      %p368 = pneg %p208
      %p369 = pneg %p232
      %p370 = pneg %p229
      %p371 = pneg %p253
      %p372 = pneg %p250
      %p373 = pneg %p279
      %p374 = pneg %p276
      %s375 = smul.u32 8, %s22
      %p376 = scmp.lt.s32.totalorder %s375, 15
      %s377 = scalar_select %p376, %s375, 15
      %s378 = smul.addr %s377, 2
      %s379 = smul.addr %s378, 8
      %s380 = scalar_lea.vmem %s11, %s379
      %s381 = smul.u32 8, %s22
      %p382 = scmp.lt.s32.totalorder %s381, 15
      %s383 = scalar_select %p382, %s381, 15
      %s384 = smul.addr %s383, 2
      %s385 = smul.addr %s384, 8
      %s386 = scalar_lea.vmem %s0, %s385
      %s387 = smul.u32 8, %s22
      %s388 = smul.u32 8, %s22
      %p389 = scmp.lt.s32.totalorder %s388, 15
      %s390 = scalar_select %p389, %s388, 15
      %s391 = smul.addr %s390, 2
      %s392 = smul.addr %s391, 8
      %s393 = scalar_lea.vmem %s11, %s392
      %s394 = smul.u32 8, %s22
      %s396 = smul.u32 0, 16
      %s397 = scalar_lea.vmem %s386, %s396
      %v398 = vld [vmem:[%s397] sm:$0xff]
      %v399 = vld [vmem:[%s397 + $0x8] sm:$0xff]
      %v400 = vld [vmem:[%s397 + $0x10] sm:$0xff]
      %v401 = vld [vmem:[%s397 + $0x18] sm:$0xff]
      %v402 = vld [vmem:[%s397 + $0x20] sm:$0xff]
      %v403 = vld [vmem:[%s397 + $0x28] sm:$0xff]
      %v404 = vld [vmem:[%s397 + $0x30] sm:$0xff]
      %v405 = vld [vmem:[%s397 + $0x38] sm:$0xff]
      %v406 = vld [vmem:[%s397 + $0x40] sm:$0xff]
      %v407 = vld [vmem:[%s397 + $0x48] sm:$0xff]
      %v408 = vld [vmem:[%s397 + $0x50] sm:$0xff]
      %v409 = vld [vmem:[%s397 + $0x58] sm:$0xff]
      %v410 = vld [vmem:[%s397 + $0x60] sm:$0xff]
      %v411 = vld [vmem:[%s397 + $0x68] sm:$0xff]
      %v412 = vld [vmem:[%s397 + $0x70] sm:$0xff]
      %v413 = vld [vmem:[%s397 + $0x78] sm:$0xff]
      %v414 = vpack.c.bf16 %v399, %v398
      %v415 = vpack.c.bf16 %v401, %v400
      %v416 = vpack.c.bf16 %v403, %v402
      %v417 = vpack.c.bf16 %v405, %v404
      %v418 = vpack.c.bf16 %v407, %v406
      %v419 = vpack.c.bf16 %v409, %v408
      %v420 = vpack.c.bf16 %v411, %v410
      %v421 = vpack.c.bf16 %v413, %v412
      %v422 = vld [vmem:[%s1] sm:$0xf]
      %v423 = vld [vmem:[%s1 + $0x4] sm:$0xf]
      %v424 = vld [vmem:[%s1 + $0x8] sm:$0xf]
      %v425 = vld [vmem:[%s1 + $0xc] sm:$0xf]
      %v426 = vld [vmem:[%s3] sm:$0x1]
      %v428 = vperm.slane %v426, 0
      %v434 = vunpack.c.l.b16 %v422
      %v435 = vunpack.c.l.b16 %v423
      %v436 = vunpack.c.l.b16 %v424
      %v437 = vunpack.c.l.b16 %v425
      %v438 = vpack.c.b16 %v435, %v434
      %v439 = vpack.c.b16 %v437, %v436
      %vm442 = vcmask 261120
      %v444 = vsel %vm442, %v414, 0
      %v447 = vsel %vm442, %v415, 0
      %v450 = vsel %vm442, %v416, 0
      %v453 = vsel %vm442, %v417, 0
      %v456 = vsel %vm442, %v418, 0
      %v459 = vsel %vm442, %v419, 0
      %v462 = vsel %vm442, %v420, 0
      %v465 = vsel %vm442, %v421, 0
      %467 = vmatpush.bf16.msra.mxu0 0
      %468 = vmatpush.bf16.msra.mxu0 0
      %469 = vmatpush.bf16.msra.mxu0 0
      %470 = vmatpush.bf16.msra.mxu0 0
      %471 = vmatpush.bf16.msra.mxu0 0
      %472 = vmatpush.bf16.msra.mxu0 0
      %473 = vmatpush.bf16.msra.mxu0 %v439
      %474 = vmatpush.bf16.msra.mxu0 %v438
      %475 = vmatmul.bf16.gmra.mxu0 %v444
      %v476 = vpop.f32.mrf.mxu0
      %v477 = vadd.f32 %v428, %v476
      %v478 = vpop.f32.mrf.mxu0
      %v479 = vadd.f32 %v428, %v478
      %480 = vmatmul.bf16.gmra.mxu0 %v447
      %v481 = vpop.f32.mrf.mxu0
      %v482 = vadd.f32 %v428, %v481
      %v483 = vpop.f32.mrf.mxu0
      %v484 = vadd.f32 %v428, %v483
      %485 = vmatmul.bf16.gmra.mxu0 %v450
      %v486 = vpop.f32.mrf.mxu0
      %v487 = vadd.f32 %v428, %v486
      %v488 = vpop.f32.mrf.mxu0
      %v489 = vadd.f32 %v428, %v488
      %490 = vmatmul.bf16.gmra.mxu0 %v453
      %v491 = vpop.f32.mrf.mxu0
      %v492 = vadd.f32 %v428, %v491
      %v493 = vpop.f32.mrf.mxu0
      %v494 = vadd.f32 %v428, %v493
      %495 = vmatmul.bf16.gmra.mxu0 %v456
      %v496 = vpop.f32.mrf.mxu0
      %v497 = vadd.f32 %v428, %v496
      %v498 = vpop.f32.mrf.mxu0
      %v499 = vadd.f32 %v428, %v498
      %500 = vmatmul.bf16.gmra.mxu0 %v459
      %v501 = vpop.f32.mrf.mxu0
      %v502 = vadd.f32 %v428, %v501
      %v503 = vpop.f32.mrf.mxu0
      %v504 = vadd.f32 %v428, %v503
      %505 = vmatmul.bf16.gmra.mxu0 %v462
      %v506 = vpop.f32.mrf.mxu0
      %v507 = vadd.f32 %v428, %v506
      %v508 = vpop.f32.mrf.mxu0
      %v509 = vadd.f32 %v428, %v508
      %510 = vmatmul.bf16.gmra.mxu0 %v465
      %v511 = vpop.f32.mrf.mxu0
      %v512 = vadd.f32 %v428, %v511
      %v513 = vpop.f32.mrf.mxu0
      %v514 = vadd.f32 %v428, %v513
      %515 = vdwg.mxu0
      %v516 = vld [vmem:[%s2] sm:$0xf]
      %v517 = vld [vmem:[%s2 + $0x4] sm:$0xf]
      %v518 = vld [vmem:[%s2 + $0x8] sm:$0xf]
      %v519 = vld [vmem:[%s2 + $0xc] sm:$0xf]
      %v520 = vld [vmem:[%s4] sm:$0x1]
      %v522 = vperm.slane %v520, 0
      %v528 = vunpack.c.l.b16 %v516
      %v529 = vunpack.c.l.b16 %v517
      %v530 = vunpack.c.l.b16 %v518
      %v531 = vunpack.c.l.b16 %v519
      %v532 = vpack.c.b16 %v529, %v528
      %v533 = vpack.c.b16 %v531, %v530
      %536 = vmatpush.bf16.msra.mxu0 0
      %537 = vmatpush.bf16.msra.mxu0 0
      %538 = vmatpush.bf16.msra.mxu0 0
      %539 = vmatpush.bf16.msra.mxu0 0
      %540 = vmatpush.bf16.msra.mxu0 0
      %541 = vmatpush.bf16.msra.mxu0 0
      %542 = vmatpush.bf16.msra.mxu0 %v533
      %543 = vmatpush.bf16.msra.mxu0 %v532
      %544 = vmatmul.bf16.gmra.mxu0 %v444
      %v545 = vpop.f32.mrf.mxu0
      %v546 = vadd.f32 %v522, %v545
      %v547 = vpop.f32.mrf.mxu0
      %v548 = vadd.f32 %v522, %v547
      %549 = vmatmul.bf16.gmra.mxu0 %v447
      %v550 = vpop.f32.mrf.mxu0
      %v551 = vadd.f32 %v522, %v550
      %v552 = vpop.f32.mrf.mxu0
      %v553 = vadd.f32 %v522, %v552
      %554 = vmatmul.bf16.gmra.mxu0 %v450
      %v555 = vpop.f32.mrf.mxu0
      %v556 = vadd.f32 %v522, %v555
      %v557 = vpop.f32.mrf.mxu0
      %v558 = vadd.f32 %v522, %v557
      %559 = vmatmul.bf16.gmra.mxu0 %v453
      %v560 = vpop.f32.mrf.mxu0
      %v561 = vadd.f32 %v522, %v560
      %v562 = vpop.f32.mrf.mxu0
      %v563 = vadd.f32 %v522, %v562
      %564 = vmatmul.bf16.gmra.mxu0 %v456
      %v565 = vpop.f32.mrf.mxu0
      %v566 = vadd.f32 %v522, %v565
      %v567 = vpop.f32.mrf.mxu0
      %v568 = vadd.f32 %v522, %v567
      %569 = vmatmul.bf16.gmra.mxu0 %v459
      %v570 = vpop.f32.mrf.mxu0
      %v571 = vadd.f32 %v522, %v570
      %v572 = vpop.f32.mrf.mxu0
      %v573 = vadd.f32 %v522, %v572
      %574 = vmatmul.bf16.gmra.mxu0 %v462
      %v575 = vpop.f32.mrf.mxu0
      %v576 = vadd.f32 %v522, %v575
      %v577 = vpop.f32.mrf.mxu0
      %v578 = vadd.f32 %v522, %v577
      %579 = vmatmul.bf16.gmra.mxu0 %v465
      %v580 = vpop.f32.mrf.mxu0
      %v581 = vadd.f32 %v522, %v580
      %v582 = vpop.f32.mrf.mxu0
      %v583 = vadd.f32 %v522, %v582
      %584 = vdwg.mxu0
      %v585 = vmul.f32 %v477, 0.5
      %v586 = vmul.f32 %v479, 0.5
      %v587 = vmul.f32 %v482, 0.5
      %v588 = vmul.f32 %v484, 0.5
      %v589 = vmul.f32 %v487, 0.5
      %v590 = vmul.f32 %v489, 0.5
      %v591 = vmul.f32 %v492, 0.5
      %v592 = vmul.f32 %v494, 0.5
      %v593 = vmul.f32 %v497, 0.5
      %v594 = vmul.f32 %v499, 0.5
      %v595 = vmul.f32 %v502, 0.5
      %v596 = vmul.f32 %v504, 0.5
      %v597 = vmul.f32 %v507, 0.5
      %v598 = vmul.f32 %v509, 0.5
      %v599 = vmul.f32 %v512, 0.5
      %v600 = vmul.f32 %v514, 0.5
      %v601 = vmul.f32 %v477, %v477
      %v602 = vmul.f32 %v479, %v479
      %v603 = vmul.f32 %v482, %v482
      %v604 = vmul.f32 %v484, %v484
      %v605 = vmul.f32 %v487, %v487
      %v606 = vmul.f32 %v489, %v489
      %v607 = vmul.f32 %v492, %v492
      %v608 = vmul.f32 %v494, %v494
      %v609 = vmul.f32 %v497, %v497
      %v610 = vmul.f32 %v499, %v499
      %v611 = vmul.f32 %v502, %v502
      %v612 = vmul.f32 %v504, %v504
      %v613 = vmul.f32 %v507, %v507
      %v614 = vmul.f32 %v509, %v509
      %v615 = vmul.f32 %v512, %v512
      %v616 = vmul.f32 %v514, %v514
      %v617 = vmul.f32 %v601, %v477
      %v618 = vmul.f32 %v602, %v479
      %v619 = vmul.f32 %v603, %v482
      %v620 = vmul.f32 %v604, %v484
      %v621 = vmul.f32 %v605, %v487
      %v622 = vmul.f32 %v606, %v489
      %v623 = vmul.f32 %v607, %v492
      %v624 = vmul.f32 %v608, %v494
      %v625 = vmul.f32 %v609, %v497
      %v626 = vmul.f32 %v610, %v499
      %v627 = vmul.f32 %v611, %v502
      %v628 = vmul.f32 %v612, %v504
      %v629 = vmul.f32 %v613, %v507
      %v630 = vmul.f32 %v614, %v509
      %v631 = vmul.f32 %v615, %v512
      %v632 = vmul.f32 %v616, %v514
      %v633 = vmul.f32 %v617, 0.044715
      %v634 = vmul.f32 %v618, 0.044715
      %v635 = vmul.f32 %v619, 0.044715
      %v636 = vmul.f32 %v620, 0.044715
      %v637 = vmul.f32 %v621, 0.044715
      %v638 = vmul.f32 %v622, 0.044715
      %v639 = vmul.f32 %v623, 0.044715
      %v640 = vmul.f32 %v624, 0.044715
      %v641 = vmul.f32 %v625, 0.044715
      %v642 = vmul.f32 %v626, 0.044715
      %v643 = vmul.f32 %v627, 0.044715
      %v644 = vmul.f32 %v628, 0.044715
      %v645 = vmul.f32 %v629, 0.044715
      %v646 = vmul.f32 %v630, 0.044715
      %v647 = vmul.f32 %v631, 0.044715
      %v648 = vmul.f32 %v632, 0.044715
      %v649 = vadd.f32 %v477, %v633
      %v650 = vadd.f32 %v479, %v634
      %v651 = vadd.f32 %v482, %v635
      %v652 = vadd.f32 %v484, %v636
      %v653 = vadd.f32 %v487, %v637
      %v654 = vadd.f32 %v489, %v638
      %v655 = vadd.f32 %v492, %v639
      %v656 = vadd.f32 %v494, %v640
      %v657 = vadd.f32 %v497, %v641
      %v658 = vadd.f32 %v499, %v642
      %v659 = vadd.f32 %v502, %v643
      %v660 = vadd.f32 %v504, %v644
      %v661 = vadd.f32 %v507, %v645
      %v662 = vadd.f32 %v509, %v646
      %v663 = vadd.f32 %v512, %v647
      %v664 = vadd.f32 %v514, %v648
      %v665 = vmul.f32 %v649, 0.7978846
      %v666 = vmul.f32 %v650, 0.7978846
      %v667 = vmul.f32 %v651, 0.7978846
      %v668 = vmul.f32 %v652, 0.7978846
      %v669 = vmul.f32 %v653, 0.7978846
      %v670 = vmul.f32 %v654, 0.7978846
      %v671 = vmul.f32 %v655, 0.7978846
      %v672 = vmul.f32 %v656, 0.7978846
      %v673 = vmul.f32 %v657, 0.7978846
      %v674 = vmul.f32 %v658, 0.7978846
      %v675 = vmul.f32 %v659, 0.7978846
      %v676 = vmul.f32 %v660, 0.7978846
      %v677 = vmul.f32 %v661, 0.7978846
      %v678 = vmul.f32 %v662, 0.7978846
      %v679 = vmul.f32 %v663, 0.7978846
      %v680 = vmul.f32 %v664, 0.7978846
      %v681 = vtanh.pop %v665
      %v682 = vtanh.pop %v666
      %v683 = vtanh.pop %v667
      %v684 = vtanh.pop %v668
      %v685 = vtanh.pop %v669
      %v686 = vtanh.pop %v670
      %v687 = vtanh.pop %v671
      %v688 = vtanh.pop %v672
      %v689 = vtanh.pop %v673
      %v690 = vtanh.pop %v674
      %v691 = vtanh.pop %v675
      %v692 = vtanh.pop %v676
      %v693 = vtanh.pop %v677
      %v694 = vtanh.pop %v678
      %v695 = vtanh.pop %v679
      %v696 = vtanh.pop %v680
      %v697 = vadd.f32 %v681, 1.0
      %v698 = vadd.f32 %v682, 1.0
      %v699 = vadd.f32 %v683, 1.0
      %v700 = vadd.f32 %v684, 1.0
      %v701 = vadd.f32 %v685, 1.0
      %v702 = vadd.f32 %v686, 1.0
      %v703 = vadd.f32 %v687, 1.0
      %v704 = vadd.f32 %v688, 1.0
      %v705 = vadd.f32 %v689, 1.0
      %v706 = vadd.f32 %v690, 1.0
      %v707 = vadd.f32 %v691, 1.0
      %v708 = vadd.f32 %v692, 1.0
      %v709 = vadd.f32 %v693, 1.0
      %v710 = vadd.f32 %v694, 1.0
      %v711 = vadd.f32 %v695, 1.0
      %v712 = vadd.f32 %v696, 1.0
      %v713 = vmul.f32 %v585, %v697
      %v714 = vmul.f32 %v586, %v698
      %v715 = vmul.f32 %v587, %v699
      %v716 = vmul.f32 %v588, %v700
      %v717 = vmul.f32 %v589, %v701
      %v718 = vmul.f32 %v590, %v702
      %v719 = vmul.f32 %v591, %v703
      %v720 = vmul.f32 %v592, %v704
      %v721 = vmul.f32 %v593, %v705
      %v722 = vmul.f32 %v594, %v706
      %v723 = vmul.f32 %v595, %v707
      %v724 = vmul.f32 %v596, %v708
      %v725 = vmul.f32 %v597, %v709
      %v726 = vmul.f32 %v598, %v710
      %v727 = vmul.f32 %v599, %v711
      %v728 = vmul.f32 %v600, %v712
      %v729 = vmul.f32 %v546, 0.5
      %v730 = vmul.f32 %v548, 0.5
      %v731 = vmul.f32 %v551, 0.5
      %v732 = vmul.f32 %v553, 0.5
      %v733 = vmul.f32 %v556, 0.5
      %v734 = vmul.f32 %v558, 0.5
      %v735 = vmul.f32 %v561, 0.5
      %v736 = vmul.f32 %v563, 0.5
      %v737 = vmul.f32 %v566, 0.5
      %v738 = vmul.f32 %v568, 0.5
      %v739 = vmul.f32 %v571, 0.5
      %v740 = vmul.f32 %v573, 0.5
      %v741 = vmul.f32 %v576, 0.5
      %v742 = vmul.f32 %v578, 0.5
      %v743 = vmul.f32 %v581, 0.5
      %v744 = vmul.f32 %v583, 0.5
      %v745 = vmul.f32 %v546, %v546
      %v746 = vmul.f32 %v548, %v548
      %v747 = vmul.f32 %v551, %v551
      %v748 = vmul.f32 %v553, %v553
      %v749 = vmul.f32 %v556, %v556
      %v750 = vmul.f32 %v558, %v558
      %v751 = vmul.f32 %v561, %v561
      %v752 = vmul.f32 %v563, %v563
      %v753 = vmul.f32 %v566, %v566
      %v754 = vmul.f32 %v568, %v568
      %v755 = vmul.f32 %v571, %v571
      %v756 = vmul.f32 %v573, %v573
      %v757 = vmul.f32 %v576, %v576
      %v758 = vmul.f32 %v578, %v578
      %v759 = vmul.f32 %v581, %v581
      %v760 = vmul.f32 %v583, %v583
      %v761 = vmul.f32 %v745, %v546
      %v762 = vmul.f32 %v746, %v548
      %v763 = vmul.f32 %v747, %v551
      %v764 = vmul.f32 %v748, %v553
      %v765 = vmul.f32 %v749, %v556
      %v766 = vmul.f32 %v750, %v558
      %v767 = vmul.f32 %v751, %v561
      %v768 = vmul.f32 %v752, %v563
      %v769 = vmul.f32 %v753, %v566
      %v770 = vmul.f32 %v754, %v568
      %v771 = vmul.f32 %v755, %v571
      %v772 = vmul.f32 %v756, %v573
      %v773 = vmul.f32 %v757, %v576
      %v774 = vmul.f32 %v758, %v578
      %v775 = vmul.f32 %v759, %v581
      %v776 = vmul.f32 %v760, %v583
      %v777 = vmul.f32 %v761, 0.044715
      %v778 = vmul.f32 %v762, 0.044715
      %v779 = vmul.f32 %v763, 0.044715
      %v780 = vmul.f32 %v764, 0.044715
      %v781 = vmul.f32 %v765, 0.044715
      %v782 = vmul.f32 %v766, 0.044715
      %v783 = vmul.f32 %v767, 0.044715
      %v784 = vmul.f32 %v768, 0.044715
      %v785 = vmul.f32 %v769, 0.044715
      %v786 = vmul.f32 %v770, 0.044715
      %v787 = vmul.f32 %v771, 0.044715
      %v788 = vmul.f32 %v772, 0.044715
      %v789 = vmul.f32 %v773, 0.044715
      %v790 = vmul.f32 %v774, 0.044715
      %v791 = vmul.f32 %v775, 0.044715
      %v792 = vmul.f32 %v776, 0.044715
      %v793 = vadd.f32 %v546, %v777
      %v794 = vadd.f32 %v548, %v778
      %v795 = vadd.f32 %v551, %v779
      %v796 = vadd.f32 %v553, %v780
      %v797 = vadd.f32 %v556, %v781
      %v798 = vadd.f32 %v558, %v782
      %v799 = vadd.f32 %v561, %v783
      %v800 = vadd.f32 %v563, %v784
      %v801 = vadd.f32 %v566, %v785
      %v802 = vadd.f32 %v568, %v786
      %v803 = vadd.f32 %v571, %v787
      %v804 = vadd.f32 %v573, %v788
      %v805 = vadd.f32 %v576, %v789
      %v806 = vadd.f32 %v578, %v790
      %v807 = vadd.f32 %v581, %v791
      %v808 = vadd.f32 %v583, %v792
      %v809 = vmul.f32 %v793, 0.7978846
      %v810 = vmul.f32 %v794, 0.7978846
      %v811 = vmul.f32 %v795, 0.7978846
      %v812 = vmul.f32 %v796, 0.7978846
      %v813 = vmul.f32 %v797, 0.7978846
      %v814 = vmul.f32 %v798, 0.7978846
      %v815 = vmul.f32 %v799, 0.7978846
      %v816 = vmul.f32 %v800, 0.7978846
      %v817 = vmul.f32 %v801, 0.7978846
      %v818 = vmul.f32 %v802, 0.7978846
      %v819 = vmul.f32 %v803, 0.7978846
      %v820 = vmul.f32 %v804, 0.7978846
      %v821 = vmul.f32 %v805, 0.7978846
      %v822 = vmul.f32 %v806, 0.7978846
      %v823 = vmul.f32 %v807, 0.7978846
      %v824 = vmul.f32 %v808, 0.7978846
      %v825 = vtanh.pop %v809
      %v826 = vtanh.pop %v810
      %v827 = vtanh.pop %v811
      %v828 = vtanh.pop %v812
      %v829 = vtanh.pop %v813
      %v830 = vtanh.pop %v814
      %v831 = vtanh.pop %v815
      %v832 = vtanh.pop %v816
      %v833 = vtanh.pop %v817
      %v834 = vtanh.pop %v818
      %v835 = vtanh.pop %v819
      %v836 = vtanh.pop %v820
      %v837 = vtanh.pop %v821
      %v838 = vtanh.pop %v822
      %v839 = vtanh.pop %v823
      %v840 = vtanh.pop %v824
      %v841 = vadd.f32 %v825, 1.0
      %v842 = vadd.f32 %v826, 1.0
      %v843 = vadd.f32 %v827, 1.0
      %v844 = vadd.f32 %v828, 1.0
      %v845 = vadd.f32 %v829, 1.0
      %v846 = vadd.f32 %v830, 1.0
      %v847 = vadd.f32 %v831, 1.0
      %v848 = vadd.f32 %v832, 1.0
      %v849 = vadd.f32 %v833, 1.0
      %v850 = vadd.f32 %v834, 1.0
      %v851 = vadd.f32 %v835, 1.0
      %v852 = vadd.f32 %v836, 1.0
      %v853 = vadd.f32 %v837, 1.0
      %v854 = vadd.f32 %v838, 1.0
      %v855 = vadd.f32 %v839, 1.0
      %v856 = vadd.f32 %v840, 1.0
      %v857 = vmul.f32 %v729, %v841
      %v858 = vmul.f32 %v730, %v842
      %v859 = vmul.f32 %v731, %v843
      %v860 = vmul.f32 %v732, %v844
      %v861 = vmul.f32 %v733, %v845
      %v862 = vmul.f32 %v734, %v846
      %v863 = vmul.f32 %v735, %v847
      %v864 = vmul.f32 %v736, %v848
      %v865 = vmul.f32 %v737, %v849
      %v866 = vmul.f32 %v738, %v850
      %v867 = vmul.f32 %v739, %v851
      %v868 = vmul.f32 %v740, %v852
      %v869 = vmul.f32 %v741, %v853
      %v870 = vmul.f32 %v742, %v854
      %v871 = vmul.f32 %v743, %v855
      %v872 = vmul.f32 %v744, %v856
      %v873 = vsel %vm442, %v857, 0.0
      %874 = vadd.xlane.f32.xlu0 %v873
      %v875 = vpop.xlane.xlu0 %874
      %v876 = vsel %vm442, %v858, 0.0
      %877 = vadd.xlane.f32.xlu0 %v876
      %v878 = vpop.xlane.xlu0 %877
      %v879 = vsel %vm442, %v859, 0.0
      %880 = vadd.xlane.f32.xlu0 %v879
      %v881 = vpop.xlane.xlu0 %880
      %v882 = vsel %vm442, %v860, 0.0
      %883 = vadd.xlane.f32.xlu0 %v882
      %v884 = vpop.xlane.xlu0 %883
      %v885 = vsel %vm442, %v861, 0.0
      %886 = vadd.xlane.f32.xlu0 %v885
      %v887 = vpop.xlane.xlu0 %886
      %v888 = vsel %vm442, %v862, 0.0
      %889 = vadd.xlane.f32.xlu0 %v888
      %v890 = vpop.xlane.xlu0 %889
      %v891 = vsel %vm442, %v863, 0.0
      %892 = vadd.xlane.f32.xlu0 %v891
      %v893 = vpop.xlane.xlu0 %892
      %v894 = vsel %vm442, %v864, 0.0
      %895 = vadd.xlane.f32.xlu0 %v894
      %v896 = vpop.xlane.xlu0 %895
      %v897 = vsel %vm442, %v865, 0.0
      %898 = vadd.xlane.f32.xlu0 %v897
      %v899 = vpop.xlane.xlu0 %898
      %v900 = vsel %vm442, %v866, 0.0
      %901 = vadd.xlane.f32.xlu0 %v900
      %v902 = vpop.xlane.xlu0 %901
      %v903 = vsel %vm442, %v867, 0.0
      %904 = vadd.xlane.f32.xlu0 %v903
      %v905 = vpop.xlane.xlu0 %904
      %v906 = vsel %vm442, %v868, 0.0
      %907 = vadd.xlane.f32.xlu0 %v906
      %v908 = vpop.xlane.xlu0 %907
      %v909 = vsel %vm442, %v869, 0.0
      %910 = vadd.xlane.f32.xlu0 %v909
      %v911 = vpop.xlane.xlu0 %910
      %v912 = vsel %vm442, %v870, 0.0
      %913 = vadd.xlane.f32.xlu0 %v912
      %v914 = vpop.xlane.xlu0 %913
      %v915 = vsel %vm442, %v871, 0.0
      %916 = vadd.xlane.f32.xlu0 %v915
      %v917 = vpop.xlane.xlu0 %916
      %v918 = vsel %vm442, %v872, 0.0
      %919 = vadd.xlane.f32.xlu0 %v918
      %v920 = vpop.xlane.xlu0 %919
      %v921 = vrcp.pop 32.0
      %v922 = vmul.f32 32.0, %v921
      %v923 = vsub.f32 1.0, %v922
      %v924 = vmul.f32 %v921, %v923
      %v925 = vadd.f32 %v921, %v924
      %vm926 = vweird.f32 %v921
      %v927 = vsel %vm926, %v921, %v925
      %v928 = vmul.f32 %v875, %v927
      %v929 = vmul.f32 %v878, %v927
      %v930 = vmul.f32 %v881, %v927
      %v931 = vmul.f32 %v884, %v927
      %v932 = vmul.f32 %v887, %v927
      %v933 = vmul.f32 %v890, %v927
      %v934 = vmul.f32 %v893, %v927
      %v935 = vmul.f32 %v896, %v927
      %v936 = vmul.f32 %v899, %v927
      %v937 = vmul.f32 %v902, %v927
      %v938 = vmul.f32 %v905, %v927
      %v939 = vmul.f32 %v908, %v927
      %v940 = vmul.f32 %v911, %v927
      %v941 = vmul.f32 %v914, %v927
      %v942 = vmul.f32 %v917, %v927
      %v943 = vmul.f32 %v920, %v927
      %v944 = vsub.f32 %v857, %v928
      %v945 = vsub.f32 %v858, %v929
      %v946 = vsub.f32 %v859, %v930
      %v947 = vsub.f32 %v860, %v931
      %v948 = vsub.f32 %v861, %v932
      %v949 = vsub.f32 %v862, %v933
      %v950 = vsub.f32 %v863, %v934
      %v951 = vsub.f32 %v864, %v935
      %v952 = vsub.f32 %v865, %v936
      %v953 = vsub.f32 %v866, %v937
      %v954 = vsub.f32 %v867, %v938
      %v955 = vsub.f32 %v868, %v939
      %v956 = vsub.f32 %v869, %v940
      %v957 = vsub.f32 %v870, %v941
      %v958 = vsub.f32 %v871, %v942
      %v959 = vsub.f32 %v872, %v943
      %v960 = vmul.f32 %v944, %v944
      %v961 = vmul.f32 %v945, %v945
      %v962 = vmul.f32 %v946, %v946
      %v963 = vmul.f32 %v947, %v947
      %v964 = vmul.f32 %v948, %v948
      %v965 = vmul.f32 %v949, %v949
      %v966 = vmul.f32 %v950, %v950
      %v967 = vmul.f32 %v951, %v951
      %v968 = vmul.f32 %v952, %v952
      %v969 = vmul.f32 %v953, %v953
      %v970 = vmul.f32 %v954, %v954
      %v971 = vmul.f32 %v955, %v955
      %v972 = vmul.f32 %v956, %v956
      %v973 = vmul.f32 %v957, %v957
      %v974 = vmul.f32 %v958, %v958
      %v975 = vmul.f32 %v959, %v959
      %v976 = vsel %vm442, %v960, 0.0
      %977 = vadd.xlane.f32.xlu0 %v976
      %v978 = vpop.xlane.xlu0 %977
      %v979 = vsel %vm442, %v961, 0.0
      %980 = vadd.xlane.f32.xlu0 %v979
      %v981 = vpop.xlane.xlu0 %980
      %v982 = vsel %vm442, %v962, 0.0
      %983 = vadd.xlane.f32.xlu0 %v982
      %v984 = vpop.xlane.xlu0 %983
      %v985 = vsel %vm442, %v963, 0.0
      %986 = vadd.xlane.f32.xlu0 %v985
      %v987 = vpop.xlane.xlu0 %986
      %v988 = vsel %vm442, %v964, 0.0
      %989 = vadd.xlane.f32.xlu0 %v988
      %v990 = vpop.xlane.xlu0 %989
      %v991 = vsel %vm442, %v965, 0.0
      %992 = vadd.xlane.f32.xlu0 %v991
      %v993 = vpop.xlane.xlu0 %992
      %v994 = vsel %vm442, %v966, 0.0
      %995 = vadd.xlane.f32.xlu0 %v994
      %v996 = vpop.xlane.xlu0 %995
      %v997 = vsel %vm442, %v967, 0.0
      %998 = vadd.xlane.f32.xlu0 %v997
      %v999 = vpop.xlane.xlu0 %998
      %v1000 = vsel %vm442, %v968, 0.0
      %1001 = vadd.xlane.f32.xlu0 %v1000
      %v1002 = vpop.xlane.xlu0 %1001
      %v1003 = vsel %vm442, %v969, 0.0
      %1004 = vadd.xlane.f32.xlu0 %v1003
      %v1005 = vpop.xlane.xlu0 %1004
      %v1006 = vsel %vm442, %v970, 0.0
      %1007 = vadd.xlane.f32.xlu0 %v1006
      %v1008 = vpop.xlane.xlu0 %1007
      %v1009 = vsel %vm442, %v971, 0.0
      %1010 = vadd.xlane.f32.xlu0 %v1009
      %v1011 = vpop.xlane.xlu0 %1010
      %v1012 = vsel %vm442, %v972, 0.0
      %1013 = vadd.xlane.f32.xlu0 %v1012
      %v1014 = vpop.xlane.xlu0 %1013
      %v1015 = vsel %vm442, %v973, 0.0
      %1016 = vadd.xlane.f32.xlu0 %v1015
      %v1017 = vpop.xlane.xlu0 %1016
      %v1018 = vsel %vm442, %v974, 0.0
      %1019 = vadd.xlane.f32.xlu0 %v1018
      %v1020 = vpop.xlane.xlu0 %1019
      %v1021 = vsel %vm442, %v975, 0.0
      %1022 = vadd.xlane.f32.xlu0 %v1021
      %v1023 = vpop.xlane.xlu0 %1022
      %v1024 = vmul.f32 %v978, %v927
      %v1025 = vmul.f32 %v981, %v927
      %v1026 = vmul.f32 %v984, %v927
      %v1027 = vmul.f32 %v987, %v927
      %v1028 = vmul.f32 %v990, %v927
      %v1029 = vmul.f32 %v993, %v927
      %v1030 = vmul.f32 %v996, %v927
      %v1031 = vmul.f32 %v999, %v927
      %v1032 = vmul.f32 %v1002, %v927
      %v1033 = vmul.f32 %v1005, %v927
      %v1034 = vmul.f32 %v1008, %v927
      %v1035 = vmul.f32 %v1011, %v927
      %v1036 = vmul.f32 %v1014, %v927
      %v1037 = vmul.f32 %v1017, %v927
      %v1038 = vmul.f32 %v1020, %v927
      %v1039 = vmul.f32 %v1023, %v927
      %v1040 = vadd.f32 %v1024, 1e-05
      %v1041 = vadd.f32 %v1025, 1e-05
      %v1042 = vadd.f32 %v1026, 1e-05
      %v1043 = vadd.f32 %v1027, 1e-05
      %v1044 = vadd.f32 %v1028, 1e-05
      %v1045 = vadd.f32 %v1029, 1e-05
      %v1046 = vadd.f32 %v1030, 1e-05
      %v1047 = vadd.f32 %v1031, 1e-05
      %v1048 = vadd.f32 %v1032, 1e-05
      %v1049 = vadd.f32 %v1033, 1e-05
      %v1050 = vadd.f32 %v1034, 1e-05
      %v1051 = vadd.f32 %v1035, 1e-05
      %v1052 = vadd.f32 %v1036, 1e-05
      %v1053 = vadd.f32 %v1037, 1e-05
      %v1054 = vadd.f32 %v1038, 1e-05
      %v1055 = vadd.f32 %v1039, 1e-05
      %v1056 = vrsqrt.pop %v1040
      %v1057 = vmul.f32 %v1056, %v1040
      %v1058 = vmul.f32 %v1057, %v1056
      %v1059 = vmul.f32 0.5, %v1058
      %v1060 = vsub.f32 1.5, %v1059
      %v1061 = vmul.f32 %v1056, %v1060
      %vm1062 = vweird.f32 %v1040
      %vm1063 = vweird.f32 %v1056
      %vm1064 = vmor %vm1062, %vm1063
      %v1065 = vsel %vm1064, %v1056, %v1061
      %v1066 = vrsqrt.pop %v1041
      %v1067 = vmul.f32 %v1066, %v1041
      %v1068 = vmul.f32 %v1067, %v1066
      %v1069 = vmul.f32 0.5, %v1068
      %v1070 = vsub.f32 1.5, %v1069
      %v1071 = vmul.f32 %v1066, %v1070
      %vm1072 = vweird.f32 %v1041
      %vm1073 = vweird.f32 %v1066
      %vm1074 = vmor %vm1072, %vm1073
      %v1075 = vsel %vm1074, %v1066, %v1071
      %v1076 = vrsqrt.pop %v1042
      %v1077 = vmul.f32 %v1076, %v1042
      %v1078 = vmul.f32 %v1077, %v1076
      %v1079 = vmul.f32 0.5, %v1078
      %v1080 = vsub.f32 1.5, %v1079
      %v1081 = vmul.f32 %v1076, %v1080
      %vm1082 = vweird.f32 %v1042
      %vm1083 = vweird.f32 %v1076
      %vm1084 = vmor %vm1082, %vm1083
      %v1085 = vsel %vm1084, %v1076, %v1081
      %v1086 = vrsqrt.pop %v1043
      %v1087 = vmul.f32 %v1086, %v1043
      %v1088 = vmul.f32 %v1087, %v1086
      %v1089 = vmul.f32 0.5, %v1088
      %v1090 = vsub.f32 1.5, %v1089
      %v1091 = vmul.f32 %v1086, %v1090
      %vm1092 = vweird.f32 %v1043
      %vm1093 = vweird.f32 %v1086
      %vm1094 = vmor %vm1092, %vm1093
      %v1095 = vsel %vm1094, %v1086, %v1091
      %v1096 = vrsqrt.pop %v1044
      %v1097 = vmul.f32 %v1096, %v1044
      %v1098 = vmul.f32 %v1097, %v1096
      %v1099 = vmul.f32 0.5, %v1098
      %v1100 = vsub.f32 1.5, %v1099
      %v1101 = vmul.f32 %v1096, %v1100
      %vm1102 = vweird.f32 %v1044
      %vm1103 = vweird.f32 %v1096
      %vm1104 = vmor %vm1102, %vm1103
      %v1105 = vsel %vm1104, %v1096, %v1101
      %v1106 = vrsqrt.pop %v1045
      %v1107 = vmul.f32 %v1106, %v1045
      %v1108 = vmul.f32 %v1107, %v1106
      %v1109 = vmul.f32 0.5, %v1108
      %v1110 = vsub.f32 1.5, %v1109
      %v1111 = vmul.f32 %v1106, %v1110
      %vm1112 = vweird.f32 %v1045
      %vm1113 = vweird.f32 %v1106
      %vm1114 = vmor %vm1112, %vm1113
      %v1115 = vsel %vm1114, %v1106, %v1111
      %v1116 = vrsqrt.pop %v1046
      %v1117 = vmul.f32 %v1116, %v1046
      %v1118 = vmul.f32 %v1117, %v1116
      %v1119 = vmul.f32 0.5, %v1118
      %v1120 = vsub.f32 1.5, %v1119
      %v1121 = vmul.f32 %v1116, %v1120
      %vm1122 = vweird.f32 %v1046
      %vm1123 = vweird.f32 %v1116
      %vm1124 = vmor %vm1122, %vm1123
      %v1125 = vsel %vm1124, %v1116, %v1121
      %v1126 = vrsqrt.pop %v1047
      %v1127 = vmul.f32 %v1126, %v1047
      %v1128 = vmul.f32 %v1127, %v1126
      %v1129 = vmul.f32 0.5, %v1128
      %v1130 = vsub.f32 1.5, %v1129
      %v1131 = vmul.f32 %v1126, %v1130
      %vm1132 = vweird.f32 %v1047
      %vm1133 = vweird.f32 %v1126
      %vm1134 = vmor %vm1132, %vm1133
      %v1135 = vsel %vm1134, %v1126, %v1131
      %v1136 = vrsqrt.pop %v1048
      %v1137 = vmul.f32 %v1136, %v1048
      %v1138 = vmul.f32 %v1137, %v1136
      %v1139 = vmul.f32 0.5, %v1138
      %v1140 = vsub.f32 1.5, %v1139
      %v1141 = vmul.f32 %v1136, %v1140
      %vm1142 = vweird.f32 %v1048
      %vm1143 = vweird.f32 %v1136
      %vm1144 = vmor %vm1142, %vm1143
      %v1145 = vsel %vm1144, %v1136, %v1141
      %v1146 = vrsqrt.pop %v1049
      %v1147 = vmul.f32 %v1146, %v1049
      %v1148 = vmul.f32 %v1147, %v1146
      %v1149 = vmul.f32 0.5, %v1148
      %v1150 = vsub.f32 1.5, %v1149
      %v1151 = vmul.f32 %v1146, %v1150
      %vm1152 = vweird.f32 %v1049
      %vm1153 = vweird.f32 %v1146
      %vm1154 = vmor %vm1152, %vm1153
      %v1155 = vsel %vm1154, %v1146, %v1151
      %v1156 = vrsqrt.pop %v1050
      %v1157 = vmul.f32 %v1156, %v1050
      %v1158 = vmul.f32 %v1157, %v1156
      %v1159 = vmul.f32 0.5, %v1158
      %v1160 = vsub.f32 1.5, %v1159
      %v1161 = vmul.f32 %v1156, %v1160
      %vm1162 = vweird.f32 %v1050
      %vm1163 = vweird.f32 %v1156
      %vm1164 = vmor %vm1162, %vm1163
      %v1165 = vsel %vm1164, %v1156, %v1161
      %v1166 = vrsqrt.pop %v1051
      %v1167 = vmul.f32 %v1166, %v1051
      %v1168 = vmul.f32 %v1167, %v1166
      %v1169 = vmul.f32 0.5, %v1168
      %v1170 = vsub.f32 1.5, %v1169
      %v1171 = vmul.f32 %v1166, %v1170
      %vm1172 = vweird.f32 %v1051
      %vm1173 = vweird.f32 %v1166
      %vm1174 = vmor %vm1172, %vm1173
      %v1175 = vsel %vm1174, %v1166, %v1171
      %v1176 = vrsqrt.pop %v1052
      %v1177 = vmul.f32 %v1176, %v1052
      %v1178 = vmul.f32 %v1177, %v1176
      %v1179 = vmul.f32 0.5, %v1178
      %v1180 = vsub.f32 1.5, %v1179
      %v1181 = vmul.f32 %v1176, %v1180
      %vm1182 = vweird.f32 %v1052
      %vm1183 = vweird.f32 %v1176
      %vm1184 = vmor %vm1182, %vm1183
      %v1185 = vsel %vm1184, %v1176, %v1181
      %v1186 = vrsqrt.pop %v1053
      %v1187 = vmul.f32 %v1186, %v1053
      %v1188 = vmul.f32 %v1187, %v1186
      %v1189 = vmul.f32 0.5, %v1188
      %v1190 = vsub.f32 1.5, %v1189
      %v1191 = vmul.f32 %v1186, %v1190
      %vm1192 = vweird.f32 %v1053
      %vm1193 = vweird.f32 %v1186
      %vm1194 = vmor %vm1192, %vm1193
      %v1195 = vsel %vm1194, %v1186, %v1191
      %v1196 = vrsqrt.pop %v1054
      %v1197 = vmul.f32 %v1196, %v1054
      %v1198 = vmul.f32 %v1197, %v1196
      %v1199 = vmul.f32 0.5, %v1198
      %v1200 = vsub.f32 1.5, %v1199
      %v1201 = vmul.f32 %v1196, %v1200
      %vm1202 = vweird.f32 %v1054
      %vm1203 = vweird.f32 %v1196
      %vm1204 = vmor %vm1202, %vm1203
      %v1205 = vsel %vm1204, %v1196, %v1201
      %v1206 = vrsqrt.pop %v1055
      %v1207 = vmul.f32 %v1206, %v1055
      %v1208 = vmul.f32 %v1207, %v1206
      %v1209 = vmul.f32 0.5, %v1208
      %v1210 = vsub.f32 1.5, %v1209
      %v1211 = vmul.f32 %v1206, %v1210
      %vm1212 = vweird.f32 %v1055
      %vm1213 = vweird.f32 %v1206
      %vm1214 = vmor %vm1212, %vm1213
      %v1215 = vsel %vm1214, %v1206, %v1211
      %v1216 = vmul.f32 %v944, %v1065
      %v1217 = vmul.f32 %v945, %v1075
      %v1218 = vmul.f32 %v946, %v1085
      %v1219 = vmul.f32 %v947, %v1095
      %v1220 = vmul.f32 %v948, %v1105
      %v1221 = vmul.f32 %v949, %v1115
      %v1222 = vmul.f32 %v950, %v1125
      %v1223 = vmul.f32 %v951, %v1135
      %v1224 = vmul.f32 %v952, %v1145
      %v1225 = vmul.f32 %v953, %v1155
      %v1226 = vmul.f32 %v954, %v1165
      %v1227 = vmul.f32 %v955, %v1175
      %v1228 = vmul.f32 %v956, %v1185
      %v1229 = vmul.f32 %v957, %v1195
      %v1230 = vmul.f32 %v958, %v1205
      %v1231 = vmul.f32 %v959, %v1215
      %v1232 = vld [vmem:[%s5] sm:$0x1]
      %v1234 = vperm.slane %v1232, 0
      %v1236 = vmul.f32 %v1216, %v1234
      %v1237 = vmul.f32 %v1217, %v1234
      %v1238 = vmul.f32 %v1218, %v1234
      %v1239 = vmul.f32 %v1219, %v1234
      %v1240 = vmul.f32 %v1220, %v1234
      %v1241 = vmul.f32 %v1221, %v1234
      %v1242 = vmul.f32 %v1222, %v1234
      %v1243 = vmul.f32 %v1223, %v1234
      %v1244 = vmul.f32 %v1224, %v1234
      %v1245 = vmul.f32 %v1225, %v1234
      %v1246 = vmul.f32 %v1226, %v1234
      %v1247 = vmul.f32 %v1227, %v1234
      %v1248 = vmul.f32 %v1228, %v1234
      %v1249 = vmul.f32 %v1229, %v1234
      %v1250 = vmul.f32 %v1230, %v1234
      %v1251 = vmul.f32 %v1231, %v1234
      %v1252 = vld [vmem:[%s6] sm:$0x1]
      %v1254 = vperm.slane %v1252, 0
      %v1256 = vadd.f32 %v1236, %v1254
      %v1257 = vadd.f32 %v1237, %v1254
      %v1258 = vadd.f32 %v1238, %v1254
      %v1259 = vadd.f32 %v1239, %v1254
      %v1260 = vadd.f32 %v1240, %v1254
      %v1261 = vadd.f32 %v1241, %v1254
      %v1262 = vadd.f32 %v1242, %v1254
      %v1263 = vadd.f32 %v1243, %v1254
      %v1264 = vadd.f32 %v1244, %v1254
      %v1265 = vadd.f32 %v1245, %v1254
      %v1266 = vadd.f32 %v1246, %v1254
      %v1267 = vadd.f32 %v1247, %v1254
      %v1268 = vadd.f32 %v1248, %v1254
      %v1269 = vadd.f32 %v1249, %v1254
      %v1270 = vadd.f32 %v1250, %v1254
      %v1271 = vadd.f32 %v1251, %v1254
      %vm1288 = vcmask 1046528
      %v1289 = vrot.slane %v1256, 1
      %v1290 = vrot.slane %v1257, 1
      %v1291 = vsel %vm1288, %v1289, %v1290
      %v1292 = vrot.slane %v1258, 1
      %v1293 = vrot.slane %v1259, 1
      %v1294 = vsel %vm1288, %v1292, %v1293
      %v1295 = vrot.slane %v1260, 1
      %v1296 = vrot.slane %v1261, 1
      %v1297 = vsel %vm1288, %v1295, %v1296
      %v1298 = vrot.slane %v1262, 1
      %v1299 = vrot.slane %v1263, 1
      %v1300 = vsel %vm1288, %v1298, %v1299
      %v1301 = vrot.slane %v1264, 1
      %v1302 = vrot.slane %v1265, 1
      %v1303 = vsel %vm1288, %v1301, %v1302
      %v1304 = vrot.slane %v1266, 1
      %v1305 = vrot.slane %v1267, 1
      %v1306 = vsel %vm1288, %v1304, %v1305
      %v1307 = vrot.slane %v1268, 1
      %v1308 = vrot.slane %v1269, 1
      %v1309 = vsel %vm1288, %v1307, %v1308
      %v1310 = vrot.slane %v1270, 1
      %v1311 = vrot.slane %v1271, 1
      %v1312 = vsel %vm1288, %v1310, %v1311
      %v1337 = vsel %vm1288, 0.0, %v1289
      %v1338 = vsel %vm1288, 0.0, %v1292
      %v1339 = vsel %vm1288, 0.0, %v1295
      %v1340 = vsel %vm1288, 0.0, %v1298
      %v1341 = vsel %vm1288, 0.0, %v1301
      %v1342 = vsel %vm1288, 0.0, %v1304
      %v1343 = vsel %vm1288, 0.0, %v1307
      %v1344 = vsel %vm1288, 0.0, %v1310
      %v1345 = vsel %vm1288, %v1290, 0.0
      %v1346 = vsel %vm1288, %v1293, 0.0
      %v1347 = vsel %vm1288, %v1296, 0.0
      %v1348 = vsel %vm1288, %v1299, 0.0
      %v1349 = vsel %vm1288, %v1302, 0.0
      %v1350 = vsel %vm1288, %v1305, 0.0
      %v1351 = vsel %vm1288, %v1308, 0.0
      %v1352 = vsel %vm1288, %v1311, 0.0
      %v1353 = vld [vmem:[%s7] sm:$0xff]
      %v1354 = vld [vmem:[%s7 + $0x8] sm:$0xff]
      %v1355 = vld [vmem:[%s7 + $0x10] sm:$0xff]
      %v1356 = vld [vmem:[%s7 + $0x18] sm:$0x7f]
      %v1357 = vperm.slane %v1353, 0
      %v1358 = vmul.f32 %v1357, 0.0
      %v1359 = vmul.f32 %v1337, %v1357
      %v1360 = vmul.f32 %v1338, %v1357
      %v1361 = vmul.f32 %v1339, %v1357
      %v1362 = vmul.f32 %v1340, %v1357
      %v1363 = vmul.f32 %v1341, %v1357
      %v1364 = vmul.f32 %v1342, %v1357
      %v1365 = vmul.f32 %v1343, %v1357
      %v1366 = vmul.f32 %v1344, %v1357
      %v1367 = vadd.f32 %v1358, 0.0
      %v1368 = vadd.f32 %v1359, 0.0
      %v1369 = vadd.f32 %v1360, 0.0
      %v1370 = vadd.f32 %v1361, 0.0
      %v1371 = vadd.f32 %v1362, 0.0
      %v1372 = vadd.f32 %v1363, 0.0
      %v1373 = vadd.f32 %v1364, 0.0
      %v1374 = vadd.f32 %v1365, 0.0
      %v1375 = vadd.f32 %v1366, 0.0
      %v1376 = vperm.slane %v1353, 1
      %v1377 = vmul.f32 %v1376, 0.0
      %v1378 = vmul.f32 %v1337, %v1376
      %v1379 = vmul.f32 %v1291, %v1376
      %v1380 = vmul.f32 %v1338, %v1376
      %v1381 = vmul.f32 %v1294, %v1376
      %v1382 = vmul.f32 %v1339, %v1376
      %v1383 = vmul.f32 %v1297, %v1376
      %v1384 = vmul.f32 %v1340, %v1376
      %v1385 = vmul.f32 %v1300, %v1376
      %v1386 = vmul.f32 %v1341, %v1376
      %v1387 = vmul.f32 %v1303, %v1376
      %v1388 = vmul.f32 %v1342, %v1376
      %v1389 = vmul.f32 %v1306, %v1376
      %v1390 = vmul.f32 %v1343, %v1376
      %v1391 = vmul.f32 %v1309, %v1376
      %v1392 = vmul.f32 %v1344, %v1376
      %v1393 = vmul.f32 %v1312, %v1376
      %v1411 = vrot.slane %v1377, 1
      %v1412 = vrot.slane %v1378, 1
      %v1413 = vsel %vm1288, %v1411, %v1412
      %v1414 = vrot.slane %v1379, 1
      %v1415 = vsel %vm1288, %v1412, %v1414
      %v1416 = vrot.slane %v1380, 1
      %v1417 = vsel %vm1288, %v1411, %v1416
      %v1418 = vrot.slane %v1381, 1
      %v1419 = vsel %vm1288, %v1416, %v1418
      %v1420 = vrot.slane %v1382, 1
      %v1421 = vsel %vm1288, %v1411, %v1420
      %v1422 = vrot.slane %v1383, 1
      %v1423 = vsel %vm1288, %v1420, %v1422
      %v1424 = vrot.slane %v1384, 1
      %v1425 = vsel %vm1288, %v1411, %v1424
      %v1426 = vrot.slane %v1385, 1
      %v1427 = vsel %vm1288, %v1424, %v1426
      %v1428 = vrot.slane %v1386, 1
      %v1429 = vsel %vm1288, %v1411, %v1428
      %v1430 = vrot.slane %v1387, 1
      %v1431 = vsel %vm1288, %v1428, %v1430
      %v1432 = vrot.slane %v1388, 1
      %v1433 = vsel %vm1288, %v1411, %v1432
      %v1434 = vrot.slane %v1389, 1
      %v1435 = vsel %vm1288, %v1432, %v1434
      %v1436 = vrot.slane %v1390, 1
      %v1437 = vsel %vm1288, %v1411, %v1436
      %v1438 = vrot.slane %v1391, 1
      %v1439 = vsel %vm1288, %v1436, %v1438
      %v1440 = vrot.slane %v1392, 1
      %v1441 = vsel %vm1288, %v1411, %v1440
      %v1442 = vrot.slane %v1393, 1
      %v1443 = vsel %vm1288, %v1440, %v1442
      %v1460 = vadd.f32 %v1367, %v1413
      %v1461 = vadd.f32 %v1368, %v1415
      %v1462 = vadd.f32 %v1367, %v1417
      %v1463 = vadd.f32 %v1369, %v1419
      %v1464 = vadd.f32 %v1367, %v1421
      %v1465 = vadd.f32 %v1370, %v1423
      %v1466 = vadd.f32 %v1367, %v1425
      %v1467 = vadd.f32 %v1371, %v1427
      %v1468 = vadd.f32 %v1367, %v1429
      %v1469 = vadd.f32 %v1372, %v1431
      %v1470 = vadd.f32 %v1367, %v1433
      %v1471 = vadd.f32 %v1373, %v1435
      %v1472 = vadd.f32 %v1367, %v1437
      %v1473 = vadd.f32 %v1374, %v1439
      %v1474 = vadd.f32 %v1367, %v1441
      %v1475 = vadd.f32 %v1375, %v1443
      %v1476 = vperm.slane %v1353, 2
      %v1477 = vmul.f32 %v1476, 0.0
      %v1478 = vmul.f32 %v1337, %v1476
      %v1479 = vmul.f32 %v1291, %v1476
      %v1480 = vmul.f32 %v1338, %v1476
      %v1481 = vmul.f32 %v1294, %v1476
      %v1482 = vmul.f32 %v1339, %v1476
      %v1483 = vmul.f32 %v1297, %v1476
      %v1484 = vmul.f32 %v1340, %v1476
      %v1485 = vmul.f32 %v1300, %v1476
      %v1486 = vmul.f32 %v1341, %v1476
      %v1487 = vmul.f32 %v1303, %v1476
      %v1488 = vmul.f32 %v1342, %v1476
      %v1489 = vmul.f32 %v1306, %v1476
      %v1490 = vmul.f32 %v1343, %v1476
      %v1491 = vmul.f32 %v1309, %v1476
      %v1492 = vmul.f32 %v1344, %v1476
      %v1493 = vmul.f32 %v1312, %v1476
      %vm1511 = vcmask 1045504
      %v1512 = vrot.slane %v1477, 2
      %v1513 = vrot.slane %v1478, 2
      %v1514 = vsel %vm1511, %v1512, %v1513
      %v1515 = vrot.slane %v1479, 2
      %v1516 = vsel %vm1511, %v1513, %v1515
      %v1517 = vrot.slane %v1480, 2
      %v1518 = vsel %vm1511, %v1512, %v1517
      %v1519 = vrot.slane %v1481, 2
      %v1520 = vsel %vm1511, %v1517, %v1519
      %v1521 = vrot.slane %v1482, 2
      %v1522 = vsel %vm1511, %v1512, %v1521
      %v1523 = vrot.slane %v1483, 2
      %v1524 = vsel %vm1511, %v1521, %v1523
      %v1525 = vrot.slane %v1484, 2
      %v1526 = vsel %vm1511, %v1512, %v1525
      %v1527 = vrot.slane %v1485, 2
      %v1528 = vsel %vm1511, %v1525, %v1527
      %v1529 = vrot.slane %v1486, 2
      %v1530 = vsel %vm1511, %v1512, %v1529
      %v1531 = vrot.slane %v1487, 2
      %v1532 = vsel %vm1511, %v1529, %v1531
      %v1533 = vrot.slane %v1488, 2
      %v1534 = vsel %vm1511, %v1512, %v1533
      %v1535 = vrot.slane %v1489, 2
      %v1536 = vsel %vm1511, %v1533, %v1535
      %v1537 = vrot.slane %v1490, 2
      %v1538 = vsel %vm1511, %v1512, %v1537
      %v1539 = vrot.slane %v1491, 2
      %v1540 = vsel %vm1511, %v1537, %v1539
      %v1541 = vrot.slane %v1492, 2
      %v1542 = vsel %vm1511, %v1512, %v1541
      %v1543 = vrot.slane %v1493, 2
      %v1544 = vsel %vm1511, %v1541, %v1543
      %v1561 = vadd.f32 %v1460, %v1514
      %v1562 = vadd.f32 %v1461, %v1516
      %v1563 = vadd.f32 %v1462, %v1518
      %v1564 = vadd.f32 %v1463, %v1520
      %v1565 = vadd.f32 %v1464, %v1522
      %v1566 = vadd.f32 %v1465, %v1524
      %v1567 = vadd.f32 %v1466, %v1526
      %v1568 = vadd.f32 %v1467, %v1528
      %v1569 = vadd.f32 %v1468, %v1530
      %v1570 = vadd.f32 %v1469, %v1532
      %v1571 = vadd.f32 %v1470, %v1534
      %v1572 = vadd.f32 %v1471, %v1536
      %v1573 = vadd.f32 %v1472, %v1538
      %v1574 = vadd.f32 %v1473, %v1540
      %v1575 = vadd.f32 %v1474, %v1542
      %v1576 = vadd.f32 %v1475, %v1544
      %v1577 = vperm.slane %v1353, 3
      %v1578 = vmul.f32 %v1577, 0.0
      %v1579 = vmul.f32 %v1337, %v1577
      %v1580 = vmul.f32 %v1291, %v1577
      %v1581 = vmul.f32 %v1338, %v1577
      %v1582 = vmul.f32 %v1294, %v1577
      %v1583 = vmul.f32 %v1339, %v1577
      %v1584 = vmul.f32 %v1297, %v1577
      %v1585 = vmul.f32 %v1340, %v1577
      %v1586 = vmul.f32 %v1300, %v1577
      %v1587 = vmul.f32 %v1341, %v1577
      %v1588 = vmul.f32 %v1303, %v1577
      %v1589 = vmul.f32 %v1342, %v1577
      %v1590 = vmul.f32 %v1306, %v1577
      %v1591 = vmul.f32 %v1343, %v1577
      %v1592 = vmul.f32 %v1309, %v1577
      %v1593 = vmul.f32 %v1344, %v1577
      %v1594 = vmul.f32 %v1312, %v1577
      %vm1612 = vcmask 1044480
      %v1613 = vrot.slane %v1578, 3
      %v1614 = vrot.slane %v1579, 3
      %v1615 = vsel %vm1612, %v1613, %v1614
      %v1616 = vrot.slane %v1580, 3
      %v1617 = vsel %vm1612, %v1614, %v1616
      %v1618 = vrot.slane %v1581, 3
      %v1619 = vsel %vm1612, %v1613, %v1618
      %v1620 = vrot.slane %v1582, 3
      %v1621 = vsel %vm1612, %v1618, %v1620
      %v1622 = vrot.slane %v1583, 3
      %v1623 = vsel %vm1612, %v1613, %v1622
      %v1624 = vrot.slane %v1584, 3
      %v1625 = vsel %vm1612, %v1622, %v1624
      %v1626 = vrot.slane %v1585, 3
      %v1627 = vsel %vm1612, %v1613, %v1626
      %v1628 = vrot.slane %v1586, 3
      %v1629 = vsel %vm1612, %v1626, %v1628
      %v1630 = vrot.slane %v1587, 3
      %v1631 = vsel %vm1612, %v1613, %v1630
      %v1632 = vrot.slane %v1588, 3
      %v1633 = vsel %vm1612, %v1630, %v1632
      %v1634 = vrot.slane %v1589, 3
      %v1635 = vsel %vm1612, %v1613, %v1634
      %v1636 = vrot.slane %v1590, 3
      %v1637 = vsel %vm1612, %v1634, %v1636
      %v1638 = vrot.slane %v1591, 3
      %v1639 = vsel %vm1612, %v1613, %v1638
      %v1640 = vrot.slane %v1592, 3
      %v1641 = vsel %vm1612, %v1638, %v1640
      %v1642 = vrot.slane %v1593, 3
      %v1643 = vsel %vm1612, %v1613, %v1642
      %v1644 = vrot.slane %v1594, 3
      %v1645 = vsel %vm1612, %v1642, %v1644
      %v1662 = vadd.f32 %v1561, %v1615
      %v1663 = vadd.f32 %v1562, %v1617
      %v1664 = vadd.f32 %v1563, %v1619
      %v1665 = vadd.f32 %v1564, %v1621
      %v1666 = vadd.f32 %v1565, %v1623
      %v1667 = vadd.f32 %v1566, %v1625
      %v1668 = vadd.f32 %v1567, %v1627
      %v1669 = vadd.f32 %v1568, %v1629
      %v1670 = vadd.f32 %v1569, %v1631
      %v1671 = vadd.f32 %v1570, %v1633
      %v1672 = vadd.f32 %v1571, %v1635
      %v1673 = vadd.f32 %v1572, %v1637
      %v1674 = vadd.f32 %v1573, %v1639
      %v1675 = vadd.f32 %v1574, %v1641
      %v1676 = vadd.f32 %v1575, %v1643
      %v1677 = vadd.f32 %v1576, %v1645
      %v1678 = vperm.slane %v1353, 4
      %v1679 = vmul.f32 %v1678, 0.0
      %v1680 = vmul.f32 %v1337, %v1678
      %v1681 = vmul.f32 %v1291, %v1678
      %v1682 = vmul.f32 %v1338, %v1678
      %v1683 = vmul.f32 %v1294, %v1678
      %v1684 = vmul.f32 %v1339, %v1678
      %v1685 = vmul.f32 %v1297, %v1678
      %v1686 = vmul.f32 %v1340, %v1678
      %v1687 = vmul.f32 %v1300, %v1678
      %v1688 = vmul.f32 %v1341, %v1678
      %v1689 = vmul.f32 %v1303, %v1678
      %v1690 = vmul.f32 %v1342, %v1678
      %v1691 = vmul.f32 %v1306, %v1678
      %v1692 = vmul.f32 %v1343, %v1678
      %v1693 = vmul.f32 %v1309, %v1678
      %v1694 = vmul.f32 %v1344, %v1678
      %v1695 = vmul.f32 %v1312, %v1678
      %vm1713 = vcmask 1043456
      %v1714 = vrot.slane %v1679, 4
      %v1715 = vrot.slane %v1680, 4
      %v1716 = vsel %vm1713, %v1714, %v1715
      %v1717 = vrot.slane %v1681, 4
      %v1718 = vsel %vm1713, %v1715, %v1717
      %v1719 = vrot.slane %v1682, 4
      %v1720 = vsel %vm1713, %v1714, %v1719
      %v1721 = vrot.slane %v1683, 4
      %v1722 = vsel %vm1713, %v1719, %v1721
      %v1723 = vrot.slane %v1684, 4
      %v1724 = vsel %vm1713, %v1714, %v1723
      %v1725 = vrot.slane %v1685, 4
      %v1726 = vsel %vm1713, %v1723, %v1725
      %v1727 = vrot.slane %v1686, 4
      %v1728 = vsel %vm1713, %v1714, %v1727
      %v1729 = vrot.slane %v1687, 4
      %v1730 = vsel %vm1713, %v1727, %v1729
      %v1731 = vrot.slane %v1688, 4
      %v1732 = vsel %vm1713, %v1714, %v1731
      %v1733 = vrot.slane %v1689, 4
      %v1734 = vsel %vm1713, %v1731, %v1733
      %v1735 = vrot.slane %v1690, 4
      %v1736 = vsel %vm1713, %v1714, %v1735
      %v1737 = vrot.slane %v1691, 4
      %v1738 = vsel %vm1713, %v1735, %v1737
      %v1739 = vrot.slane %v1692, 4
      %v1740 = vsel %vm1713, %v1714, %v1739
      %v1741 = vrot.slane %v1693, 4
      %v1742 = vsel %vm1713, %v1739, %v1741
      %v1743 = vrot.slane %v1694, 4
      %v1744 = vsel %vm1713, %v1714, %v1743
      %v1745 = vrot.slane %v1695, 4
      %v1746 = vsel %vm1713, %v1743, %v1745
      %v1763 = vadd.f32 %v1662, %v1716
      %v1764 = vadd.f32 %v1663, %v1718
      %v1765 = vadd.f32 %v1664, %v1720
      %v1766 = vadd.f32 %v1665, %v1722
      %v1767 = vadd.f32 %v1666, %v1724
      %v1768 = vadd.f32 %v1667, %v1726
      %v1769 = vadd.f32 %v1668, %v1728
      %v1770 = vadd.f32 %v1669, %v1730
      %v1771 = vadd.f32 %v1670, %v1732
      %v1772 = vadd.f32 %v1671, %v1734
      %v1773 = vadd.f32 %v1672, %v1736
      %v1774 = vadd.f32 %v1673, %v1738
      %v1775 = vadd.f32 %v1674, %v1740
      %v1776 = vadd.f32 %v1675, %v1742
      %v1777 = vadd.f32 %v1676, %v1744
      %v1778 = vadd.f32 %v1677, %v1746
      %v1779 = vperm.slane %v1353, 5
      %v1780 = vmul.f32 %v1779, 0.0
      %v1781 = vmul.f32 %v1337, %v1779
      %v1782 = vmul.f32 %v1291, %v1779
      %v1783 = vmul.f32 %v1338, %v1779
      %v1784 = vmul.f32 %v1294, %v1779
      %v1785 = vmul.f32 %v1339, %v1779
      %v1786 = vmul.f32 %v1297, %v1779
      %v1787 = vmul.f32 %v1340, %v1779
      %v1788 = vmul.f32 %v1300, %v1779
      %v1789 = vmul.f32 %v1341, %v1779
      %v1790 = vmul.f32 %v1303, %v1779
      %v1791 = vmul.f32 %v1342, %v1779
      %v1792 = vmul.f32 %v1306, %v1779
      %v1793 = vmul.f32 %v1343, %v1779
      %v1794 = vmul.f32 %v1309, %v1779
      %v1795 = vmul.f32 %v1344, %v1779
      %v1796 = vmul.f32 %v1312, %v1779
      %vm1814 = vcmask 1042432
      %v1815 = vrot.slane %v1780, 5
      %v1816 = vrot.slane %v1781, 5
      %v1817 = vsel %vm1814, %v1815, %v1816
      %v1818 = vrot.slane %v1782, 5
      %v1819 = vsel %vm1814, %v1816, %v1818
      %v1820 = vrot.slane %v1783, 5
      %v1821 = vsel %vm1814, %v1815, %v1820
      %v1822 = vrot.slane %v1784, 5
      %v1823 = vsel %vm1814, %v1820, %v1822
      %v1824 = vrot.slane %v1785, 5
      %v1825 = vsel %vm1814, %v1815, %v1824
      %v1826 = vrot.slane %v1786, 5
      %v1827 = vsel %vm1814, %v1824, %v1826
      %v1828 = vrot.slane %v1787, 5
      %v1829 = vsel %vm1814, %v1815, %v1828
      %v1830 = vrot.slane %v1788, 5
      %v1831 = vsel %vm1814, %v1828, %v1830
      %v1832 = vrot.slane %v1789, 5
      %v1833 = vsel %vm1814, %v1815, %v1832
      %v1834 = vrot.slane %v1790, 5
      %v1835 = vsel %vm1814, %v1832, %v1834
      %v1836 = vrot.slane %v1791, 5
      %v1837 = vsel %vm1814, %v1815, %v1836
      %v1838 = vrot.slane %v1792, 5
      %v1839 = vsel %vm1814, %v1836, %v1838
      %v1840 = vrot.slane %v1793, 5
      %v1841 = vsel %vm1814, %v1815, %v1840
      %v1842 = vrot.slane %v1794, 5
      %v1843 = vsel %vm1814, %v1840, %v1842
      %v1844 = vrot.slane %v1795, 5
      %v1845 = vsel %vm1814, %v1815, %v1844
      %v1846 = vrot.slane %v1796, 5
      %v1847 = vsel %vm1814, %v1844, %v1846
      %v1864 = vadd.f32 %v1763, %v1817
      %v1865 = vadd.f32 %v1764, %v1819
      %v1866 = vadd.f32 %v1765, %v1821
      %v1867 = vadd.f32 %v1766, %v1823
      %v1868 = vadd.f32 %v1767, %v1825
      %v1869 = vadd.f32 %v1768, %v1827
      %v1870 = vadd.f32 %v1769, %v1829
      %v1871 = vadd.f32 %v1770, %v1831
      %v1872 = vadd.f32 %v1771, %v1833
      %v1873 = vadd.f32 %v1772, %v1835
      %v1874 = vadd.f32 %v1773, %v1837
      %v1875 = vadd.f32 %v1774, %v1839
      %v1876 = vadd.f32 %v1775, %v1841
      %v1877 = vadd.f32 %v1776, %v1843
      %v1878 = vadd.f32 %v1777, %v1845
      %v1879 = vadd.f32 %v1778, %v1847
      %v1880 = vperm.slane %v1353, 6
      %v1881 = vmul.f32 %v1880, 0.0
      %v1882 = vmul.f32 %v1337, %v1880
      %v1883 = vmul.f32 %v1291, %v1880
      %v1884 = vmul.f32 %v1338, %v1880
      %v1885 = vmul.f32 %v1294, %v1880
      %v1886 = vmul.f32 %v1339, %v1880
      %v1887 = vmul.f32 %v1297, %v1880
      %v1888 = vmul.f32 %v1340, %v1880
      %v1889 = vmul.f32 %v1300, %v1880
      %v1890 = vmul.f32 %v1341, %v1880
      %v1891 = vmul.f32 %v1303, %v1880
      %v1892 = vmul.f32 %v1342, %v1880
      %v1893 = vmul.f32 %v1306, %v1880
      %v1894 = vmul.f32 %v1343, %v1880
      %v1895 = vmul.f32 %v1309, %v1880
      %v1896 = vmul.f32 %v1344, %v1880
      %v1897 = vmul.f32 %v1312, %v1880
      %vm1915 = vcmask 1041408
      %v1916 = vrot.slane %v1881, 6
      %v1917 = vrot.slane %v1882, 6
      %v1918 = vsel %vm1915, %v1916, %v1917
      %v1919 = vrot.slane %v1883, 6
      %v1920 = vsel %vm1915, %v1917, %v1919
      %v1921 = vrot.slane %v1884, 6
      %v1922 = vsel %vm1915, %v1916, %v1921
      %v1923 = vrot.slane %v1885, 6
      %v1924 = vsel %vm1915, %v1921, %v1923
      %v1925 = vrot.slane %v1886, 6
      %v1926 = vsel %vm1915, %v1916, %v1925
      %v1927 = vrot.slane %v1887, 6
      %v1928 = vsel %vm1915, %v1925, %v1927
      %v1929 = vrot.slane %v1888, 6
      %v1930 = vsel %vm1915, %v1916, %v1929
      %v1931 = vrot.slane %v1889, 6
      %v1932 = vsel %vm1915, %v1929, %v1931
      %v1933 = vrot.slane %v1890, 6
      %v1934 = vsel %vm1915, %v1916, %v1933
      %v1935 = vrot.slane %v1891, 6
      %v1936 = vsel %vm1915, %v1933, %v1935
      %v1937 = vrot.slane %v1892, 6
      %v1938 = vsel %vm1915, %v1916, %v1937
      %v1939 = vrot.slane %v1893, 6
      %v1940 = vsel %vm1915, %v1937, %v1939
      %v1941 = vrot.slane %v1894, 6
      %v1942 = vsel %vm1915, %v1916, %v1941
      %v1943 = vrot.slane %v1895, 6
      %v1944 = vsel %vm1915, %v1941, %v1943
      %v1945 = vrot.slane %v1896, 6
      %v1946 = vsel %vm1915, %v1916, %v1945
      %v1947 = vrot.slane %v1897, 6
      %v1948 = vsel %vm1915, %v1945, %v1947
      %v1965 = vadd.f32 %v1864, %v1918
      %v1966 = vadd.f32 %v1865, %v1920
      %v1967 = vadd.f32 %v1866, %v1922
      %v1968 = vadd.f32 %v1867, %v1924
      %v1969 = vadd.f32 %v1868, %v1926
      %v1970 = vadd.f32 %v1869, %v1928
      %v1971 = vadd.f32 %v1870, %v1930
      %v1972 = vadd.f32 %v1871, %v1932
      %v1973 = vadd.f32 %v1872, %v1934
      %v1974 = vadd.f32 %v1873, %v1936
      %v1975 = vadd.f32 %v1874, %v1938
      %v1976 = vadd.f32 %v1875, %v1940
      %v1977 = vadd.f32 %v1876, %v1942
      %v1978 = vadd.f32 %v1877, %v1944
      %v1979 = vadd.f32 %v1878, %v1946
      %v1980 = vadd.f32 %v1879, %v1948
      %v1981 = vperm.slane %v1353, 7
      %v1982 = vmul.f32 %v1981, 0.0
      %v1983 = vmul.f32 %v1337, %v1981
      %v1984 = vmul.f32 %v1291, %v1981
      %v1985 = vmul.f32 %v1338, %v1981
      %v1986 = vmul.f32 %v1294, %v1981
      %v1987 = vmul.f32 %v1339, %v1981
      %v1988 = vmul.f32 %v1297, %v1981
      %v1989 = vmul.f32 %v1340, %v1981
      %v1990 = vmul.f32 %v1300, %v1981
      %v1991 = vmul.f32 %v1341, %v1981
      %v1992 = vmul.f32 %v1303, %v1981
      %v1993 = vmul.f32 %v1342, %v1981
      %v1994 = vmul.f32 %v1306, %v1981
      %v1995 = vmul.f32 %v1343, %v1981
      %v1996 = vmul.f32 %v1309, %v1981
      %v1997 = vmul.f32 %v1344, %v1981
      %v1998 = vmul.f32 %v1312, %v1981
      %vm2016 = vcmask 1040384
      %v2017 = vrot.slane %v1982, 7
      %v2018 = vrot.slane %v1983, 7
      %v2019 = vsel %vm2016, %v2017, %v2018
      %v2020 = vrot.slane %v1984, 7
      %v2021 = vsel %vm2016, %v2018, %v2020
      %v2022 = vrot.slane %v1985, 7
      %v2023 = vsel %vm2016, %v2017, %v2022
      %v2024 = vrot.slane %v1986, 7
      %v2025 = vsel %vm2016, %v2022, %v2024
      %v2026 = vrot.slane %v1987, 7
      %v2027 = vsel %vm2016, %v2017, %v2026
      %v2028 = vrot.slane %v1988, 7
      %v2029 = vsel %vm2016, %v2026, %v2028
      %v2030 = vrot.slane %v1989, 7
      %v2031 = vsel %vm2016, %v2017, %v2030
      %v2032 = vrot.slane %v1990, 7
      %v2033 = vsel %vm2016, %v2030, %v2032
      %v2034 = vrot.slane %v1991, 7
      %v2035 = vsel %vm2016, %v2017, %v2034
      %v2036 = vrot.slane %v1992, 7
      %v2037 = vsel %vm2016, %v2034, %v2036
      %v2038 = vrot.slane %v1993, 7
      %v2039 = vsel %vm2016, %v2017, %v2038
      %v2040 = vrot.slane %v1994, 7
      %v2041 = vsel %vm2016, %v2038, %v2040
      %v2042 = vrot.slane %v1995, 7
      %v2043 = vsel %vm2016, %v2017, %v2042
      %v2044 = vrot.slane %v1996, 7
      %v2045 = vsel %vm2016, %v2042, %v2044
      %v2046 = vrot.slane %v1997, 7
      %v2047 = vsel %vm2016, %v2017, %v2046
      %v2048 = vrot.slane %v1998, 7
      %v2049 = vsel %vm2016, %v2046, %v2048
      %v2066 = vadd.f32 %v1965, %v2019
      %v2067 = vadd.f32 %v1966, %v2021
      %v2068 = vadd.f32 %v1967, %v2023
      %v2069 = vadd.f32 %v1968, %v2025
      %v2070 = vadd.f32 %v1969, %v2027
      %v2071 = vadd.f32 %v1970, %v2029
      %v2072 = vadd.f32 %v1971, %v2031
      %v2073 = vadd.f32 %v1972, %v2033
      %v2074 = vadd.f32 %v1973, %v2035
      %v2075 = vadd.f32 %v1974, %v2037
      %v2076 = vadd.f32 %v1975, %v2039
      %v2077 = vadd.f32 %v1976, %v2041
      %v2078 = vadd.f32 %v1977, %v2043
      %v2079 = vadd.f32 %v1978, %v2045
      %v2080 = vadd.f32 %v1979, %v2047
      %v2081 = vadd.f32 %v1980, %v2049
      %v2082 = vperm.slane %v1354, 0
      %v2083 = vmul.f32 %v1337, %v2082
      %v2084 = vmul.f32 %v1291, %v2082
      %v2085 = vmul.f32 %v1338, %v2082
      %v2086 = vmul.f32 %v1294, %v2082
      %v2087 = vmul.f32 %v1339, %v2082
      %v2088 = vmul.f32 %v1297, %v2082
      %v2089 = vmul.f32 %v1340, %v2082
      %v2090 = vmul.f32 %v1300, %v2082
      %v2091 = vmul.f32 %v1341, %v2082
      %v2092 = vmul.f32 %v1303, %v2082
      %v2093 = vmul.f32 %v1342, %v2082
      %v2094 = vmul.f32 %v1306, %v2082
      %v2095 = vmul.f32 %v1343, %v2082
      %v2096 = vmul.f32 %v1309, %v2082
      %v2097 = vmul.f32 %v1344, %v2082
      %v2098 = vmul.f32 %v1312, %v2082
      %v2099 = vadd.f32 %v2066, %v2083
      %v2100 = vadd.f32 %v2067, %v2084
      %v2101 = vadd.f32 %v2068, %v2085
      %v2102 = vadd.f32 %v2069, %v2086
      %v2103 = vadd.f32 %v2070, %v2087
      %v2104 = vadd.f32 %v2071, %v2088
      %v2105 = vadd.f32 %v2072, %v2089
      %v2106 = vadd.f32 %v2073, %v2090
      %v2107 = vadd.f32 %v2074, %v2091
      %v2108 = vadd.f32 %v2075, %v2092
      %v2109 = vadd.f32 %v2076, %v2093
      %v2110 = vadd.f32 %v2077, %v2094
      %v2111 = vadd.f32 %v2078, %v2095
      %v2112 = vadd.f32 %v2079, %v2096
      %v2113 = vadd.f32 %v2080, %v2097
      %v2114 = vadd.f32 %v2081, %v2098
      %v2115 = vperm.slane %v1354, 1
      %v2116 = vmul.f32 %v1337, %v2115
      %v2117 = vmul.f32 %v1291, %v2115
      %v2118 = vmul.f32 %v1345, %v2115
      %v2119 = vmul.f32 %v1338, %v2115
      %v2120 = vmul.f32 %v1294, %v2115
      %v2121 = vmul.f32 %v1346, %v2115
      %v2122 = vmul.f32 %v1339, %v2115
      %v2123 = vmul.f32 %v1297, %v2115
      %v2124 = vmul.f32 %v1347, %v2115
      %v2125 = vmul.f32 %v1340, %v2115
      %v2126 = vmul.f32 %v1300, %v2115
      %v2127 = vmul.f32 %v1348, %v2115
      %v2128 = vmul.f32 %v1341, %v2115
      %v2129 = vmul.f32 %v1303, %v2115
      %v2130 = vmul.f32 %v1349, %v2115
      %v2131 = vmul.f32 %v1342, %v2115
      %v2132 = vmul.f32 %v1306, %v2115
      %v2133 = vmul.f32 %v1350, %v2115
      %v2134 = vmul.f32 %v1343, %v2115
      %v2135 = vmul.f32 %v1309, %v2115
      %v2136 = vmul.f32 %v1351, %v2115
      %v2137 = vmul.f32 %v1344, %v2115
      %v2138 = vmul.f32 %v1312, %v2115
      %v2139 = vmul.f32 %v1352, %v2115
      %v2164 = vrot.slane %v2116, 1
      %v2165 = vrot.slane %v2117, 1
      %v2166 = vsel %vm1288, %v2164, %v2165
      %v2167 = vrot.slane %v2118, 1
      %v2168 = vsel %vm1288, %v2165, %v2167
      %v2169 = vrot.slane %v2119, 1
      %v2170 = vrot.slane %v2120, 1
      %v2171 = vsel %vm1288, %v2169, %v2170
      %v2172 = vrot.slane %v2121, 1
      %v2173 = vsel %vm1288, %v2170, %v2172
      %v2174 = vrot.slane %v2122, 1
      %v2175 = vrot.slane %v2123, 1
      %v2176 = vsel %vm1288, %v2174, %v2175
      %v2177 = vrot.slane %v2124, 1
      %v2178 = vsel %vm1288, %v2175, %v2177
      %v2179 = vrot.slane %v2125, 1
      %v2180 = vrot.slane %v2126, 1
      %v2181 = vsel %vm1288, %v2179, %v2180
      %v2182 = vrot.slane %v2127, 1
      %v2183 = vsel %vm1288, %v2180, %v2182
      %v2184 = vrot.slane %v2128, 1
      %v2185 = vrot.slane %v2129, 1
      %v2186 = vsel %vm1288, %v2184, %v2185
      %v2187 = vrot.slane %v2130, 1
      %v2188 = vsel %vm1288, %v2185, %v2187
      %v2189 = vrot.slane %v2131, 1
      %v2190 = vrot.slane %v2132, 1
      %v2191 = vsel %vm1288, %v2189, %v2190
      %v2192 = vrot.slane %v2133, 1
      %v2193 = vsel %vm1288, %v2190, %v2192
      %v2194 = vrot.slane %v2134, 1
      %v2195 = vrot.slane %v2135, 1
      %v2196 = vsel %vm1288, %v2194, %v2195
      %v2197 = vrot.slane %v2136, 1
      %v2198 = vsel %vm1288, %v2195, %v2197
      %v2199 = vrot.slane %v2137, 1
      %v2200 = vrot.slane %v2138, 1
      %v2201 = vsel %vm1288, %v2199, %v2200
      %v2202 = vrot.slane %v2139, 1
      %v2203 = vsel %vm1288, %v2200, %v2202
      %v2220 = vadd.f32 %v2099, %v2166
      %v2221 = vadd.f32 %v2100, %v2168
      %v2222 = vadd.f32 %v2101, %v2171
      %v2223 = vadd.f32 %v2102, %v2173
      %v2224 = vadd.f32 %v2103, %v2176
      %v2225 = vadd.f32 %v2104, %v2178
      %v2226 = vadd.f32 %v2105, %v2181
      %v2227 = vadd.f32 %v2106, %v2183
      %v2228 = vadd.f32 %v2107, %v2186
      %v2229 = vadd.f32 %v2108, %v2188
      %v2230 = vadd.f32 %v2109, %v2191
      %v2231 = vadd.f32 %v2110, %v2193
      %v2232 = vadd.f32 %v2111, %v2196
      %v2233 = vadd.f32 %v2112, %v2198
      %v2234 = vadd.f32 %v2113, %v2201
      %v2235 = vadd.f32 %v2114, %v2203
      %v2236 = vperm.slane %v1354, 2
      %v2237 = vmul.f32 %v1337, %v2236
      %v2238 = vmul.f32 %v1291, %v2236
      %v2239 = vmul.f32 %v1345, %v2236
      %v2240 = vmul.f32 %v1338, %v2236
      %v2241 = vmul.f32 %v1294, %v2236
      %v2242 = vmul.f32 %v1346, %v2236
      %v2243 = vmul.f32 %v1339, %v2236
      %v2244 = vmul.f32 %v1297, %v2236
      %v2245 = vmul.f32 %v1347, %v2236
      %v2246 = vmul.f32 %v1340, %v2236
      %v2247 = vmul.f32 %v1300, %v2236
      %v2248 = vmul.f32 %v1348, %v2236
      %v2249 = vmul.f32 %v1341, %v2236
      %v2250 = vmul.f32 %v1303, %v2236
      %v2251 = vmul.f32 %v1349, %v2236
      %v2252 = vmul.f32 %v1342, %v2236
      %v2253 = vmul.f32 %v1306, %v2236
      %v2254 = vmul.f32 %v1350, %v2236
      %v2255 = vmul.f32 %v1343, %v2236
      %v2256 = vmul.f32 %v1309, %v2236
      %v2257 = vmul.f32 %v1351, %v2236
      %v2258 = vmul.f32 %v1344, %v2236
      %v2259 = vmul.f32 %v1312, %v2236
      %v2260 = vmul.f32 %v1352, %v2236
      %v2285 = vrot.slane %v2237, 2
      %v2286 = vrot.slane %v2238, 2
      %v2287 = vsel %vm1511, %v2285, %v2286
      %v2288 = vrot.slane %v2239, 2
      %v2289 = vsel %vm1511, %v2286, %v2288
      %v2290 = vrot.slane %v2240, 2
      %v2291 = vrot.slane %v2241, 2
      %v2292 = vsel %vm1511, %v2290, %v2291
      %v2293 = vrot.slane %v2242, 2
      %v2294 = vsel %vm1511, %v2291, %v2293
      %v2295 = vrot.slane %v2243, 2
      %v2296 = vrot.slane %v2244, 2
      %v2297 = vsel %vm1511, %v2295, %v2296
      %v2298 = vrot.slane %v2245, 2
      %v2299 = vsel %vm1511, %v2296, %v2298
      %v2300 = vrot.slane %v2246, 2
      %v2301 = vrot.slane %v2247, 2
      %v2302 = vsel %vm1511, %v2300, %v2301
      %v2303 = vrot.slane %v2248, 2
      %v2304 = vsel %vm1511, %v2301, %v2303
      %v2305 = vrot.slane %v2249, 2
      %v2306 = vrot.slane %v2250, 2
      %v2307 = vsel %vm1511, %v2305, %v2306
      %v2308 = vrot.slane %v2251, 2
      %v2309 = vsel %vm1511, %v2306, %v2308
      %v2310 = vrot.slane %v2252, 2
      %v2311 = vrot.slane %v2253, 2
      %v2312 = vsel %vm1511, %v2310, %v2311
      %v2313 = vrot.slane %v2254, 2
      %v2314 = vsel %vm1511, %v2311, %v2313
      %v2315 = vrot.slane %v2255, 2
      %v2316 = vrot.slane %v2256, 2
      %v2317 = vsel %vm1511, %v2315, %v2316
      %v2318 = vrot.slane %v2257, 2
      %v2319 = vsel %vm1511, %v2316, %v2318
      %v2320 = vrot.slane %v2258, 2
      %v2321 = vrot.slane %v2259, 2
      %v2322 = vsel %vm1511, %v2320, %v2321
      %v2323 = vrot.slane %v2260, 2
      %v2324 = vsel %vm1511, %v2321, %v2323
      %v2341 = vadd.f32 %v2220, %v2287
      %v2342 = vadd.f32 %v2221, %v2289
      %v2343 = vadd.f32 %v2222, %v2292
      %v2344 = vadd.f32 %v2223, %v2294
      %v2345 = vadd.f32 %v2224, %v2297
      %v2346 = vadd.f32 %v2225, %v2299
      %v2347 = vadd.f32 %v2226, %v2302
      %v2348 = vadd.f32 %v2227, %v2304
      %v2349 = vadd.f32 %v2228, %v2307
      %v2350 = vadd.f32 %v2229, %v2309
      %v2351 = vadd.f32 %v2230, %v2312
      %v2352 = vadd.f32 %v2231, %v2314
      %v2353 = vadd.f32 %v2232, %v2317
      %v2354 = vadd.f32 %v2233, %v2319
      %v2355 = vadd.f32 %v2234, %v2322
      %v2356 = vadd.f32 %v2235, %v2324
      %v2357 = vperm.slane %v1354, 3
      %v2358 = vmul.f32 %v1337, %v2357
      %v2359 = vmul.f32 %v1291, %v2357
      %v2360 = vmul.f32 %v1345, %v2357
      %v2361 = vmul.f32 %v1338, %v2357
      %v2362 = vmul.f32 %v1294, %v2357
      %v2363 = vmul.f32 %v1346, %v2357
      %v2364 = vmul.f32 %v1339, %v2357
      %v2365 = vmul.f32 %v1297, %v2357
      %v2366 = vmul.f32 %v1347, %v2357
      %v2367 = vmul.f32 %v1340, %v2357
      %v2368 = vmul.f32 %v1300, %v2357
      %v2369 = vmul.f32 %v1348, %v2357
      %v2370 = vmul.f32 %v1341, %v2357
      %v2371 = vmul.f32 %v1303, %v2357
      %v2372 = vmul.f32 %v1349, %v2357
      %v2373 = vmul.f32 %v1342, %v2357
      %v2374 = vmul.f32 %v1306, %v2357
      %v2375 = vmul.f32 %v1350, %v2357
      %v2376 = vmul.f32 %v1343, %v2357
      %v2377 = vmul.f32 %v1309, %v2357
      %v2378 = vmul.f32 %v1351, %v2357
      %v2379 = vmul.f32 %v1344, %v2357
      %v2380 = vmul.f32 %v1312, %v2357
      %v2381 = vmul.f32 %v1352, %v2357
      %v2406 = vrot.slane %v2358, 3
      %v2407 = vrot.slane %v2359, 3
      %v2408 = vsel %vm1612, %v2406, %v2407
      %v2409 = vrot.slane %v2360, 3
      %v2410 = vsel %vm1612, %v2407, %v2409
      %v2411 = vrot.slane %v2361, 3
      %v2412 = vrot.slane %v2362, 3
      %v2413 = vsel %vm1612, %v2411, %v2412
      %v2414 = vrot.slane %v2363, 3
      %v2415 = vsel %vm1612, %v2412, %v2414
      %v2416 = vrot.slane %v2364, 3
      %v2417 = vrot.slane %v2365, 3
      %v2418 = vsel %vm1612, %v2416, %v2417
      %v2419 = vrot.slane %v2366, 3
      %v2420 = vsel %vm1612, %v2417, %v2419
      %v2421 = vrot.slane %v2367, 3
      %v2422 = vrot.slane %v2368, 3
      %v2423 = vsel %vm1612, %v2421, %v2422
      %v2424 = vrot.slane %v2369, 3
      %v2425 = vsel %vm1612, %v2422, %v2424
      %v2426 = vrot.slane %v2370, 3
      %v2427 = vrot.slane %v2371, 3
      %v2428 = vsel %vm1612, %v2426, %v2427
      %v2429 = vrot.slane %v2372, 3
      %v2430 = vsel %vm1612, %v2427, %v2429
      %v2431 = vrot.slane %v2373, 3
      %v2432 = vrot.slane %v2374, 3
      %v2433 = vsel %vm1612, %v2431, %v2432
      %v2434 = vrot.slane %v2375, 3
      %v2435 = vsel %vm1612, %v2432, %v2434
      %v2436 = vrot.slane %v2376, 3
      %v2437 = vrot.slane %v2377, 3
      %v2438 = vsel %vm1612, %v2436, %v2437
      %v2439 = vrot.slane %v2378, 3
      %v2440 = vsel %vm1612, %v2437, %v2439
      %v2441 = vrot.slane %v2379, 3
      %v2442 = vrot.slane %v2380, 3
      %v2443 = vsel %vm1612, %v2441, %v2442
      %v2444 = vrot.slane %v2381, 3
      %v2445 = vsel %vm1612, %v2442, %v2444
      %v2462 = vadd.f32 %v2341, %v2408
      %v2463 = vadd.f32 %v2342, %v2410
      %v2464 = vadd.f32 %v2343, %v2413
      %v2465 = vadd.f32 %v2344, %v2415
      %v2466 = vadd.f32 %v2345, %v2418
      %v2467 = vadd.f32 %v2346, %v2420
      %v2468 = vadd.f32 %v2347, %v2423
      %v2469 = vadd.f32 %v2348, %v2425
      %v2470 = vadd.f32 %v2349, %v2428
      %v2471 = vadd.f32 %v2350, %v2430
      %v2472 = vadd.f32 %v2351, %v2433
      %v2473 = vadd.f32 %v2352, %v2435
      %v2474 = vadd.f32 %v2353, %v2438
      %v2475 = vadd.f32 %v2354, %v2440
      %v2476 = vadd.f32 %v2355, %v2443
      %v2477 = vadd.f32 %v2356, %v2445
      %v2478 = vperm.slane %v1354, 4
      %v2479 = vmul.f32 %v1337, %v2478
      %v2480 = vmul.f32 %v1291, %v2478
      %v2481 = vmul.f32 %v1345, %v2478
      %v2482 = vmul.f32 %v1338, %v2478
      %v2483 = vmul.f32 %v1294, %v2478
      %v2484 = vmul.f32 %v1346, %v2478
      %v2485 = vmul.f32 %v1339, %v2478
      %v2486 = vmul.f32 %v1297, %v2478
      %v2487 = vmul.f32 %v1347, %v2478
      %v2488 = vmul.f32 %v1340, %v2478
      %v2489 = vmul.f32 %v1300, %v2478
      %v2490 = vmul.f32 %v1348, %v2478
      %v2491 = vmul.f32 %v1341, %v2478
      %v2492 = vmul.f32 %v1303, %v2478
      %v2493 = vmul.f32 %v1349, %v2478
      %v2494 = vmul.f32 %v1342, %v2478
      %v2495 = vmul.f32 %v1306, %v2478
      %v2496 = vmul.f32 %v1350, %v2478
      %v2497 = vmul.f32 %v1343, %v2478
      %v2498 = vmul.f32 %v1309, %v2478
      %v2499 = vmul.f32 %v1351, %v2478
      %v2500 = vmul.f32 %v1344, %v2478
      %v2501 = vmul.f32 %v1312, %v2478
      %v2502 = vmul.f32 %v1352, %v2478
      %v2527 = vrot.slane %v2479, 4
      %v2528 = vrot.slane %v2480, 4
      %v2529 = vsel %vm1713, %v2527, %v2528
      %v2530 = vrot.slane %v2481, 4
      %v2531 = vsel %vm1713, %v2528, %v2530
      %v2532 = vrot.slane %v2482, 4
      %v2533 = vrot.slane %v2483, 4
      %v2534 = vsel %vm1713, %v2532, %v2533
      %v2535 = vrot.slane %v2484, 4
      %v2536 = vsel %vm1713, %v2533, %v2535
      %v2537 = vrot.slane %v2485, 4
      %v2538 = vrot.slane %v2486, 4
      %v2539 = vsel %vm1713, %v2537, %v2538
      %v2540 = vrot.slane %v2487, 4
      %v2541 = vsel %vm1713, %v2538, %v2540
      %v2542 = vrot.slane %v2488, 4
      %v2543 = vrot.slane %v2489, 4
      %v2544 = vsel %vm1713, %v2542, %v2543
      %v2545 = vrot.slane %v2490, 4
      %v2546 = vsel %vm1713, %v2543, %v2545
      %v2547 = vrot.slane %v2491, 4
      %v2548 = vrot.slane %v2492, 4
      %v2549 = vsel %vm1713, %v2547, %v2548
      %v2550 = vrot.slane %v2493, 4
      %v2551 = vsel %vm1713, %v2548, %v2550
      %v2552 = vrot.slane %v2494, 4
      %v2553 = vrot.slane %v2495, 4
      %v2554 = vsel %vm1713, %v2552, %v2553
      %v2555 = vrot.slane %v2496, 4
      %v2556 = vsel %vm1713, %v2553, %v2555
      %v2557 = vrot.slane %v2497, 4
      %v2558 = vrot.slane %v2498, 4
      %v2559 = vsel %vm1713, %v2557, %v2558
      %v2560 = vrot.slane %v2499, 4
      %v2561 = vsel %vm1713, %v2558, %v2560
      %v2562 = vrot.slane %v2500, 4
      %v2563 = vrot.slane %v2501, 4
      %v2564 = vsel %vm1713, %v2562, %v2563
      %v2565 = vrot.slane %v2502, 4
      %v2566 = vsel %vm1713, %v2563, %v2565
      %v2583 = vadd.f32 %v2462, %v2529
      %v2584 = vadd.f32 %v2463, %v2531
      %v2585 = vadd.f32 %v2464, %v2534
      %v2586 = vadd.f32 %v2465, %v2536
      %v2587 = vadd.f32 %v2466, %v2539
      %v2588 = vadd.f32 %v2467, %v2541
      %v2589 = vadd.f32 %v2468, %v2544
      %v2590 = vadd.f32 %v2469, %v2546
      %v2591 = vadd.f32 %v2470, %v2549
      %v2592 = vadd.f32 %v2471, %v2551
      %v2593 = vadd.f32 %v2472, %v2554
      %v2594 = vadd.f32 %v2473, %v2556
      %v2595 = vadd.f32 %v2474, %v2559
      %v2596 = vadd.f32 %v2475, %v2561
      %v2597 = vadd.f32 %v2476, %v2564
      %v2598 = vadd.f32 %v2477, %v2566
      %v2599 = vperm.slane %v1354, 5
      %v2600 = vmul.f32 %v1337, %v2599
      %v2601 = vmul.f32 %v1291, %v2599
      %v2602 = vmul.f32 %v1345, %v2599
      %v2603 = vmul.f32 %v1338, %v2599
      %v2604 = vmul.f32 %v1294, %v2599
      %v2605 = vmul.f32 %v1346, %v2599
      %v2606 = vmul.f32 %v1339, %v2599
      %v2607 = vmul.f32 %v1297, %v2599
      %v2608 = vmul.f32 %v1347, %v2599
      %v2609 = vmul.f32 %v1340, %v2599
      %v2610 = vmul.f32 %v1300, %v2599
      %v2611 = vmul.f32 %v1348, %v2599
      %v2612 = vmul.f32 %v1341, %v2599
      %v2613 = vmul.f32 %v1303, %v2599
      %v2614 = vmul.f32 %v1349, %v2599
      %v2615 = vmul.f32 %v1342, %v2599
      %v2616 = vmul.f32 %v1306, %v2599
      %v2617 = vmul.f32 %v1350, %v2599
      %v2618 = vmul.f32 %v1343, %v2599
      %v2619 = vmul.f32 %v1309, %v2599
      %v2620 = vmul.f32 %v1351, %v2599
      %v2621 = vmul.f32 %v1344, %v2599
      %v2622 = vmul.f32 %v1312, %v2599
      %v2623 = vmul.f32 %v1352, %v2599
      %v2648 = vrot.slane %v2600, 5
      %v2649 = vrot.slane %v2601, 5
      %v2650 = vsel %vm1814, %v2648, %v2649
      %v2651 = vrot.slane %v2602, 5
      %v2652 = vsel %vm1814, %v2649, %v2651
      %v2653 = vrot.slane %v2603, 5
      %v2654 = vrot.slane %v2604, 5
      %v2655 = vsel %vm1814, %v2653, %v2654
      %v2656 = vrot.slane %v2605, 5
      %v2657 = vsel %vm1814, %v2654, %v2656
      %v2658 = vrot.slane %v2606, 5
      %v2659 = vrot.slane %v2607, 5
      %v2660 = vsel %vm1814, %v2658, %v2659
      %v2661 = vrot.slane %v2608, 5
      %v2662 = vsel %vm1814, %v2659, %v2661
      %v2663 = vrot.slane %v2609, 5
      %v2664 = vrot.slane %v2610, 5
      %v2665 = vsel %vm1814, %v2663, %v2664
      %v2666 = vrot.slane %v2611, 5
      %v2667 = vsel %vm1814, %v2664, %v2666
      %v2668 = vrot.slane %v2612, 5
      %v2669 = vrot.slane %v2613, 5
      %v2670 = vsel %vm1814, %v2668, %v2669
      %v2671 = vrot.slane %v2614, 5
      %v2672 = vsel %vm1814, %v2669, %v2671
      %v2673 = vrot.slane %v2615, 5
      %v2674 = vrot.slane %v2616, 5
      %v2675 = vsel %vm1814, %v2673, %v2674
      %v2676 = vrot.slane %v2617, 5
      %v2677 = vsel %vm1814, %v2674, %v2676
      %v2678 = vrot.slane %v2618, 5
      %v2679 = vrot.slane %v2619, 5
      %v2680 = vsel %vm1814, %v2678, %v2679
      %v2681 = vrot.slane %v2620, 5
      %v2682 = vsel %vm1814, %v2679, %v2681
      %v2683 = vrot.slane %v2621, 5
      %v2684 = vrot.slane %v2622, 5
      %v2685 = vsel %vm1814, %v2683, %v2684
      %v2686 = vrot.slane %v2623, 5
      %v2687 = vsel %vm1814, %v2684, %v2686
      %v2704 = vadd.f32 %v2583, %v2650
      %v2705 = vadd.f32 %v2584, %v2652
      %v2706 = vadd.f32 %v2585, %v2655
      %v2707 = vadd.f32 %v2586, %v2657
      %v2708 = vadd.f32 %v2587, %v2660
      %v2709 = vadd.f32 %v2588, %v2662
      %v2710 = vadd.f32 %v2589, %v2665
      %v2711 = vadd.f32 %v2590, %v2667
      %v2712 = vadd.f32 %v2591, %v2670
      %v2713 = vadd.f32 %v2592, %v2672
      %v2714 = vadd.f32 %v2593, %v2675
      %v2715 = vadd.f32 %v2594, %v2677
      %v2716 = vadd.f32 %v2595, %v2680
      %v2717 = vadd.f32 %v2596, %v2682
      %v2718 = vadd.f32 %v2597, %v2685
      %v2719 = vadd.f32 %v2598, %v2687
      %v2720 = vperm.slane %v1354, 6
      %v2721 = vmul.f32 %v1337, %v2720
      %v2722 = vmul.f32 %v1291, %v2720
      %v2723 = vmul.f32 %v1345, %v2720
      %v2724 = vmul.f32 %v1338, %v2720
      %v2725 = vmul.f32 %v1294, %v2720
      %v2726 = vmul.f32 %v1346, %v2720
      %v2727 = vmul.f32 %v1339, %v2720
      %v2728 = vmul.f32 %v1297, %v2720
      %v2729 = vmul.f32 %v1347, %v2720
      %v2730 = vmul.f32 %v1340, %v2720
      %v2731 = vmul.f32 %v1300, %v2720
      %v2732 = vmul.f32 %v1348, %v2720
      %v2733 = vmul.f32 %v1341, %v2720
      %v2734 = vmul.f32 %v1303, %v2720
      %v2735 = vmul.f32 %v1349, %v2720
      %v2736 = vmul.f32 %v1342, %v2720
      %v2737 = vmul.f32 %v1306, %v2720
      %v2738 = vmul.f32 %v1350, %v2720
      %v2739 = vmul.f32 %v1343, %v2720
      %v2740 = vmul.f32 %v1309, %v2720
      %v2741 = vmul.f32 %v1351, %v2720
      %v2742 = vmul.f32 %v1344, %v2720
      %v2743 = vmul.f32 %v1312, %v2720
      %v2744 = vmul.f32 %v1352, %v2720
      %v2769 = vrot.slane %v2721, 6
      %v2770 = vrot.slane %v2722, 6
      %v2771 = vsel %vm1915, %v2769, %v2770
      %v2772 = vrot.slane %v2723, 6
      %v2773 = vsel %vm1915, %v2770, %v2772
      %v2774 = vrot.slane %v2724, 6
      %v2775 = vrot.slane %v2725, 6
      %v2776 = vsel %vm1915, %v2774, %v2775
      %v2777 = vrot.slane %v2726, 6
      %v2778 = vsel %vm1915, %v2775, %v2777
      %v2779 = vrot.slane %v2727, 6
      %v2780 = vrot.slane %v2728, 6
      %v2781 = vsel %vm1915, %v2779, %v2780
      %v2782 = vrot.slane %v2729, 6
      %v2783 = vsel %vm1915, %v2780, %v2782
      %v2784 = vrot.slane %v2730, 6
      %v2785 = vrot.slane %v2731, 6
      %v2786 = vsel %vm1915, %v2784, %v2785
      %v2787 = vrot.slane %v2732, 6
      %v2788 = vsel %vm1915, %v2785, %v2787
      %v2789 = vrot.slane %v2733, 6
      %v2790 = vrot.slane %v2734, 6
      %v2791 = vsel %vm1915, %v2789, %v2790
      %v2792 = vrot.slane %v2735, 6
      %v2793 = vsel %vm1915, %v2790, %v2792
      %v2794 = vrot.slane %v2736, 6
      %v2795 = vrot.slane %v2737, 6
      %v2796 = vsel %vm1915, %v2794, %v2795
      %v2797 = vrot.slane %v2738, 6
      %v2798 = vsel %vm1915, %v2795, %v2797
      %v2799 = vrot.slane %v2739, 6
      %v2800 = vrot.slane %v2740, 6
      %v2801 = vsel %vm1915, %v2799, %v2800
      %v2802 = vrot.slane %v2741, 6
      %v2803 = vsel %vm1915, %v2800, %v2802
      %v2804 = vrot.slane %v2742, 6
      %v2805 = vrot.slane %v2743, 6
      %v2806 = vsel %vm1915, %v2804, %v2805
      %v2807 = vrot.slane %v2744, 6
      %v2808 = vsel %vm1915, %v2805, %v2807
      %v2825 = vadd.f32 %v2704, %v2771
      %v2826 = vadd.f32 %v2705, %v2773
      %v2827 = vadd.f32 %v2706, %v2776
      %v2828 = vadd.f32 %v2707, %v2778
      %v2829 = vadd.f32 %v2708, %v2781
      %v2830 = vadd.f32 %v2709, %v2783
      %v2831 = vadd.f32 %v2710, %v2786
      %v2832 = vadd.f32 %v2711, %v2788
      %v2833 = vadd.f32 %v2712, %v2791
      %v2834 = vadd.f32 %v2713, %v2793
      %v2835 = vadd.f32 %v2714, %v2796
      %v2836 = vadd.f32 %v2715, %v2798
      %v2837 = vadd.f32 %v2716, %v2801
      %v2838 = vadd.f32 %v2717, %v2803
      %v2839 = vadd.f32 %v2718, %v2806
      %v2840 = vadd.f32 %v2719, %v2808
      %v2841 = vperm.slane %v1354, 7
      %v2842 = vmul.f32 %v1337, %v2841
      %v2843 = vmul.f32 %v1291, %v2841
      %v2844 = vmul.f32 %v1345, %v2841
      %v2845 = vmul.f32 %v1338, %v2841
      %v2846 = vmul.f32 %v1294, %v2841
      %v2847 = vmul.f32 %v1346, %v2841
      %v2848 = vmul.f32 %v1339, %v2841
      %v2849 = vmul.f32 %v1297, %v2841
      %v2850 = vmul.f32 %v1347, %v2841
      %v2851 = vmul.f32 %v1340, %v2841
      %v2852 = vmul.f32 %v1300, %v2841
      %v2853 = vmul.f32 %v1348, %v2841
      %v2854 = vmul.f32 %v1341, %v2841
      %v2855 = vmul.f32 %v1303, %v2841
      %v2856 = vmul.f32 %v1349, %v2841
      %v2857 = vmul.f32 %v1342, %v2841
      %v2858 = vmul.f32 %v1306, %v2841
      %v2859 = vmul.f32 %v1350, %v2841
      %v2860 = vmul.f32 %v1343, %v2841
      %v2861 = vmul.f32 %v1309, %v2841
      %v2862 = vmul.f32 %v1351, %v2841
      %v2863 = vmul.f32 %v1344, %v2841
      %v2864 = vmul.f32 %v1312, %v2841
      %v2865 = vmul.f32 %v1352, %v2841
      %v2890 = vrot.slane %v2842, 7
      %v2891 = vrot.slane %v2843, 7
      %v2892 = vsel %vm2016, %v2890, %v2891
      %v2893 = vrot.slane %v2844, 7
      %v2894 = vsel %vm2016, %v2891, %v2893
      %v2895 = vrot.slane %v2845, 7
      %v2896 = vrot.slane %v2846, 7
      %v2897 = vsel %vm2016, %v2895, %v2896
      %v2898 = vrot.slane %v2847, 7
      %v2899 = vsel %vm2016, %v2896, %v2898
      %v2900 = vrot.slane %v2848, 7
      %v2901 = vrot.slane %v2849, 7
      %v2902 = vsel %vm2016, %v2900, %v2901
      %v2903 = vrot.slane %v2850, 7
      %v2904 = vsel %vm2016, %v2901, %v2903
      %v2905 = vrot.slane %v2851, 7
      %v2906 = vrot.slane %v2852, 7
      %v2907 = vsel %vm2016, %v2905, %v2906
      %v2908 = vrot.slane %v2853, 7
      %v2909 = vsel %vm2016, %v2906, %v2908
      %v2910 = vrot.slane %v2854, 7
      %v2911 = vrot.slane %v2855, 7
      %v2912 = vsel %vm2016, %v2910, %v2911
      %v2913 = vrot.slane %v2856, 7
      %v2914 = vsel %vm2016, %v2911, %v2913
      %v2915 = vrot.slane %v2857, 7
      %v2916 = vrot.slane %v2858, 7
      %v2917 = vsel %vm2016, %v2915, %v2916
      %v2918 = vrot.slane %v2859, 7
      %v2919 = vsel %vm2016, %v2916, %v2918
      %v2920 = vrot.slane %v2860, 7
      %v2921 = vrot.slane %v2861, 7
      %v2922 = vsel %vm2016, %v2920, %v2921
      %v2923 = vrot.slane %v2862, 7
      %v2924 = vsel %vm2016, %v2921, %v2923
      %v2925 = vrot.slane %v2863, 7
      %v2926 = vrot.slane %v2864, 7
      %v2927 = vsel %vm2016, %v2925, %v2926
      %v2928 = vrot.slane %v2865, 7
      %v2929 = vsel %vm2016, %v2926, %v2928
      %v2946 = vadd.f32 %v2825, %v2892
      %v2947 = vadd.f32 %v2826, %v2894
      %v2948 = vadd.f32 %v2827, %v2897
      %v2949 = vadd.f32 %v2828, %v2899
      %v2950 = vadd.f32 %v2829, %v2902
      %v2951 = vadd.f32 %v2830, %v2904
      %v2952 = vadd.f32 %v2831, %v2907
      %v2953 = vadd.f32 %v2832, %v2909
      %v2954 = vadd.f32 %v2833, %v2912
      %v2955 = vadd.f32 %v2834, %v2914
      %v2956 = vadd.f32 %v2835, %v2917
      %v2957 = vadd.f32 %v2836, %v2919
      %v2958 = vadd.f32 %v2837, %v2922
      %v2959 = vadd.f32 %v2838, %v2924
      %v2960 = vadd.f32 %v2839, %v2927
      %v2961 = vadd.f32 %v2840, %v2929
      %v2962 = vperm.slane %v1355, 0
      %v2963 = vmul.f32 %v1291, %v2962
      %v2964 = vmul.f32 %v1345, %v2962
      %v2965 = vmul.f32 %v1294, %v2962
      %v2966 = vmul.f32 %v1346, %v2962
      %v2967 = vmul.f32 %v1297, %v2962
      %v2968 = vmul.f32 %v1347, %v2962
      %v2969 = vmul.f32 %v1300, %v2962
      %v2970 = vmul.f32 %v1348, %v2962
      %v2971 = vmul.f32 %v1303, %v2962
      %v2972 = vmul.f32 %v1349, %v2962
      %v2973 = vmul.f32 %v1306, %v2962
      %v2974 = vmul.f32 %v1350, %v2962
      %v2975 = vmul.f32 %v1309, %v2962
      %v2976 = vmul.f32 %v1351, %v2962
      %v2977 = vmul.f32 %v1312, %v2962
      %v2978 = vmul.f32 %v1352, %v2962
      %v2979 = vadd.f32 %v2946, %v2963
      %v2980 = vadd.f32 %v2947, %v2964
      %v2981 = vadd.f32 %v2948, %v2965
      %v2982 = vadd.f32 %v2949, %v2966
      %v2983 = vadd.f32 %v2950, %v2967
      %v2984 = vadd.f32 %v2951, %v2968
      %v2985 = vadd.f32 %v2952, %v2969
      %v2986 = vadd.f32 %v2953, %v2970
      %v2987 = vadd.f32 %v2954, %v2971
      %v2988 = vadd.f32 %v2955, %v2972
      %v2989 = vadd.f32 %v2956, %v2973
      %v2990 = vadd.f32 %v2957, %v2974
      %v2991 = vadd.f32 %v2958, %v2975
      %v2992 = vadd.f32 %v2959, %v2976
      %v2993 = vadd.f32 %v2960, %v2977
      %v2994 = vadd.f32 %v2961, %v2978
      %v2995 = vperm.slane %v1355, 1
      %v2996 = vmul.f32 %v1291, %v2995
      %v2997 = vmul.f32 %v1345, %v2995
      %v2998 = vmul.f32 %v2995, 0.0
      %v2999 = vmul.f32 %v1294, %v2995
      %v3000 = vmul.f32 %v1346, %v2995
      %v3001 = vmul.f32 %v1297, %v2995
      %v3002 = vmul.f32 %v1347, %v2995
      %v3003 = vmul.f32 %v1300, %v2995
      %v3004 = vmul.f32 %v1348, %v2995
      %v3005 = vmul.f32 %v1303, %v2995
      %v3006 = vmul.f32 %v1349, %v2995
      %v3007 = vmul.f32 %v1306, %v2995
      %v3008 = vmul.f32 %v1350, %v2995
      %v3009 = vmul.f32 %v1309, %v2995
      %v3010 = vmul.f32 %v1351, %v2995
      %v3011 = vmul.f32 %v1312, %v2995
      %v3012 = vmul.f32 %v1352, %v2995
      %v3030 = vrot.slane %v2996, 1
      %v3031 = vrot.slane %v2997, 1
      %v3032 = vsel %vm1288, %v3030, %v3031
      %v3033 = vrot.slane %v2998, 1
      %v3034 = vsel %vm1288, %v3031, %v3033
      %v3035 = vrot.slane %v2999, 1
      %v3036 = vrot.slane %v3000, 1
      %v3037 = vsel %vm1288, %v3035, %v3036
      %v3038 = vsel %vm1288, %v3036, %v3033
      %v3039 = vrot.slane %v3001, 1
      %v3040 = vrot.slane %v3002, 1
      %v3041 = vsel %vm1288, %v3039, %v3040
      %v3042 = vsel %vm1288, %v3040, %v3033
      %v3043 = vrot.slane %v3003, 1
      %v3044 = vrot.slane %v3004, 1
      %v3045 = vsel %vm1288, %v3043, %v3044
      %v3046 = vsel %vm1288, %v3044, %v3033
      %v3047 = vrot.slane %v3005, 1
      %v3048 = vrot.slane %v3006, 1
      %v3049 = vsel %vm1288, %v3047, %v3048
      %v3050 = vsel %vm1288, %v3048, %v3033
      %v3051 = vrot.slane %v3007, 1
      %v3052 = vrot.slane %v3008, 1
      %v3053 = vsel %vm1288, %v3051, %v3052
      %v3054 = vsel %vm1288, %v3052, %v3033
      %v3055 = vrot.slane %v3009, 1
      %v3056 = vrot.slane %v3010, 1
      %v3057 = vsel %vm1288, %v3055, %v3056
      %v3058 = vsel %vm1288, %v3056, %v3033
      %v3059 = vrot.slane %v3011, 1
      %v3060 = vrot.slane %v3012, 1
      %v3061 = vsel %vm1288, %v3059, %v3060
      %v3062 = vsel %vm1288, %v3060, %v3033
      %v3079 = vadd.f32 %v2979, %v3032
      %v3080 = vadd.f32 %v2980, %v3034
      %v3081 = vadd.f32 %v2981, %v3037
      %v3082 = vadd.f32 %v2982, %v3038
      %v3083 = vadd.f32 %v2983, %v3041
      %v3084 = vadd.f32 %v2984, %v3042
      %v3085 = vadd.f32 %v2985, %v3045
      %v3086 = vadd.f32 %v2986, %v3046
      %v3087 = vadd.f32 %v2987, %v3049
      %v3088 = vadd.f32 %v2988, %v3050
      %v3089 = vadd.f32 %v2989, %v3053
      %v3090 = vadd.f32 %v2990, %v3054
      %v3091 = vadd.f32 %v2991, %v3057
      %v3092 = vadd.f32 %v2992, %v3058
      %v3093 = vadd.f32 %v2993, %v3061
      %v3094 = vadd.f32 %v2994, %v3062
      %v3095 = vperm.slane %v1355, 2
      %v3096 = vmul.f32 %v1291, %v3095
      %v3097 = vmul.f32 %v1345, %v3095
      %v3098 = vmul.f32 %v3095, 0.0
      %v3099 = vmul.f32 %v1294, %v3095
      %v3100 = vmul.f32 %v1346, %v3095
      %v3101 = vmul.f32 %v1297, %v3095
      %v3102 = vmul.f32 %v1347, %v3095
      %v3103 = vmul.f32 %v1300, %v3095
      %v3104 = vmul.f32 %v1348, %v3095
      %v3105 = vmul.f32 %v1303, %v3095
      %v3106 = vmul.f32 %v1349, %v3095
      %v3107 = vmul.f32 %v1306, %v3095
      %v3108 = vmul.f32 %v1350, %v3095
      %v3109 = vmul.f32 %v1309, %v3095
      %v3110 = vmul.f32 %v1351, %v3095
      %v3111 = vmul.f32 %v1312, %v3095
      %v3112 = vmul.f32 %v1352, %v3095
      %v3130 = vrot.slane %v3096, 2
      %v3131 = vrot.slane %v3097, 2
      %v3132 = vsel %vm1511, %v3130, %v3131
      %v3133 = vrot.slane %v3098, 2
      %v3134 = vsel %vm1511, %v3131, %v3133
      %v3135 = vrot.slane %v3099, 2
      %v3136 = vrot.slane %v3100, 2
      %v3137 = vsel %vm1511, %v3135, %v3136
      %v3138 = vsel %vm1511, %v3136, %v3133
      %v3139 = vrot.slane %v3101, 2
      %v3140 = vrot.slane %v3102, 2
      %v3141 = vsel %vm1511, %v3139, %v3140
      %v3142 = vsel %vm1511, %v3140, %v3133
      %v3143 = vrot.slane %v3103, 2
      %v3144 = vrot.slane %v3104, 2
      %v3145 = vsel %vm1511, %v3143, %v3144
      %v3146 = vsel %vm1511, %v3144, %v3133
      %v3147 = vrot.slane %v3105, 2
      %v3148 = vrot.slane %v3106, 2
      %v3149 = vsel %vm1511, %v3147, %v3148
      %v3150 = vsel %vm1511, %v3148, %v3133
      %v3151 = vrot.slane %v3107, 2
      %v3152 = vrot.slane %v3108, 2
      %v3153 = vsel %vm1511, %v3151, %v3152
      %v3154 = vsel %vm1511, %v3152, %v3133
      %v3155 = vrot.slane %v3109, 2
      %v3156 = vrot.slane %v3110, 2
      %v3157 = vsel %vm1511, %v3155, %v3156
      %v3158 = vsel %vm1511, %v3156, %v3133
      %v3159 = vrot.slane %v3111, 2
      %v3160 = vrot.slane %v3112, 2
      %v3161 = vsel %vm1511, %v3159, %v3160
      %v3162 = vsel %vm1511, %v3160, %v3133
      %v3179 = vadd.f32 %v3079, %v3132
      %v3180 = vadd.f32 %v3080, %v3134
      %v3181 = vadd.f32 %v3081, %v3137
      %v3182 = vadd.f32 %v3082, %v3138
      %v3183 = vadd.f32 %v3083, %v3141
      %v3184 = vadd.f32 %v3084, %v3142
      %v3185 = vadd.f32 %v3085, %v3145
      %v3186 = vadd.f32 %v3086, %v3146
      %v3187 = vadd.f32 %v3087, %v3149
      %v3188 = vadd.f32 %v3088, %v3150
      %v3189 = vadd.f32 %v3089, %v3153
      %v3190 = vadd.f32 %v3090, %v3154
      %v3191 = vadd.f32 %v3091, %v3157
      %v3192 = vadd.f32 %v3092, %v3158
      %v3193 = vadd.f32 %v3093, %v3161
      %v3194 = vadd.f32 %v3094, %v3162
      %v3195 = vperm.slane %v1355, 3
      %v3196 = vmul.f32 %v1291, %v3195
      %v3197 = vmul.f32 %v1345, %v3195
      %v3198 = vmul.f32 %v3195, 0.0
      %v3199 = vmul.f32 %v1294, %v3195
      %v3200 = vmul.f32 %v1346, %v3195
      %v3201 = vmul.f32 %v1297, %v3195
      %v3202 = vmul.f32 %v1347, %v3195
      %v3203 = vmul.f32 %v1300, %v3195
      %v3204 = vmul.f32 %v1348, %v3195
      %v3205 = vmul.f32 %v1303, %v3195
      %v3206 = vmul.f32 %v1349, %v3195
      %v3207 = vmul.f32 %v1306, %v3195
      %v3208 = vmul.f32 %v1350, %v3195
      %v3209 = vmul.f32 %v1309, %v3195
      %v3210 = vmul.f32 %v1351, %v3195
      %v3211 = vmul.f32 %v1312, %v3195
      %v3212 = vmul.f32 %v1352, %v3195
      %v3230 = vrot.slane %v3196, 3
      %v3231 = vrot.slane %v3197, 3
      %v3232 = vsel %vm1612, %v3230, %v3231
      %v3233 = vrot.slane %v3198, 3
      %v3234 = vsel %vm1612, %v3231, %v3233
      %v3235 = vrot.slane %v3199, 3
      %v3236 = vrot.slane %v3200, 3
      %v3237 = vsel %vm1612, %v3235, %v3236
      %v3238 = vsel %vm1612, %v3236, %v3233
      %v3239 = vrot.slane %v3201, 3
      %v3240 = vrot.slane %v3202, 3
      %v3241 = vsel %vm1612, %v3239, %v3240
      %v3242 = vsel %vm1612, %v3240, %v3233
      %v3243 = vrot.slane %v3203, 3
      %v3244 = vrot.slane %v3204, 3
      %v3245 = vsel %vm1612, %v3243, %v3244
      %v3246 = vsel %vm1612, %v3244, %v3233
      %v3247 = vrot.slane %v3205, 3
      %v3248 = vrot.slane %v3206, 3
      %v3249 = vsel %vm1612, %v3247, %v3248
      %v3250 = vsel %vm1612, %v3248, %v3233
      %v3251 = vrot.slane %v3207, 3
      %v3252 = vrot.slane %v3208, 3
      %v3253 = vsel %vm1612, %v3251, %v3252
      %v3254 = vsel %vm1612, %v3252, %v3233
      %v3255 = vrot.slane %v3209, 3
      %v3256 = vrot.slane %v3210, 3
      %v3257 = vsel %vm1612, %v3255, %v3256
      %v3258 = vsel %vm1612, %v3256, %v3233
      %v3259 = vrot.slane %v3211, 3
      %v3260 = vrot.slane %v3212, 3
      %v3261 = vsel %vm1612, %v3259, %v3260
      %v3262 = vsel %vm1612, %v3260, %v3233
      %v3279 = vadd.f32 %v3179, %v3232
      %v3280 = vadd.f32 %v3180, %v3234
      %v3281 = vadd.f32 %v3181, %v3237
      %v3282 = vadd.f32 %v3182, %v3238
      %v3283 = vadd.f32 %v3183, %v3241
      %v3284 = vadd.f32 %v3184, %v3242
      %v3285 = vadd.f32 %v3185, %v3245
      %v3286 = vadd.f32 %v3186, %v3246
      %v3287 = vadd.f32 %v3187, %v3249
      %v3288 = vadd.f32 %v3188, %v3250
      %v3289 = vadd.f32 %v3189, %v3253
      %v3290 = vadd.f32 %v3190, %v3254
      %v3291 = vadd.f32 %v3191, %v3257
      %v3292 = vadd.f32 %v3192, %v3258
      %v3293 = vadd.f32 %v3193, %v3261
      %v3294 = vadd.f32 %v3194, %v3262
      %v3295 = vperm.slane %v1355, 4
      %v3296 = vmul.f32 %v1291, %v3295
      %v3297 = vmul.f32 %v1345, %v3295
      %v3298 = vmul.f32 %v3295, 0.0
      %v3299 = vmul.f32 %v1294, %v3295
      %v3300 = vmul.f32 %v1346, %v3295
      %v3301 = vmul.f32 %v1297, %v3295
      %v3302 = vmul.f32 %v1347, %v3295
      %v3303 = vmul.f32 %v1300, %v3295
      %v3304 = vmul.f32 %v1348, %v3295
      %v3305 = vmul.f32 %v1303, %v3295
      %v3306 = vmul.f32 %v1349, %v3295
      %v3307 = vmul.f32 %v1306, %v3295
      %v3308 = vmul.f32 %v1350, %v3295
      %v3309 = vmul.f32 %v1309, %v3295
      %v3310 = vmul.f32 %v1351, %v3295
      %v3311 = vmul.f32 %v1312, %v3295
      %v3312 = vmul.f32 %v1352, %v3295
      %v3330 = vrot.slane %v3296, 4
      %v3331 = vrot.slane %v3297, 4
      %v3332 = vsel %vm1713, %v3330, %v3331
      %v3333 = vrot.slane %v3298, 4
      %v3334 = vsel %vm1713, %v3331, %v3333
      %v3335 = vrot.slane %v3299, 4
      %v3336 = vrot.slane %v3300, 4
      %v3337 = vsel %vm1713, %v3335, %v3336
      %v3338 = vsel %vm1713, %v3336, %v3333
      %v3339 = vrot.slane %v3301, 4
      %v3340 = vrot.slane %v3302, 4
      %v3341 = vsel %vm1713, %v3339, %v3340
      %v3342 = vsel %vm1713, %v3340, %v3333
      %v3343 = vrot.slane %v3303, 4
      %v3344 = vrot.slane %v3304, 4
      %v3345 = vsel %vm1713, %v3343, %v3344
      %v3346 = vsel %vm1713, %v3344, %v3333
      %v3347 = vrot.slane %v3305, 4
      %v3348 = vrot.slane %v3306, 4
      %v3349 = vsel %vm1713, %v3347, %v3348
      %v3350 = vsel %vm1713, %v3348, %v3333
      %v3351 = vrot.slane %v3307, 4
      %v3352 = vrot.slane %v3308, 4
      %v3353 = vsel %vm1713, %v3351, %v3352
      %v3354 = vsel %vm1713, %v3352, %v3333
      %v3355 = vrot.slane %v3309, 4
      %v3356 = vrot.slane %v3310, 4
      %v3357 = vsel %vm1713, %v3355, %v3356
      %v3358 = vsel %vm1713, %v3356, %v3333
      %v3359 = vrot.slane %v3311, 4
      %v3360 = vrot.slane %v3312, 4
      %v3361 = vsel %vm1713, %v3359, %v3360
      %v3362 = vsel %vm1713, %v3360, %v3333
      %v3379 = vadd.f32 %v3279, %v3332
      %v3380 = vadd.f32 %v3280, %v3334
      %v3381 = vadd.f32 %v3281, %v3337
      %v3382 = vadd.f32 %v3282, %v3338
      %v3383 = vadd.f32 %v3283, %v3341
      %v3384 = vadd.f32 %v3284, %v3342
      %v3385 = vadd.f32 %v3285, %v3345
      %v3386 = vadd.f32 %v3286, %v3346
      %v3387 = vadd.f32 %v3287, %v3349
      %v3388 = vadd.f32 %v3288, %v3350
      %v3389 = vadd.f32 %v3289, %v3353
      %v3390 = vadd.f32 %v3290, %v3354
      %v3391 = vadd.f32 %v3291, %v3357
      %v3392 = vadd.f32 %v3292, %v3358
      %v3393 = vadd.f32 %v3293, %v3361
      %v3394 = vadd.f32 %v3294, %v3362
      %v3395 = vperm.slane %v1355, 5
      %v3396 = vmul.f32 %v1291, %v3395
      %v3397 = vmul.f32 %v1345, %v3395
      %v3398 = vmul.f32 %v3395, 0.0
      %v3399 = vmul.f32 %v1294, %v3395
      %v3400 = vmul.f32 %v1346, %v3395
      %v3401 = vmul.f32 %v1297, %v3395
      %v3402 = vmul.f32 %v1347, %v3395
      %v3403 = vmul.f32 %v1300, %v3395
      %v3404 = vmul.f32 %v1348, %v3395
      %v3405 = vmul.f32 %v1303, %v3395
      %v3406 = vmul.f32 %v1349, %v3395
      %v3407 = vmul.f32 %v1306, %v3395
      %v3408 = vmul.f32 %v1350, %v3395
      %v3409 = vmul.f32 %v1309, %v3395
      %v3410 = vmul.f32 %v1351, %v3395
      %v3411 = vmul.f32 %v1312, %v3395
      %v3412 = vmul.f32 %v1352, %v3395
      %v3430 = vrot.slane %v3396, 5
      %v3431 = vrot.slane %v3397, 5
      %v3432 = vsel %vm1814, %v3430, %v3431
      %v3433 = vrot.slane %v3398, 5
      %v3434 = vsel %vm1814, %v3431, %v3433
      %v3435 = vrot.slane %v3399, 5
      %v3436 = vrot.slane %v3400, 5
      %v3437 = vsel %vm1814, %v3435, %v3436
      %v3438 = vsel %vm1814, %v3436, %v3433
      %v3439 = vrot.slane %v3401, 5
      %v3440 = vrot.slane %v3402, 5
      %v3441 = vsel %vm1814, %v3439, %v3440
      %v3442 = vsel %vm1814, %v3440, %v3433
      %v3443 = vrot.slane %v3403, 5
      %v3444 = vrot.slane %v3404, 5
      %v3445 = vsel %vm1814, %v3443, %v3444
      %v3446 = vsel %vm1814, %v3444, %v3433
      %v3447 = vrot.slane %v3405, 5
      %v3448 = vrot.slane %v3406, 5
      %v3449 = vsel %vm1814, %v3447, %v3448
      %v3450 = vsel %vm1814, %v3448, %v3433
      %v3451 = vrot.slane %v3407, 5
      %v3452 = vrot.slane %v3408, 5
      %v3453 = vsel %vm1814, %v3451, %v3452
      %v3454 = vsel %vm1814, %v3452, %v3433
      %v3455 = vrot.slane %v3409, 5
      %v3456 = vrot.slane %v3410, 5
      %v3457 = vsel %vm1814, %v3455, %v3456
      %v3458 = vsel %vm1814, %v3456, %v3433
      %v3459 = vrot.slane %v3411, 5
      %v3460 = vrot.slane %v3412, 5
      %v3461 = vsel %vm1814, %v3459, %v3460
      %v3462 = vsel %vm1814, %v3460, %v3433
      %v3479 = vadd.f32 %v3379, %v3432
      %v3480 = vadd.f32 %v3380, %v3434
      %v3481 = vadd.f32 %v3381, %v3437
      %v3482 = vadd.f32 %v3382, %v3438
      %v3483 = vadd.f32 %v3383, %v3441
      %v3484 = vadd.f32 %v3384, %v3442
      %v3485 = vadd.f32 %v3385, %v3445
      %v3486 = vadd.f32 %v3386, %v3446
      %v3487 = vadd.f32 %v3387, %v3449
      %v3488 = vadd.f32 %v3388, %v3450
      %v3489 = vadd.f32 %v3389, %v3453
      %v3490 = vadd.f32 %v3390, %v3454
      %v3491 = vadd.f32 %v3391, %v3457
      %v3492 = vadd.f32 %v3392, %v3458
      %v3493 = vadd.f32 %v3393, %v3461
      %v3494 = vadd.f32 %v3394, %v3462
      %v3495 = vperm.slane %v1355, 6
      %v3496 = vmul.f32 %v1291, %v3495
      %v3497 = vmul.f32 %v1345, %v3495
      %v3498 = vmul.f32 %v3495, 0.0
      %v3499 = vmul.f32 %v1294, %v3495
      %v3500 = vmul.f32 %v1346, %v3495
      %v3501 = vmul.f32 %v1297, %v3495
      %v3502 = vmul.f32 %v1347, %v3495
      %v3503 = vmul.f32 %v1300, %v3495
      %v3504 = vmul.f32 %v1348, %v3495
      %v3505 = vmul.f32 %v1303, %v3495
      %v3506 = vmul.f32 %v1349, %v3495
      %v3507 = vmul.f32 %v1306, %v3495
      %v3508 = vmul.f32 %v1350, %v3495
      %v3509 = vmul.f32 %v1309, %v3495
      %v3510 = vmul.f32 %v1351, %v3495
      %v3511 = vmul.f32 %v1312, %v3495
      %v3512 = vmul.f32 %v1352, %v3495
      %v3530 = vrot.slane %v3496, 6
      %v3531 = vrot.slane %v3497, 6
      %v3532 = vsel %vm1915, %v3530, %v3531
      %v3533 = vrot.slane %v3498, 6
      %v3534 = vsel %vm1915, %v3531, %v3533
      %v3535 = vrot.slane %v3499, 6
      %v3536 = vrot.slane %v3500, 6
      %v3537 = vsel %vm1915, %v3535, %v3536
      %v3538 = vsel %vm1915, %v3536, %v3533
      %v3539 = vrot.slane %v3501, 6
      %v3540 = vrot.slane %v3502, 6
      %v3541 = vsel %vm1915, %v3539, %v3540
      %v3542 = vsel %vm1915, %v3540, %v3533
      %v3543 = vrot.slane %v3503, 6
      %v3544 = vrot.slane %v3504, 6
      %v3545 = vsel %vm1915, %v3543, %v3544
      %v3546 = vsel %vm1915, %v3544, %v3533
      %v3547 = vrot.slane %v3505, 6
      %v3548 = vrot.slane %v3506, 6
      %v3549 = vsel %vm1915, %v3547, %v3548
      %v3550 = vsel %vm1915, %v3548, %v3533
      %v3551 = vrot.slane %v3507, 6
      %v3552 = vrot.slane %v3508, 6
      %v3553 = vsel %vm1915, %v3551, %v3552
      %v3554 = vsel %vm1915, %v3552, %v3533
      %v3555 = vrot.slane %v3509, 6
      %v3556 = vrot.slane %v3510, 6
      %v3557 = vsel %vm1915, %v3555, %v3556
      %v3558 = vsel %vm1915, %v3556, %v3533
      %v3559 = vrot.slane %v3511, 6
      %v3560 = vrot.slane %v3512, 6
      %v3561 = vsel %vm1915, %v3559, %v3560
      %v3562 = vsel %vm1915, %v3560, %v3533
      %v3579 = vadd.f32 %v3479, %v3532
      %v3580 = vadd.f32 %v3480, %v3534
      %v3581 = vadd.f32 %v3481, %v3537
      %v3582 = vadd.f32 %v3482, %v3538
      %v3583 = vadd.f32 %v3483, %v3541
      %v3584 = vadd.f32 %v3484, %v3542
      %v3585 = vadd.f32 %v3485, %v3545
      %v3586 = vadd.f32 %v3486, %v3546
      %v3587 = vadd.f32 %v3487, %v3549
      %v3588 = vadd.f32 %v3488, %v3550
      %v3589 = vadd.f32 %v3489, %v3553
      %v3590 = vadd.f32 %v3490, %v3554
      %v3591 = vadd.f32 %v3491, %v3557
      %v3592 = vadd.f32 %v3492, %v3558
      %v3593 = vadd.f32 %v3493, %v3561
      %v3594 = vadd.f32 %v3494, %v3562
      %v3595 = vperm.slane %v1355, 7
      %v3596 = vmul.f32 %v1291, %v3595
      %v3597 = vmul.f32 %v1345, %v3595
      %v3598 = vmul.f32 %v3595, 0.0
      %v3599 = vmul.f32 %v1294, %v3595
      %v3600 = vmul.f32 %v1346, %v3595
      %v3601 = vmul.f32 %v1297, %v3595
      %v3602 = vmul.f32 %v1347, %v3595
      %v3603 = vmul.f32 %v1300, %v3595
      %v3604 = vmul.f32 %v1348, %v3595
      %v3605 = vmul.f32 %v1303, %v3595
      %v3606 = vmul.f32 %v1349, %v3595
      %v3607 = vmul.f32 %v1306, %v3595
      %v3608 = vmul.f32 %v1350, %v3595
      %v3609 = vmul.f32 %v1309, %v3595
      %v3610 = vmul.f32 %v1351, %v3595
      %v3611 = vmul.f32 %v1312, %v3595
      %v3612 = vmul.f32 %v1352, %v3595
      %v3630 = vrot.slane %v3596, 7
      %v3631 = vrot.slane %v3597, 7
      %v3632 = vsel %vm2016, %v3630, %v3631
      %v3633 = vrot.slane %v3598, 7
      %v3634 = vsel %vm2016, %v3631, %v3633
      %v3635 = vrot.slane %v3599, 7
      %v3636 = vrot.slane %v3600, 7
      %v3637 = vsel %vm2016, %v3635, %v3636
      %v3638 = vsel %vm2016, %v3636, %v3633
      %v3639 = vrot.slane %v3601, 7
      %v3640 = vrot.slane %v3602, 7
      %v3641 = vsel %vm2016, %v3639, %v3640
      %v3642 = vsel %vm2016, %v3640, %v3633
      %v3643 = vrot.slane %v3603, 7
      %v3644 = vrot.slane %v3604, 7
      %v3645 = vsel %vm2016, %v3643, %v3644
      %v3646 = vsel %vm2016, %v3644, %v3633
      %v3647 = vrot.slane %v3605, 7
      %v3648 = vrot.slane %v3606, 7
      %v3649 = vsel %vm2016, %v3647, %v3648
      %v3650 = vsel %vm2016, %v3648, %v3633
      %v3651 = vrot.slane %v3607, 7
      %v3652 = vrot.slane %v3608, 7
      %v3653 = vsel %vm2016, %v3651, %v3652
      %v3654 = vsel %vm2016, %v3652, %v3633
      %v3655 = vrot.slane %v3609, 7
      %v3656 = vrot.slane %v3610, 7
      %v3657 = vsel %vm2016, %v3655, %v3656
      %v3658 = vsel %vm2016, %v3656, %v3633
      %v3659 = vrot.slane %v3611, 7
      %v3660 = vrot.slane %v3612, 7
      %v3661 = vsel %vm2016, %v3659, %v3660
      %v3662 = vsel %vm2016, %v3660, %v3633
      %v3679 = vadd.f32 %v3579, %v3632
      %v3680 = vadd.f32 %v3580, %v3634
      %v3681 = vadd.f32 %v3581, %v3637
      %v3682 = vadd.f32 %v3582, %v3638
      %v3683 = vadd.f32 %v3583, %v3641
      %v3684 = vadd.f32 %v3584, %v3642
      %v3685 = vadd.f32 %v3585, %v3645
      %v3686 = vadd.f32 %v3586, %v3646
      %v3687 = vadd.f32 %v3587, %v3649
      %v3688 = vadd.f32 %v3588, %v3650
      %v3689 = vadd.f32 %v3589, %v3653
      %v3690 = vadd.f32 %v3590, %v3654
      %v3691 = vadd.f32 %v3591, %v3657
      %v3692 = vadd.f32 %v3592, %v3658
      %v3693 = vadd.f32 %v3593, %v3661
      %v3694 = vadd.f32 %v3594, %v3662
      %v3695 = vperm.slane %v1356, 0
      %v3696 = vmul.f32 %v1345, %v3695
      %v3697 = vmul.f32 %v3695, 0.0
      %v3698 = vmul.f32 %v1346, %v3695
      %v3699 = vmul.f32 %v1347, %v3695
      %v3700 = vmul.f32 %v1348, %v3695
      %v3701 = vmul.f32 %v1349, %v3695
      %v3702 = vmul.f32 %v1350, %v3695
      %v3703 = vmul.f32 %v1351, %v3695
      %v3704 = vmul.f32 %v1352, %v3695
      %v3705 = vadd.f32 %v3679, %v3696
      %v3706 = vadd.f32 %v3680, %v3697
      %v3707 = vadd.f32 %v3681, %v3698
      %v3708 = vadd.f32 %v3682, %v3697
      %v3709 = vadd.f32 %v3683, %v3699
      %v3710 = vadd.f32 %v3684, %v3697
      %v3711 = vadd.f32 %v3685, %v3700
      %v3712 = vadd.f32 %v3686, %v3697
      %v3713 = vadd.f32 %v3687, %v3701
      %v3714 = vadd.f32 %v3688, %v3697
      %v3715 = vadd.f32 %v3689, %v3702
      %v3716 = vadd.f32 %v3690, %v3697
      %v3717 = vadd.f32 %v3691, %v3703
      %v3718 = vadd.f32 %v3692, %v3697
      %v3719 = vadd.f32 %v3693, %v3704
      %v3720 = vadd.f32 %v3694, %v3697
      %v3721 = vperm.slane %v1356, 1
      %v3722 = vmul.f32 %v1345, %v3721
      %v3723 = vmul.f32 %v3721, 0.0
      %v3724 = vmul.f32 %v1346, %v3721
      %v3725 = vmul.f32 %v1347, %v3721
      %v3726 = vmul.f32 %v1348, %v3721
      %v3727 = vmul.f32 %v1349, %v3721
      %v3728 = vmul.f32 %v1350, %v3721
      %v3729 = vmul.f32 %v1351, %v3721
      %v3730 = vmul.f32 %v1352, %v3721
      %v3740 = vrot.slane %v3722, 1
      %v3741 = vrot.slane %v3723, 1
      %v3742 = vsel %vm1288, %v3740, %v3741
      %v3743 = vsel %vm1288, %v3741, %v3741
      %v3744 = vrot.slane %v3724, 1
      %v3745 = vsel %vm1288, %v3744, %v3741
      %v3746 = vrot.slane %v3725, 1
      %v3747 = vsel %vm1288, %v3746, %v3741
      %v3748 = vrot.slane %v3726, 1
      %v3749 = vsel %vm1288, %v3748, %v3741
      %v3750 = vrot.slane %v3727, 1
      %v3751 = vsel %vm1288, %v3750, %v3741
      %v3752 = vrot.slane %v3728, 1
      %v3753 = vsel %vm1288, %v3752, %v3741
      %v3754 = vrot.slane %v3729, 1
      %v3755 = vsel %vm1288, %v3754, %v3741
      %v3756 = vrot.slane %v3730, 1
      %v3757 = vsel %vm1288, %v3756, %v3741
      %v3767 = vadd.f32 %v3705, %v3742
      %v3768 = vadd.f32 %v3706, %v3743
      %v3769 = vadd.f32 %v3707, %v3745
      %v3770 = vadd.f32 %v3708, %v3743
      %v3771 = vadd.f32 %v3709, %v3747
      %v3772 = vadd.f32 %v3710, %v3743
      %v3773 = vadd.f32 %v3711, %v3749
      %v3774 = vadd.f32 %v3712, %v3743
      %v3775 = vadd.f32 %v3713, %v3751
      %v3776 = vadd.f32 %v3714, %v3743
      %v3777 = vadd.f32 %v3715, %v3753
      %v3778 = vadd.f32 %v3716, %v3743
      %v3779 = vadd.f32 %v3717, %v3755
      %v3780 = vadd.f32 %v3718, %v3743
      %v3781 = vadd.f32 %v3719, %v3757
      %v3782 = vadd.f32 %v3720, %v3743
      %v3783 = vperm.slane %v1356, 2
      %v3784 = vmul.f32 %v1345, %v3783
      %v3785 = vmul.f32 %v3783, 0.0
      %v3786 = vmul.f32 %v1346, %v3783
      %v3787 = vmul.f32 %v1347, %v3783
      %v3788 = vmul.f32 %v1348, %v3783
      %v3789 = vmul.f32 %v1349, %v3783
      %v3790 = vmul.f32 %v1350, %v3783
      %v3791 = vmul.f32 %v1351, %v3783
      %v3792 = vmul.f32 %v1352, %v3783
      %v3802 = vrot.slane %v3784, 2
      %v3803 = vrot.slane %v3785, 2
      %v3804 = vsel %vm1511, %v3802, %v3803
      %v3805 = vsel %vm1511, %v3803, %v3803
      %v3806 = vrot.slane %v3786, 2
      %v3807 = vsel %vm1511, %v3806, %v3803
      %v3808 = vrot.slane %v3787, 2
      %v3809 = vsel %vm1511, %v3808, %v3803
      %v3810 = vrot.slane %v3788, 2
      %v3811 = vsel %vm1511, %v3810, %v3803
      %v3812 = vrot.slane %v3789, 2
      %v3813 = vsel %vm1511, %v3812, %v3803
      %v3814 = vrot.slane %v3790, 2
      %v3815 = vsel %vm1511, %v3814, %v3803
      %v3816 = vrot.slane %v3791, 2
      %v3817 = vsel %vm1511, %v3816, %v3803
      %v3818 = vrot.slane %v3792, 2
      %v3819 = vsel %vm1511, %v3818, %v3803
      %v3829 = vadd.f32 %v3767, %v3804
      %v3830 = vadd.f32 %v3768, %v3805
      %v3831 = vadd.f32 %v3769, %v3807
      %v3832 = vadd.f32 %v3770, %v3805
      %v3833 = vadd.f32 %v3771, %v3809
      %v3834 = vadd.f32 %v3772, %v3805
      %v3835 = vadd.f32 %v3773, %v3811
      %v3836 = vadd.f32 %v3774, %v3805
      %v3837 = vadd.f32 %v3775, %v3813
      %v3838 = vadd.f32 %v3776, %v3805
      %v3839 = vadd.f32 %v3777, %v3815
      %v3840 = vadd.f32 %v3778, %v3805
      %v3841 = vadd.f32 %v3779, %v3817
      %v3842 = vadd.f32 %v3780, %v3805
      %v3843 = vadd.f32 %v3781, %v3819
      %v3844 = vadd.f32 %v3782, %v3805
      %v3845 = vperm.slane %v1356, 3
      %v3846 = vmul.f32 %v1345, %v3845
      %v3847 = vmul.f32 %v3845, 0.0
      %v3848 = vmul.f32 %v1346, %v3845
      %v3849 = vmul.f32 %v1347, %v3845
      %v3850 = vmul.f32 %v1348, %v3845
      %v3851 = vmul.f32 %v1349, %v3845
      %v3852 = vmul.f32 %v1350, %v3845
      %v3853 = vmul.f32 %v1351, %v3845
      %v3854 = vmul.f32 %v1352, %v3845
      %v3864 = vrot.slane %v3846, 3
      %v3865 = vrot.slane %v3847, 3
      %v3866 = vsel %vm1612, %v3864, %v3865
      %v3867 = vsel %vm1612, %v3865, %v3865
      %v3868 = vrot.slane %v3848, 3
      %v3869 = vsel %vm1612, %v3868, %v3865
      %v3870 = vrot.slane %v3849, 3
      %v3871 = vsel %vm1612, %v3870, %v3865
      %v3872 = vrot.slane %v3850, 3
      %v3873 = vsel %vm1612, %v3872, %v3865
      %v3874 = vrot.slane %v3851, 3
      %v3875 = vsel %vm1612, %v3874, %v3865
      %v3876 = vrot.slane %v3852, 3
      %v3877 = vsel %vm1612, %v3876, %v3865
      %v3878 = vrot.slane %v3853, 3
      %v3879 = vsel %vm1612, %v3878, %v3865
      %v3880 = vrot.slane %v3854, 3
      %v3881 = vsel %vm1612, %v3880, %v3865
      %v3891 = vadd.f32 %v3829, %v3866
      %v3892 = vadd.f32 %v3830, %v3867
      %v3893 = vadd.f32 %v3831, %v3869
      %v3894 = vadd.f32 %v3832, %v3867
      %v3895 = vadd.f32 %v3833, %v3871
      %v3896 = vadd.f32 %v3834, %v3867
      %v3897 = vadd.f32 %v3835, %v3873
      %v3898 = vadd.f32 %v3836, %v3867
      %v3899 = vadd.f32 %v3837, %v3875
      %v3900 = vadd.f32 %v3838, %v3867
      %v3901 = vadd.f32 %v3839, %v3877
      %v3902 = vadd.f32 %v3840, %v3867
      %v3903 = vadd.f32 %v3841, %v3879
      %v3904 = vadd.f32 %v3842, %v3867
      %v3905 = vadd.f32 %v3843, %v3881
      %v3906 = vadd.f32 %v3844, %v3867
      %v3907 = vperm.slane %v1356, 4
      %v3908 = vmul.f32 %v1345, %v3907
      %v3909 = vmul.f32 %v3907, 0.0
      %v3910 = vmul.f32 %v1346, %v3907
      %v3911 = vmul.f32 %v1347, %v3907
      %v3912 = vmul.f32 %v1348, %v3907
      %v3913 = vmul.f32 %v1349, %v3907
      %v3914 = vmul.f32 %v1350, %v3907
      %v3915 = vmul.f32 %v1351, %v3907
      %v3916 = vmul.f32 %v1352, %v3907
      %v3926 = vrot.slane %v3908, 4
      %v3927 = vrot.slane %v3909, 4
      %v3928 = vsel %vm1713, %v3926, %v3927
      %v3929 = vsel %vm1713, %v3927, %v3927
      %v3930 = vrot.slane %v3910, 4
      %v3931 = vsel %vm1713, %v3930, %v3927
      %v3932 = vrot.slane %v3911, 4
      %v3933 = vsel %vm1713, %v3932, %v3927
      %v3934 = vrot.slane %v3912, 4
      %v3935 = vsel %vm1713, %v3934, %v3927
      %v3936 = vrot.slane %v3913, 4
      %v3937 = vsel %vm1713, %v3936, %v3927
      %v3938 = vrot.slane %v3914, 4
      %v3939 = vsel %vm1713, %v3938, %v3927
      %v3940 = vrot.slane %v3915, 4
      %v3941 = vsel %vm1713, %v3940, %v3927
      %v3942 = vrot.slane %v3916, 4
      %v3943 = vsel %vm1713, %v3942, %v3927
      %v3953 = vadd.f32 %v3891, %v3928
      %v3954 = vadd.f32 %v3892, %v3929
      %v3955 = vadd.f32 %v3893, %v3931
      %v3956 = vadd.f32 %v3894, %v3929
      %v3957 = vadd.f32 %v3895, %v3933
      %v3958 = vadd.f32 %v3896, %v3929
      %v3959 = vadd.f32 %v3897, %v3935
      %v3960 = vadd.f32 %v3898, %v3929
      %v3961 = vadd.f32 %v3899, %v3937
      %v3962 = vadd.f32 %v3900, %v3929
      %v3963 = vadd.f32 %v3901, %v3939
      %v3964 = vadd.f32 %v3902, %v3929
      %v3965 = vadd.f32 %v3903, %v3941
      %v3966 = vadd.f32 %v3904, %v3929
      %v3967 = vadd.f32 %v3905, %v3943
      %v3968 = vadd.f32 %v3906, %v3929
      %v3969 = vperm.slane %v1356, 5
      %v3970 = vmul.f32 %v1345, %v3969
      %v3971 = vmul.f32 %v3969, 0.0
      %v3972 = vmul.f32 %v1346, %v3969
      %v3973 = vmul.f32 %v1347, %v3969
      %v3974 = vmul.f32 %v1348, %v3969
      %v3975 = vmul.f32 %v1349, %v3969
      %v3976 = vmul.f32 %v1350, %v3969
      %v3977 = vmul.f32 %v1351, %v3969
      %v3978 = vmul.f32 %v1352, %v3969
      %v3988 = vrot.slane %v3970, 5
      %v3989 = vrot.slane %v3971, 5
      %v3990 = vsel %vm1814, %v3988, %v3989
      %v3991 = vsel %vm1814, %v3989, %v3989
      %v3992 = vrot.slane %v3972, 5
      %v3993 = vsel %vm1814, %v3992, %v3989
      %v3994 = vrot.slane %v3973, 5
      %v3995 = vsel %vm1814, %v3994, %v3989
      %v3996 = vrot.slane %v3974, 5
      %v3997 = vsel %vm1814, %v3996, %v3989
      %v3998 = vrot.slane %v3975, 5
      %v3999 = vsel %vm1814, %v3998, %v3989
      %v4000 = vrot.slane %v3976, 5
      %v4001 = vsel %vm1814, %v4000, %v3989
      %v4002 = vrot.slane %v3977, 5
      %v4003 = vsel %vm1814, %v4002, %v3989
      %v4004 = vrot.slane %v3978, 5
      %v4005 = vsel %vm1814, %v4004, %v3989
      %v4015 = vadd.f32 %v3953, %v3990
      %v4016 = vadd.f32 %v3954, %v3991
      %v4017 = vadd.f32 %v3955, %v3993
      %v4018 = vadd.f32 %v3956, %v3991
      %v4019 = vadd.f32 %v3957, %v3995
      %v4020 = vadd.f32 %v3958, %v3991
      %v4021 = vadd.f32 %v3959, %v3997
      %v4022 = vadd.f32 %v3960, %v3991
      %v4023 = vadd.f32 %v3961, %v3999
      %v4024 = vadd.f32 %v3962, %v3991
      %v4025 = vadd.f32 %v3963, %v4001
      %v4026 = vadd.f32 %v3964, %v3991
      %v4027 = vadd.f32 %v3965, %v4003
      %v4028 = vadd.f32 %v3966, %v3991
      %v4029 = vadd.f32 %v3967, %v4005
      %v4030 = vadd.f32 %v3968, %v3991
      %v4031 = vperm.slane %v1356, 6
      %v4032 = vmul.f32 %v1345, %v4031
      %v4033 = vmul.f32 %v4031, 0.0
      %v4034 = vmul.f32 %v1346, %v4031
      %v4035 = vmul.f32 %v1347, %v4031
      %v4036 = vmul.f32 %v1348, %v4031
      %v4037 = vmul.f32 %v1349, %v4031
      %v4038 = vmul.f32 %v1350, %v4031
      %v4039 = vmul.f32 %v1351, %v4031
      %v4040 = vmul.f32 %v1352, %v4031
      %v4050 = vrot.slane %v4032, 6
      %v4051 = vrot.slane %v4033, 6
      %v4052 = vsel %vm1915, %v4050, %v4051
      %v4053 = vsel %vm1915, %v4051, %v4051
      %v4054 = vrot.slane %v4034, 6
      %v4055 = vsel %vm1915, %v4054, %v4051
      %v4056 = vrot.slane %v4035, 6
      %v4057 = vsel %vm1915, %v4056, %v4051
      %v4058 = vrot.slane %v4036, 6
      %v4059 = vsel %vm1915, %v4058, %v4051
      %v4060 = vrot.slane %v4037, 6
      %v4061 = vsel %vm1915, %v4060, %v4051
      %v4062 = vrot.slane %v4038, 6
      %v4063 = vsel %vm1915, %v4062, %v4051
      %v4064 = vrot.slane %v4039, 6
      %v4065 = vsel %vm1915, %v4064, %v4051
      %v4066 = vrot.slane %v4040, 6
      %v4067 = vsel %vm1915, %v4066, %v4051
      %v4077 = vadd.f32 %v4015, %v4052
      %v4078 = vadd.f32 %v4016, %v4053
      %v4079 = vadd.f32 %v4017, %v4055
      %v4080 = vadd.f32 %v4018, %v4053
      %v4081 = vadd.f32 %v4019, %v4057
      %v4082 = vadd.f32 %v4020, %v4053
      %v4083 = vadd.f32 %v4021, %v4059
      %v4084 = vadd.f32 %v4022, %v4053
      %v4085 = vadd.f32 %v4023, %v4061
      %v4086 = vadd.f32 %v4024, %v4053
      %v4087 = vadd.f32 %v4025, %v4063
      %v4088 = vadd.f32 %v4026, %v4053
      %v4089 = vadd.f32 %v4027, %v4065
      %v4090 = vadd.f32 %v4028, %v4053
      %v4091 = vadd.f32 %v4029, %v4067
      %v4092 = vadd.f32 %v4030, %v4053
      %v4093 = vld [vmem:[%s8] sm:$0x1]
      %v4095 = vperm.slane %v4093, 0
      %v4097 = vadd.f32 %v4077, %v4095
      %v4098 = vadd.f32 %v4078, %v4095
      %v4099 = vadd.f32 %v4079, %v4095
      %v4100 = vadd.f32 %v4080, %v4095
      %v4101 = vadd.f32 %v4081, %v4095
      %v4102 = vadd.f32 %v4082, %v4095
      %v4103 = vadd.f32 %v4083, %v4095
      %v4104 = vadd.f32 %v4084, %v4095
      %v4105 = vadd.f32 %v4085, %v4095
      %v4106 = vadd.f32 %v4086, %v4095
      %v4107 = vadd.f32 %v4087, %v4095
      %v4108 = vadd.f32 %v4088, %v4095
      %v4109 = vadd.f32 %v4089, %v4095
      %v4110 = vadd.f32 %v4090, %v4095
      %v4111 = vadd.f32 %v4091, %v4095
      %v4112 = vadd.f32 %v4092, %v4095
      %v4113 = vmul.f32 %v713, %v4097
      %v4114 = vmul.f32 %v714, %v4098
      %v4115 = vmul.f32 %v715, %v4099
      %v4116 = vmul.f32 %v716, %v4100
      %v4117 = vmul.f32 %v717, %v4101
      %v4118 = vmul.f32 %v718, %v4102
      %v4119 = vmul.f32 %v719, %v4103
      %v4120 = vmul.f32 %v720, %v4104
      %v4121 = vmul.f32 %v721, %v4105
      %v4122 = vmul.f32 %v722, %v4106
      %v4123 = vmul.f32 %v723, %v4107
      %v4124 = vmul.f32 %v724, %v4108
      %v4125 = vmul.f32 %v725, %v4109
      %v4126 = vmul.f32 %v726, %v4110
      %v4127 = vmul.f32 %v727, %v4111
      %v4128 = vmul.f32 %v728, %v4112
      %v4129 = vpack.c.bf16 %v4114, %v4113
      %v4130 = vpack.c.bf16 %v4116, %v4115
      %v4131 = vpack.c.bf16 %v4118, %v4117
      %v4132 = vpack.c.bf16 %v4120, %v4119
      %v4133 = vpack.c.bf16 %v4122, %v4121
      %v4134 = vpack.c.bf16 %v4124, %v4123
      %v4135 = vpack.c.bf16 %v4126, %v4125
      %v4136 = vpack.c.bf16 %v4128, %v4127
      %v4137 = vld [vmem:[%s9] sm:$0xf]
      %v4138 = vld [vmem:[%s9 + $0x4] sm:$0xf]
      %v4139 = vld [vmem:[%s9 + $0x8] sm:$0xf]
      %v4140 = vld [vmem:[%s9 + $0xc] sm:$0xf]
      %v4141 = vld [vmem:[%s10] sm:$0x1]
      %v4143 = vperm.slane %v4141, 0
      %v4149 = vunpack.c.l.b16 %v4137
      %v4150 = vunpack.c.l.b16 %v4138
      %v4151 = vunpack.c.l.b16 %v4139
      %v4152 = vunpack.c.l.b16 %v4140
      %v4153 = vpack.c.b16 %v4150, %v4149
      %v4154 = vpack.c.b16 %v4152, %v4151
      %v4158 = vsel %vm442, %v4129, 0
      %v4161 = vsel %vm442, %v4130, 0
      %v4164 = vsel %vm442, %v4131, 0
      %v4167 = vsel %vm442, %v4132, 0
      %v4170 = vsel %vm442, %v4133, 0
      %v4173 = vsel %vm442, %v4134, 0
      %v4176 = vsel %vm442, %v4135, 0
      %v4179 = vsel %vm442, %v4136, 0
      %4181 = vmatpush.bf16.msra.mxu0 0
      %4182 = vmatpush.bf16.msra.mxu0 0
      %4183 = vmatpush.bf16.msra.mxu0 0
      %4184 = vmatpush.bf16.msra.mxu0 0
      %4185 = vmatpush.bf16.msra.mxu0 0
      %4186 = vmatpush.bf16.msra.mxu0 0
      %4187 = vmatpush.bf16.msra.mxu0 %v4154
      %4188 = vmatpush.bf16.msra.mxu0 %v4153
      %4189 = vmatmul.bf16.gmra.mxu0 %v4158
      %v4190 = vpop.f32.mrf.mxu0
      %v4191 = vadd.f32 %v4143, %v4190
      %v4192 = vpop.f32.mrf.mxu0
      %v4193 = vadd.f32 %v4143, %v4192
      %4194 = vmatmul.bf16.gmra.mxu0 %v4161
      %v4195 = vpop.f32.mrf.mxu0
      %v4196 = vadd.f32 %v4143, %v4195
      %v4197 = vpop.f32.mrf.mxu0
      %v4198 = vadd.f32 %v4143, %v4197
      %4199 = vmatmul.bf16.gmra.mxu0 %v4164
      %v4200 = vpop.f32.mrf.mxu0
      %v4201 = vadd.f32 %v4143, %v4200
      %v4202 = vpop.f32.mrf.mxu0
      %v4203 = vadd.f32 %v4143, %v4202
      %4204 = vmatmul.bf16.gmra.mxu0 %v4167
      %v4205 = vpop.f32.mrf.mxu0
      %v4206 = vadd.f32 %v4143, %v4205
      %v4207 = vpop.f32.mrf.mxu0
      %v4208 = vadd.f32 %v4143, %v4207
      %4209 = vmatmul.bf16.gmra.mxu0 %v4170
      %v4210 = vpop.f32.mrf.mxu0
      %v4211 = vadd.f32 %v4143, %v4210
      %v4212 = vpop.f32.mrf.mxu0
      %v4213 = vadd.f32 %v4143, %v4212
      %4214 = vmatmul.bf16.gmra.mxu0 %v4173
      %v4215 = vpop.f32.mrf.mxu0
      %v4216 = vadd.f32 %v4143, %v4215
      %v4217 = vpop.f32.mrf.mxu0
      %v4218 = vadd.f32 %v4143, %v4217
      %4219 = vmatmul.bf16.gmra.mxu0 %v4176
      %v4220 = vpop.f32.mrf.mxu0
      %v4221 = vadd.f32 %v4143, %v4220
      %v4222 = vpop.f32.mrf.mxu0
      %v4223 = vadd.f32 %v4143, %v4222
      %4224 = vmatmul.bf16.gmra.mxu0 %v4179
      %v4225 = vpop.f32.mrf.mxu0
      %v4226 = vadd.f32 %v4143, %v4225
      %v4227 = vpop.f32.mrf.mxu0
      %v4228 = vadd.f32 %v4143, %v4227
      %4229 = vdwg.mxu0
      %s4230 = scalar_lea.vmem %s393, %s396
      %4231 = vst.msk [vmem:[%s4230] sm:$0xff] %vm442, %v4191
      %4232 = vst.msk [vmem:[%s4230 + $0x8] sm:$0xff] %vm442, %v4193
      %4233 = vst.msk [vmem:[%s4230 + $0x10] sm:$0xff] %vm442, %v4196
      %4234 = vst.msk [vmem:[%s4230 + $0x18] sm:$0xff] %vm442, %v4198
      %4235 = vst.msk [vmem:[%s4230 + $0x20] sm:$0xff] %vm442, %v4201
      %4236 = vst.msk [vmem:[%s4230 + $0x28] sm:$0xff] %vm442, %v4203
      %4237 = vst.msk [vmem:[%s4230 + $0x30] sm:$0xff] %vm442, %v4206
      %4238 = vst.msk [vmem:[%s4230 + $0x38] sm:$0xff] %vm442, %v4208
      %4239 = vst.msk [vmem:[%s4230 + $0x40] sm:$0xff] %vm442, %v4211
      %4240 = vst.msk [vmem:[%s4230 + $0x48] sm:$0xff] %vm442, %v4213
      %4241 = vst.msk [vmem:[%s4230 + $0x50] sm:$0xff] %vm442, %v4216
      %4242 = vst.msk [vmem:[%s4230 + $0x58] sm:$0xff] %vm442, %v4218
      %4243 = vst.msk [vmem:[%s4230 + $0x60] sm:$0xff] %vm442, %v4221
      %4244 = vst.msk [vmem:[%s4230 + $0x68] sm:$0xff] %vm442, %v4223
      %4245 = vst.msk [vmem:[%s4230 + $0x70] sm:$0xff] %vm442, %v4226
      %4246 = vst.msk [vmem:[%s4230 + $0x78] sm:$0xff] %vm442, %v4228
      %s4247 = smul.u32 8, %s22
      %p4248 = scmp.lt.s32.totalorder %s4247, 15
      %s4249 = scalar_select %p4248, %s4247, 15
      %s4250 = smul.addr %s4249, 2
      %s4251 = smul.addr %s4250, 8
      %s4252 = scalar_lea.vmem %s11, %s4251
      // Predicated region
      $region65: #{cgmlp_forward.1} parent=63 // pred_check
        %p4253 = pneg %p276
      $region66: #{cgmlp_forward.1} parent=63 // pred_check_branch
        %4255 = sbr.rel (%p4253) target = $region68
      $region67: #{cgmlp_forward.1} parent=63 // pred_region
        %s4256 = smul.u32 8, %s22
      $region68: #{cgmlp_forward.1} parent=63 // pred_fallthru
        _
    $region64: #{cgmlp_forward.1} parent=5 // pred_fallthru
      _
    %p4257 = scmp.le.s32.totalorder 2, %s17
    // Predicated region
    $region69: #{cgmlp_forward.1} parent=5 // pred_check
      %p4258 = pneg %p4257
    $region70: #{cgmlp_forward.1} parent=5 // pred_check_branch
      %4260 = sbr.rel (%p4258) target = $region72
    $region71: #{cgmlp_forward.1} parent=5 // pred_region
      %s4261 = ssub.s32 %s17, 2
      // Predicated region
      $region73: #{cgmlp_forward.1} parent=71 // pred_check
        %p4262 = pneg %p282
      $region74: #{cgmlp_forward.1} parent=71 // pred_check_branch
        %4264 = sbr.rel (%p4262) target = $region76
      $region75: #{cgmlp_forward.1} parent=71 // pred_region
        %s4265 = smul.u32 8, %s23
        %p4266 = scmp.lt.s32.totalorder %s4265, 15
        %s4267 = scalar_select %p4266, %s4265, 15
        %s4268 = smul.addr %s4267, 2
        %s4269 = smul.addr %s4268, 8
        %s4270 = scalar_lea.vmem %s11, %s4269
      $region76: #{cgmlp_forward.1} parent=71 // pred_fallthru
        _
    $region72: #{cgmlp_forward.1} parent=5 // pred_fallthru
      _
  $region6: #{cgmlp_forward.1} parent=0 // loop_footer
    %s21 = sadd.s32 1, %s17
  $region7: #{cgmlp_forward.1} parent=0 // loop_footer_branch
    %16 = sbr.rel target = $region3
  $region8: #{cgmlp_forward.1} parent=0 // loop_exit
    _

</llo_original>
